<compile_context>
chip_gen: v5e
topology: v5e:2x2
jax: 0.10.0
libtpu: 0.0.40
codegen_flags: <defaults>
</compile_context>

<pallas_src>
import functools

import jax
import jax.numpy as jnp
from jax.experimental import pallas as pl
from jax.experimental.pallas import tpu as pltpu


def _rup(x, m):
    return (x + m - 1) // m * m


# ---------------------------------------------------------------------------
# Fused general conv kernel:  relu((x (*) W) * bn_scale + bn_bias)
# ---------------------------------------------------------------------------
def _fused_conv_kernel(x_hbm, w_ref, sb_ref, o_ref, band_ref, sems,
                       *, tap_offsets, cp, tm_sub, nb, halo_p, n_oc, relu):
    tm = tm_sub * nb
    base = pl.multiple_of(pl.program_id(0) * tm, 16)
    op = o_ref.shape[1]
    oc_w = op // n_oc

    # Issue the whole band as `nb` chunk DMAs up front.  Chunk s >= 1 lands
    # while sub-tiles 0..s-1 are computing on the MXU, so only chunk 0
    # (tm_sub + halo rows) of the band fetch is exposed.  Every grid step is
    # self-contained -> "parallel" row-tile axis is megacore safe.
    copies = []
    for s in range(nb):
        lo = 0 if s == 0 else s * tm_sub + halo_p
        rows = tm_sub + halo_p if s == 0 else tm_sub
        c = pltpu.make_async_copy(
            x_hbm.at[pl.ds(base + lo, rows), :],
            band_ref.at[lo:lo + rows, :],
            sems.at[s])
        c.start()
        copies.append(c)

    for s in range(nb):
        copies[s].wait()
        r0 = s * tm_sub
        for oc in range(n_oc):
            c0, c1 = oc * oc_w, (oc + 1) * oc_w
            # Statically unrolled tap loop; chained f32 sum (no scratch
            # accumulator round trips).
            acc = None
            for t, off in enumerate(tap_offsets):
                a = band_ref[r0 + off:r0 + off + tm_sub, :]          # (tm_sub, cp)
                w = w_ref[t * cp:(t + 1) * cp, c0:c1]                # (cp, oc_w)
                p = jnp.dot(a, w, preferred_element_type=jnp.float32)
                acc = p if acc is None else acc + p
            y = acc * sb_ref[0:1, c0:c1] + sb_ref[1:2, c0:c1]
            if relu:
                y = jnp.maximum(y, 0.0)
            o_ref[r0:r0 + tm_sub, c0:c1] = y.astype(o_ref.dtype)


def _pick_tm(Wp, R):
    """Target ~512 flat rows per tile, preferring whole padded image rows so
    the (kh-1)*dil*Wp halo is amortized over many useful rows."""
    if Wp >= 512:
        rows = Wp
    else:
        rows = max(1, 512 // Wp) * Wp
    rows = max(rows, 256)
    tm = min(_rup(rows, 64), _rup(R, 64))
    return max(tm, 64)


# ---------------------------------------------------------------------------
# Pointwise (matmul) kernel for 1x1 convs and the im2col'd first conv
# ---------------------------------------------------------------------------
def _matmul_bn_relu_kernel(x_ref, w_ref, sb_ref, o_ref, *, relu):
    acc = jnp.dot(x_ref[...], w_ref[...], preferred_element_type=jnp.float32)
    y = acc * sb_ref[0:1, :] + sb_ref[1:2, :]
    if relu:
        y = jnp.maximum(y, 0.0)
    o_ref[...] = y.astype(o_ref.dtype)


def _matmul_bn_relu(x2d, w2d, scale, bias, *, relu, out_dtype, tm=1024):
    R, K = x2d.shape
    O = w2d.shape[1]
    tm = min(tm, _rup(R, 16))
    Rp = _rup(R, tm)
    if Rp != R:
        x2d = jnp.pad(x2d, ((0, Rp - R), (0, 0)))
    sb = jnp.stack([scale.astype(jnp.float32), bias.astype(jnp.float32)])
    out = pl.pallas_call(
        functools.partial(_matmul_bn_relu_kernel, relu=relu),
        out_shape=jax.ShapeDtypeStruct((Rp, O), out_dtype),
        grid=(Rp // tm,),
        in_specs=[pl.BlockSpec((tm, K), lambda i: (i, 0)),
                  pl.BlockSpec((K, O), lambda i: (0, 0)),
                  pl.BlockSpec((2, O), lambda i: (0, 0))],
        out_specs=pl.BlockSpec((tm, O), lambda i: (i, 0)),
        compiler_params=pltpu.CompilerParams(
            dimension_semantics=("parallel",)),
    )(x2d.astype(jnp.bfloat16), w2d.astype(jnp.bfloat16), sb)
    return out[:R]


def _pointwise_conv(x, w_oihw, scale, bias, *, relu, out_dtype):
    """1x1 conv + folded BN + optional ReLU (exact channel counts)."""
    N, H, W, C = x.shape
    O = w_oihw.shape[0]
    w2 = jnp.transpose(w_oihw[:, :, 0, 0], (1, 0))                    # (C, O)
    y = _matmul_bn_relu(x.reshape(N * H * W, C), w2, scale, bias,
                        relu=relu, out_dtype=out_dtype)
    return y.reshape(N, H, W, O)


def _small_cin_conv(x, w_oihw, scale, bias, *, pad, relu, out_dtype):
    """First conv (tiny C): explicit im2col so K = kh*kw*C instead of padding
    C to 128 per tap (one matmul per tile, no 42x band-DMA inflation)."""
    N, H, W, C = x.shape
    O, I, kh, kw = w_oihw.shape
    Hp, Wp = H + 2 * pad, W + 2 * pad
    out_h, out_w = Hp - (kh - 1), Wp - (kw - 1)
    xp = jnp.pad(x.astype(jnp.bfloat16),
                 ((0, 0), (pad, pad), (pad, pad), (0, 0)))
    cols = [xp[:, di:di + out_h, dj:dj + out_w, :]
            for di in range(kh) for dj in range(kw)]
    K = kh * kw * C
    Kp = _rup(K, 8)
    if Kp != K:
        cols.append(jnp.zeros((N, out_h, out_w, Kp - K), jnp.bfloat16))
    xcol = jnp.concatenate(cols, axis=-1).reshape(N * out_h * out_w, Kp)
    w2 = jnp.transpose(w_oihw, (2, 3, 1, 0)).reshape(K, O)
    w2 = jnp.pad(w2, ((0, Kp - K), (0, 0)))
    y = _matmul_bn_relu(xcol, w2, scale, bias, relu=relu, out_dtype=out_dtype)
    return y.reshape(N, out_h, out_w, O)


# ---------------------------------------------------------------------------
# Conv2d (stride 1, any pad / dilation) + folded BN + optional ReLU
# ---------------------------------------------------------------------------
def conv_bn_relu(x, w_oihw, scale, bias, *, pad, dil=1, relu=True,
                 out_dtype=jnp.bfloat16):
    N, H, W, C = x.shape
    O, I, kh, kw = w_oihw.shape
    assert I == C, (I, C)

    if kh == 1 and kw == 1 and pad == 0:
        return _pointwise_conv(x, w_oihw, scale, bias, relu=relu,
                               out_dtype=out_dtype)
    if C <= 8 and dil == 1:
        return _small_cin_conv(x, w_oihw, scale, bias, pad=pad, relu=relu,
                               out_dtype=out_dtype)

    Hp, Wp = H + 2 * pad, W + 2 * pad
    out_h = Hp - dil * (kh - 1)
    out_w = Wp - dil * (kw - 1)
    T = kh * kw
    Cp = _rup(C, 128)
    Op = _rup(O, 128)

    R = N * Hp * Wp
    tm = _pick_tm(Wp, R)
    nb = 4
    tm_sub = tm // nb
    halo = dil * (kh - 1) * Wp + dil * (kw - 1)
    halo_p = _rup(halo, 16)
    n_tiles = pl.cdiv(R, tm)
    rows_pad = n_tiles * tm + halo_p
    n_oc = Op // 256 if (Op % 256 == 0 and Op > 256) else 1

    # Staging (no im2col!): pad + flatten the activation to (rows, Cp) bf16.
    xp = jnp.pad(x.astype(jnp.bfloat16),
                 ((0, 0), (pad, pad), (pad, pad), (0, Cp - C)))
    x_flat = jnp.pad(xp.reshape(R, Cp), ((0, rows_pad - R), (0, 0)))

    # Weight as (T*Cp, Op): rows [t*Cp, t*Cp+C) hold tap t's (C, O) matrix.
    wt = jnp.transpose(w_oihw, (2, 3, 1, 0)).reshape(T, I, O).astype(jnp.bfloat16)
    wb = jnp.pad(wt, ((0, 0), (0, Cp - I), (0, Op - O))).reshape(T * Cp, Op)

    # Packed folded-BN scale/bias: (2, Op) f32.
    sb = jnp.stack([jnp.pad(scale.astype(jnp.float32), (0, Op - O)),
                    jnp.pad(bias.astype(jnp.float32), (0, Op - O))])

    tap_offsets = tuple(di * dil * Wp + dj * dil
                        for di in range(kh) for dj in range(kw))

    # Per-layer VMEM accounting (v7x has 64 MiB per TensorCore).
    band_bytes = (tm + halo_p) * Cp * 2
    w_bytes = 2 * T * Cp * Op * 2                   # pipeline double-buffers
    out_bytes = 2 * tm * Op * jnp.dtype(out_dtype).itemsize
    acc_bytes = 2 * tm_sub * (Op // n_oc) * 4
    need = band_bytes + w_bytes + out_bytes + acc_bytes + 2 * 2 * Op * 4
    vmem_limit = int(min(64 * 1024 * 1024,
                         max(32 * 1024 * 1024, need + 16 * 1024 * 1024)))

    kernel = functools.partial(
        _fused_conv_kernel, tap_offsets=tap_offsets, cp=Cp, tm_sub=tm_sub,
        nb=nb, halo_p=halo_p, n_oc=n_oc, relu=relu)

    out = pl.pallas_call(
        kernel,
        out_shape=jax.ShapeDtypeStruct((n_tiles * tm, Op), out_dtype),
        grid_spec=pltpu.PrefetchScalarGridSpec(
            num_scalar_prefetch=0,
            grid=(n_tiles,),
            in_specs=[
                pl.BlockSpec(memory_space=pl.ANY),              # x_flat in HBM
                pl.BlockSpec((T * Cp, Op), lambda i: (0, 0)),   # weights resident
                pl.BlockSpec((2, Op), lambda i: (0, 0)),        # scale/bias
            ],
            out_specs=pl.BlockSpec((tm, Op), lambda i: (i, 0)),
            scratch_shapes=[
                pltpu.VMEM((tm + halo_p, Cp), jnp.bfloat16),    # band (+halo)
                pltpu.SemaphoreType.DMA((nb,)),
            ],
        ),
        compiler_params=pltpu.CompilerParams(
            dimension_semantics=("parallel",),
            vmem_limit_bytes=vmem_limit,
        ),
    )(x_flat, wb, sb)

    # Drop padded rows/channels and the (kh-1)*dil "wide frame" garbage border.
    out = out[:R].reshape(N, Hp, Wp, Op)[:, :out_h, :out_w, :O]
    return out


# ---------------------------------------------------------------------------
# ConvTranspose2d(k=4, s=2, p=1) + folded BN + ReLU (sub-pixel decomposition)
# ---------------------------------------------------------------------------
def deconv_bn_relu(x, w_iohw, scale, bias):
    I, O, kh, kw = w_iohw.shape
    assert kh == 4 and kw == 4
    N, H, W, C = x.shape
    assert I == C

    sub = w_iohw[:, :, ::-1, ::-1]                       # spatially reversed
    blocks = []
    for a in range(2):
        for b in range(2):
            wab = sub[:, :, a::2, b::2]                  # (I, O, 2, 2)
            blocks.append(jnp.transpose(wab, (1, 0, 2, 3)))
    w_conv = jnp.concatenate(blocks, axis=0)             # (4*O, I, 2, 2)
    scale4 = jnp.concatenate([scale] * 4, axis=0)
    bias4 = jnp.concatenate([bias] * 4, axis=0)

    y = conv_bn_relu(x, w_conv, scale4, bias4, pad=1, dil=1, relu=True)
    # y: (N, H+1, W+1, 4*O); parity (a,b) output = y[:, a:a+H, b:b+W, p*O:(p+1)*O]
    parts = [[y[:, a:a + H, b:b + W, (2 * a + b) * O:(2 * a + b + 1) * O]
              for b in range(2)] for a in range(2)]
    row0 = jnp.stack(parts[0], axis=3)                   # (N, H, W, 2, O)
    row1 = jnp.stack(parts[1], axis=3)
    out = jnp.stack([row0, row1], axis=2)                # (N, H, 2, W, 2, O)
    return out.reshape(N, 2 * H, 2 * W, O)


# ---------------------------------------------------------------------------
# MaxPool 2x2 stride 2 (single HBM read, no XLA phase copies)
# ---------------------------------------------------------------------------
def _maxpool_kernel(a_ref, b_ref, o_ref):
    c = o_ref.shape[-1]
    r = jnp.maximum(a_ref[...], b_ref[...])              # (t, Wo, 2C)
    o_ref[...] = jnp.maximum(r[:, :, :c], r[:, :, c:])


def maxpool2(x):
    N, H, W, C = x.shape
    Ho, Wo = H // 2, W // 2
    rows = N * Ho
    xv = x.reshape(rows, 2, Wo, 2 * C)                   # metadata-only reshape

    row_bytes = Wo * 2 * C * x.dtype.itemsize
    cap = max(8, (2 * 1024 * 1024) // max(row_bytes, 1))
    t = None
    cand = (min(rows, cap) // 8) * 8
    while cand >= 8:
        if rows % cand == 0:
            t = cand
            break
        cand -= 8
    if t is None:
        t = rows                                         # single-block fallback

    out = pl.pallas_call(
        _maxpool_kernel,
        out_shape=jax.ShapeDtypeStruct((rows, Wo, C), x.dtype),
        grid=(rows // t,),
        in_specs=[pl.BlockSpec((t, None, Wo, 2 * C), lambda i: (i, 0, 0, 0)),
                  pl.BlockSpec((t, None, Wo, 2 * C), lambda i: (i, 1, 0, 0))],
        out_specs=pl.BlockSpec((t, Wo, C), lambda i: (i, 0, 0)),
        compiler_params=pltpu.CompilerParams(
            dimension_semantics=("parallel",)),
    )(xv, xv)
    return out.reshape(N, Ho, Wo, C)


# ---------------------------------------------------------------------------
# Deterministic parameter construction (synthetic; BN folded to scale/bias)
# ---------------------------------------------------------------------------
def _make_conv_params(key, o, i, k, bn=True, transpose=False):
    k1, k2, k3, k4, k5, k6 = jax.random.split(key, 6)
    fan_in = i * k * k
    if transpose:
        w = jax.random.normal(k1, (i, o, k, k), jnp.float32) * (2.0 / fan_in) ** 0.5
    else:
        w = jax.random.normal(k1, (o, i, k, k), jnp.float32) * (2.0 / fan_in) ** 0.5
    b = jax.random.normal(k2, (o,), jnp.float32) * 0.01
    if bn:
        eps = 1e-5
        gamma = 1.0 + 0.1 * jax.random.normal(k3, (o,), jnp.float32)
        beta = 0.05 * jax.random.normal(k4, (o,), jnp.float32)
        mean = 0.05 * jax.random.normal(k5, (o,), jnp.float32)
        var = 1.0 + 0.1 * jnp.abs(jax.random.normal(k6, (o,), jnp.float32))
        scale = gamma / jnp.sqrt(var + eps)
        bias = beta + (b - mean) * scale
    else:
        scale = jnp.ones((o,), jnp.float32)
        bias = b
    return w, scale, bias


def make_params(seed=0):
    key = jax.random.PRNGKey(seed)
    defs = {
        # name: (out, in, kernel, bn, transpose)
        "conv1_2_0": (64, 3, 3, True, False),
        "conv1_2_1": (64, 64, 3, True, False),
        "conv2_2_0": (128, 64, 3, True, False),
        "conv2_2_1": (128, 128, 3, True, False),
        "conv3_3_0": (256, 128, 3, True, False),
        "conv3_3_1": (256, 256, 3, True, False),
        "conv3_3_2": (256, 256, 3, True, False),
        "conv4_3_0": (512, 256, 3, True, False),
        "conv4_3_1": (512, 512, 3, True, False),
        "conv4_3_2": (512, 512, 3, True, False),
        "dconv1": (256, 512, 3, True, False),
        "Upconv1": (128, 256, 4, True, True),
        "c1": (192, 384, 1, True, False),
        "dconv2": (96, 192, 3, True, False),
        "Upconv2": (48, 96, 4, True, True),
        "c2": (88, 176, 1, True, False),
        "dconv3": (44, 88, 3, True, False),
        "Upconv3": (22, 44, 4, True, True),
        "Output": (1, 86, 1, False, False),
    }
    params = {}
    for idx, (name, (o, i, k, bn, tr)) in enumerate(defs.items()):
        params[name] = _make_conv_params(jax.random.fold_in(key, idx), o, i, k,
                                         bn=bn, transpose=tr)
    return params


# ---------------------------------------------------------------------------
# Forward pass (mirrors CL_DCNN.forward)
# ---------------------------------------------------------------------------
@jax.jit
def cl_dcnn_forward(params, x_nchw):
    x = jnp.transpose(x_nchw, (0, 2, 3, 1)).astype(jnp.bfloat16)  # NCHW -> NHWC

    c12 = conv_bn_relu(x, *params["conv1_2_0"], pad=1)
    c12 = conv_bn_relu(c12, *params["conv1_2_1"], pad=1)
    c12_m = maxpool2(c12)

    c22 = conv_bn_relu(c12_m, *params["conv2_2_0"], pad=1)
    c22 = conv_bn_relu(c22, *params["conv2_2_1"], pad=1)
    c22_m = maxpool2(c22)

    c33 = conv_bn_relu(c22_m, *params["conv3_3_0"], pad=1)
    c33 = conv_bn_relu(c33, *params["conv3_3_1"], pad=1)
    c33 = conv_bn_relu(c33, *params["conv3_3_2"], pad=1)
    c33_m = maxpool2(c33)

    c43 = conv_bn_relu(c33_m, *params["conv4_3_0"], pad=1)
    c43 = conv_bn_relu(c43, *params["conv4_3_1"], pad=1)
    c43 = conv_bn_relu(c43, *params["conv4_3_2"], pad=1)

    dc1 = conv_bn_relu(c43, *params["dconv1"], pad=2, dil=2)
    uc1 = deconv_bn_relu(dc1, *params["Upconv1"])
    ac1 = jnp.concatenate([c33, uc1], axis=-1)     # 256 + 128 = 384 channels
    c1 = conv_bn_relu(ac1, *params["c1"], pad=0)

    dc2 = conv_bn_relu(c1, *params["dconv2"], pad=2, dil=2)
    uc2 = deconv_bn_relu(dc2, *params["Upconv2"])
    ac2 = jnp.concatenate([c22, uc2], axis=-1)     # 128 + 48 = 176 channels
    c2 = conv_bn_relu(ac2, *params["c2"], pad=0)

    dc3 = conv_bn_relu(c2, *params["dconv3"], pad=2, dil=2)
    uc3 = deconv_bn_relu(dc3, *params["Upconv3"])
    ac3 = jnp.concatenate([c12, uc3], axis=-1)     # 64 + 22 = 86 channels
    out = conv_bn_relu(ac3, *params["Output"], pad=0, relu=False,
                       out_dtype=jnp.float32)

    return jnp.transpose(out, (0, 3, 1, 2))        # NHWC -> NCHW


# ---------------------------------------------------------------------------
# f32 XLA references for correctness checks
# ---------------------------------------------------------------------------
def _conv_ref(x, w, scale, bias, pad, dil, relu):
    xb = x.astype(jnp.bfloat16).astype(jnp.float32)
    wb = w.astype(jnp.bfloat16).astype(jnp.float32)
    y = jax.lax.conv_general_dilated(
        xb, wb, window_strides=(1, 1),
        padding=((pad, pad), (pad, pad)),
        rhs_dilation=(dil, dil),
        dimension_numbers=("NHWC", "OIHW", "NHWC"),
        precision=jax.lax.Precision.HIGHEST)
    y = y * scale[None, None, None, :] + bias[None, None, None, :]
    if relu:
        y = jnp.maximum(y, 0.0)
    return y


def _deconv_ref(x, w_iohw, scale, bias):
    # ConvTranspose2d(k=4, s=2, p=1) == conv with lhs_dilation=2, padding=2,
    # spatially flipped kernel, (I,O)->(O,I).
    xb = x.astype(jnp.bfloat16).astype(jnp.float32)
    wb = w_iohw.astype(jnp.bfloat16).astype(jnp.float32)
    rhs = jnp.transpose(wb[:, :, ::-1, ::-1], (1, 0, 2, 3))
    y = jax.lax.conv_general_dilated(
        xb, rhs, window_strides=(1, 1),
        padding=((2, 2), (2, 2)),
        lhs_dilation=(2, 2),
        dimension_numbers=("NHWC", "OIHW", "NHWC"),
        precision=jax.lax.Precision.HIGHEST)
    return jnp.maximum(y * scale[None, None, None, :]
                       + bias[None, None, None, :], 0.0)


def _max_abs_diff(a, b):
    return float(jnp.max(jnp.abs(a.astype(jnp.float32) - b.astype(jnp.float32))))


# ---------------------------------------------------------------------------
if __name__ == "__main__":
    # --- unit checks of each Pallas path against f32 XLA references ---------
    kx = jax.random.normal(jax.random.PRNGKey(1), (1, 12, 12, 64), jnp.float32)
    kw_, ks_, kb_ = _make_conv_params(jax.random.PRNGKey(2), 32, 64, 3)
    assert _max_abs_diff(conv_bn_relu(kx, kw_, ks_, kb_, pad=1),
                         _conv_ref(kx, kw_, ks_, kb_, 1, 1, True)) < 0.1

    dw_, ds_, db_ = _make_conv_params(jax.random.PRNGKey(3), 16, 64, 3)
    assert _max_abs_diff(conv_bn_relu(kx, dw_, ds_, db_, pad=2, dil=2),
                         _conv_ref(kx, dw_, ds_, db_, 2, 2, True)) < 0.1

    sx = jax.random.normal(jax.random.PRNGKey(7), (1, 10, 10, 3), jnp.float32)
    sw_, ss_, sb_ = _make_conv_params(jax.random.PRNGKey(8), 64, 3, 3)
    assert _max_abs_diff(conv_bn_relu(sx, sw_, ss_, sb_, pad=1),
                         _conv_ref(sx, sw_, ss_, sb_, 1, 1, True)) < 0.1

    ox = jax.random.normal(jax.random.PRNGKey(9), (1, 6, 6, 86), jnp.float32)
    ow_, os_, ob_ = _make_conv_params(jax.random.PRNGKey(10), 1, 86, 1, bn=False)
    assert _max_abs_diff(
        conv_bn_relu(ox, ow_, os_, ob_, pad=0, relu=False, out_dtype=jnp.float32),
        _conv_ref(ox, ow_, os_, ob_, 0, 1, False)) < 0.03

    ux = jax.random.normal(jax.random.PRNGKey(4), (1, 6, 6, 32), jnp.float32)
    uw_, us_, ub_ = _make_conv_params(jax.random.PRNGKey(5), 16, 32, 4,
                                      transpose=True)
    assert _max_abs_diff(deconv_bn_relu(ux, uw_, us_, ub_),
                         _deconv_ref(ux, uw_, us_, ub_)) < 0.1

    px = jax.random.normal(jax.random.PRNGKey(6), (1, 8, 8, 64),
                           jnp.float32).astype(jnp.bfloat16)
    p_ref = jnp.max(px.reshape(1, 4, 2, 4, 2, 64), axis=(2, 4))
    assert _max_abs_diff(maxpool2(px), p_ref) == 0.0

    # --- full forward pass ---------------------------------------------------
    key = jax.random.PRNGKey(0)
    # small input; H, W must be divisible by 8 (three 2x2 max pools)
    x = jax.random.normal(key, (2, 3, 32, 32), jnp.float32)

    params = make_params(seed=0)
    y = cl_dcnn_forward(params, x)
    y = jax.block_until_ready(y)

    assert y.shape == (2, 1, 32, 32), y.shape
    assert bool(jnp.all(jnp.isfinite(y)))
    print("KERNEL_OK")
</pallas_src>

<mosaic_0001>
module attributes {stable_mosaic.version = 11 : i64} {
  func.func @_fused_conv_kernel(%arg0: i32, %arg1: memref<288x128xbf16, #tpu.memory_space<any>>, %arg2: memref<1152x128xbf16, #tpu.memory_space<vmem>>, %arg3: memref<2x128xf32, #tpu.memory_space<vmem>>, %arg4: memref<256x128xbf16, #tpu.memory_space<vmem>>, %arg5: memref<288x128xbf16, #tpu.memory_space<vmem>>, %arg6: memref<4x!tpu.dma_semaphore, #tpu.memory_space<semaphore_mem>>) attributes {dimension_semantics = [#tpu.dimension_semantics<parallel>], iteration_bounds = array<i64: 1>, scalar_prefetch = 0 : i64, scratch_operands = 2 : i64, tpu.core_type = #tpu.core_type<tc>, window_params = [{}, {pipeline_mode = #tpu.pipeline_mode<synchronous>, transform_indices = @transform_1, window_bounds = array<i64: 1152, 128>}, {pipeline_mode = #tpu.pipeline_mode<synchronous>, transform_indices = @transform_2, window_bounds = array<i64: 2, 128>}, {transform_indices = @transform_3, window_bounds = array<i64: 256, 128>}]} {
    %c256_i32 = arith.constant 256 : i32
    %0 = arith.muli %arg0, %c256_i32 : i32
    %1 = tpu.assume_multiple %0, 16 : i32
    %c0_i32 = arith.constant 0 : i32
    %2 = arith.addi %1, %c0_i32 : i32
    %c0_i32_0 = arith.constant 0 : i32
    %c0_i32_1 = arith.constant 0 : i32
    %3 = tpu.memref_slice %arg1[%2, %c0_i32_1] : memref<288x128xbf16, #tpu.memory_space<any>> -> memref<96x128xbf16, #tpu.memory_space<any>>
    %c0_i32_2 = arith.constant 0 : i32
    %c0_i32_3 = arith.constant 0 : i32
    %4 = tpu.memref_slice %arg5[%c0_i32_2, %c0_i32_3] : memref<288x128xbf16, #tpu.memory_space<vmem>> -> memref<96x128xbf16, #tpu.memory_space<vmem>>
    %5 = tpu.memref_slice %arg6[%c0_i32_0] : memref<4x!tpu.dma_semaphore, #tpu.memory_space<semaphore_mem>> -> memref<1x!tpu.dma_semaphore, #tpu.memory_space<semaphore_mem>>
    %6 = tpu.memref_squeeze %5 : memref<1x!tpu.dma_semaphore, #tpu.memory_space<semaphore_mem>> -> memref<!tpu.dma_semaphore, #tpu.memory_space<semaphore_mem>>
    tpu.enqueue_dma source(%3 : memref<96x128xbf16, #tpu.memory_space<any>>) target(%4 : memref<96x128xbf16, #tpu.memory_space<vmem>>) target_semaphore(%6 : memref<!tpu.dma_semaphore, #tpu.memory_space<semaphore_mem>>)
    %c96_i32 = arith.constant 96 : i32
    %7 = arith.addi %1, %c96_i32 : i32
    %c1_i32 = arith.constant 1 : i32
    %c0_i32_4 = arith.constant 0 : i32
    %8 = tpu.memref_slice %arg1[%7, %c0_i32_4] : memref<288x128xbf16, #tpu.memory_space<any>> -> memref<64x128xbf16, #tpu.memory_space<any>>
    %c96_i32_5 = arith.constant 96 : i32
    %c0_i32_6 = arith.constant 0 : i32
    %9 = tpu.memref_slice %arg5[%c96_i32_5, %c0_i32_6] : memref<288x128xbf16, #tpu.memory_space<vmem>> -> memref<64x128xbf16, #tpu.memory_space<vmem>>
    %10 = tpu.memref_slice %arg6[%c1_i32] : memref<4x!tpu.dma_semaphore, #tpu.memory_space<semaphore_mem>> -> memref<1x!tpu.dma_semaphore, #tpu.memory_space<semaphore_mem>>
    %11 = tpu.memref_squeeze %10 : memref<1x!tpu.dma_semaphore, #tpu.memory_space<semaphore_mem>> -> memref<!tpu.dma_semaphore, #tpu.memory_space<semaphore_mem>>
    tpu.enqueue_dma source(%8 : memref<64x128xbf16, #tpu.memory_space<any>>) target(%9 : memref<64x128xbf16, #tpu.memory_space<vmem>>) target_semaphore(%11 : memref<!tpu.dma_semaphore, #tpu.memory_space<semaphore_mem>>)
    %c160_i32 = arith.constant 160 : i32
    %12 = arith.addi %1, %c160_i32 : i32
    %c2_i32 = arith.constant 2 : i32
    %c0_i32_7 = arith.constant 0 : i32
    %13 = tpu.memref_slice %arg1[%12, %c0_i32_7] : memref<288x128xbf16, #tpu.memory_space<any>> -> memref<64x128xbf16, #tpu.memory_space<any>>
    %c160_i32_8 = arith.constant 160 : i32
    %c0_i32_9 = arith.constant 0 : i32
    %14 = tpu.memref_slice %arg5[%c160_i32_8, %c0_i32_9] : memref<288x128xbf16, #tpu.memory_space<vmem>> -> memref<64x128xbf16, #tpu.memory_space<vmem>>
    %15 = tpu.memref_slice %arg6[%c2_i32] : memref<4x!tpu.dma_semaphore, #tpu.memory_space<semaphore_mem>> -> memref<1x!tpu.dma_semaphore, #tpu.memory_space<semaphore_mem>>
    %16 = tpu.memref_squeeze %15 : memref<1x!tpu.dma_semaphore, #tpu.memory_space<semaphore_mem>> -> memref<!tpu.dma_semaphore, #tpu.memory_space<semaphore_mem>>
    tpu.enqueue_dma source(%13 : memref<64x128xbf16, #tpu.memory_space<any>>) target(%14 : memref<64x128xbf16, #tpu.memory_space<vmem>>) target_semaphore(%16 : memref<!tpu.dma_semaphore, #tpu.memory_space<semaphore_mem>>)
    %c224_i32 = arith.constant 224 : i32
    %17 = arith.addi %1, %c224_i32 : i32
    %c3_i32 = arith.constant 3 : i32
    %c0_i32_10 = arith.constant 0 : i32
    %18 = tpu.memref_slice %arg1[%17, %c0_i32_10] : memref<288x128xbf16, #tpu.memory_space<any>> -> memref<64x128xbf16, #tpu.memory_space<any>>
    %c224_i32_11 = arith.constant 224 : i32
    %c0_i32_12 = arith.constant 0 : i32
    %19 = tpu.memref_slice %arg5[%c224_i32_11, %c0_i32_12] : memref<288x128xbf16, #tpu.memory_space<vmem>> -> memref<64x128xbf16, #tpu.memory_space<vmem>>
    %20 = tpu.memref_slice %arg6[%c3_i32] : memref<4x!tpu.dma_semaphore, #tpu.memory_space<semaphore_mem>> -> memref<1x!tpu.dma_semaphore, #tpu.memory_space<semaphore_mem>>
    %21 = tpu.memref_squeeze %20 : memref<1x!tpu.dma_semaphore, #tpu.memory_space<semaphore_mem>> -> memref<!tpu.dma_semaphore, #tpu.memory_space<semaphore_mem>>
    tpu.enqueue_dma source(%18 : memref<64x128xbf16, #tpu.memory_space<any>>) target(%19 : memref<64x128xbf16, #tpu.memory_space<vmem>>) target_semaphore(%21 : memref<!tpu.dma_semaphore, #tpu.memory_space<semaphore_mem>>)
    %c0_i32_13 = arith.constant 0 : i32
    %c0_i32_14 = arith.constant 0 : i32
    %22 = tpu.memref_slice %arg1[%2, %c0_i32_14] : memref<288x128xbf16, #tpu.memory_space<any>> -> memref<96x128xbf16, #tpu.memory_space<any>>
    %c0_i32_15 = arith.constant 0 : i32
    %c0_i32_16 = arith.constant 0 : i32
    %23 = tpu.memref_slice %arg5[%c0_i32_15, %c0_i32_16] : memref<288x128xbf16, #tpu.memory_space<vmem>> -> memref<96x128xbf16, #tpu.memory_space<vmem>>
    %24 = tpu.memref_slice %arg6[%c0_i32_13] : memref<4x!tpu.dma_semaphore, #tpu.memory_space<semaphore_mem>> -> memref<1x!tpu.dma_semaphore, #tpu.memory_space<semaphore_mem>>
    %25 = tpu.memref_squeeze %24 : memref<1x!tpu.dma_semaphore, #tpu.memory_space<semaphore_mem>> -> memref<!tpu.dma_semaphore, #tpu.memory_space<semaphore_mem>>
    tpu.wait_dma2 semaphore(%25 : memref<!tpu.dma_semaphore, #tpu.memory_space<semaphore_mem>>) src(%22 : memref<96x128xbf16, #tpu.memory_space<any>>) dst(%23 : memref<96x128xbf16, #tpu.memory_space<vmem>>)
    %c0 = arith.constant 0 : index
    %c0_17 = arith.constant 0 : index
    %26 = vector.load %arg5[%c0, %c0_17] : memref<288x128xbf16, #tpu.memory_space<vmem>>, vector<64x128xbf16>
    %c0_18 = arith.constant 0 : index
    %c0_19 = arith.constant 0 : index
    %27 = vector.load %arg2[%c0_18, %c0_19] : memref<1152x128xbf16, #tpu.memory_space<vmem>>, vector<128x128xbf16>
    %cst = arith.constant dense<0.000000e+00> : vector<64x128xf32>
    %28 = tpu.matmul %26, %27, %cst {dimension_numbers = #tpu.dot_dimension_numbers<[1], [0], [0], [1], [0, 0, 1, 1], [], []>} : vector<64x128xbf16>, vector<128x128xbf16>, vector<64x128xf32> -> vector<64x128xf32>
    %c1 = arith.constant 1 : index
    %c0_20 = arith.constant 0 : index
    %29 = vector.load %arg5[%c1, %c0_20] : memref<288x128xbf16, #tpu.memory_space<vmem>>, vector<64x128xbf16>
    %c128 = arith.constant 128 : index
    %c0_21 = arith.constant 0 : index
    %30 = vector.load %arg2[%c128, %c0_21] : memref<1152x128xbf16, #tpu.memory_space<vmem>>, vector<128x128xbf16>
    %cst_22 = arith.constant dense<0.000000e+00> : vector<64x128xf32>
    %31 = tpu.matmul %29, %30, %cst_22 {dimension_numbers = #tpu.dot_dimension_numbers<[1], [0], [0], [1], [0, 0, 1, 1], [], []>} : vector<64x128xbf16>, vector<128x128xbf16>, vector<64x128xf32> -> vector<64x128xf32>
    %32 = arith.addf %28, %31 : vector<64x128xf32>
    %c2 = arith.constant 2 : index
    %c0_23 = arith.constant 0 : index
    %33 = vector.load %arg5[%c2, %c0_23] : memref<288x128xbf16, #tpu.memory_space<vmem>>, vector<64x128xbf16>
    %c256 = arith.constant 256 : index
    %c0_24 = arith.constant 0 : index
    %34 = vector.load %arg2[%c256, %c0_24] : memref<1152x128xbf16, #tpu.memory_space<vmem>>, vector<128x128xbf16>
    %cst_25 = arith.constant dense<0.000000e+00> : vector<64x128xf32>
    %35 = tpu.matmul %33, %34, %cst_25 {dimension_numbers = #tpu.dot_dimension_numbers<[1], [0], [0], [1], [0, 0, 1, 1], [], []>} : vector<64x128xbf16>, vector<128x128xbf16>, vector<64x128xf32> -> vector<64x128xf32>
    %36 = arith.addf %32, %35 : vector<64x128xf32>
    %c14 = arith.constant 14 : index
    %c0_26 = arith.constant 0 : index
    %37 = vector.load %arg5[%c14, %c0_26] : memref<288x128xbf16, #tpu.memory_space<vmem>>, vector<64x128xbf16>
    %c384 = arith.constant 384 : index
    %c0_27 = arith.constant 0 : index
    %38 = vector.load %arg2[%c384, %c0_27] : memref<1152x128xbf16, #tpu.memory_space<vmem>>, vector<128x128xbf16>
    %cst_28 = arith.constant dense<0.000000e+00> : vector<64x128xf32>
    %39 = tpu.matmul %37, %38, %cst_28 {dimension_numbers = #tpu.dot_dimension_numbers<[1], [0], [0], [1], [0, 0, 1, 1], [], []>} : vector<64x128xbf16>, vector<128x128xbf16>, vector<64x128xf32> -> vector<64x128xf32>
    %40 = arith.addf %36, %39 : vector<64x128xf32>
    %c15 = arith.constant 15 : index
    %c0_29 = arith.constant 0 : index
    %41 = vector.load %arg5[%c15, %c0_29] : memref<288x128xbf16, #tpu.memory_space<vmem>>, vector<64x128xbf16>
    %c512 = arith.constant 512 : index
    %c0_30 = arith.constant 0 : index
    %42 = vector.load %arg2[%c512, %c0_30] : memref<1152x128xbf16, #tpu.memory_space<vmem>>, vector<128x128xbf16>
    %cst_31 = arith.constant dense<0.000000e+00> : vector<64x128xf32>
    %43 = tpu.matmul %41, %42, %cst_31 {dimension_numbers = #tpu.dot_dimension_numbers<[1], [0], [0], [1], [0, 0, 1, 1], [], []>} : vector<64x128xbf16>, vector<128x128xbf16>, vector<64x128xf32> -> vector<64x128xf32>
    %44 = arith.addf %40, %43 : vector<64x128xf32>
    %c16 = arith.constant 16 : index
    %c0_32 = arith.constant 0 : index
    %45 = vector.load %arg5[%c16, %c0_32] : memref<288x128xbf16, #tpu.memory_space<vmem>>, vector<64x128xbf16>
    %c640 = arith.constant 640 : index
    %c0_33 = arith.constant 0 : index
    %46 = vector.load %arg2[%c640, %c0_33] : memref<1152x128xbf16, #tpu.memory_space<vmem>>, vector<128x128xbf16>
    %cst_34 = arith.constant dense<0.000000e+00> : vector<64x128xf32>
    %47 = tpu.matmul %45, %46, %cst_34 {dimension_numbers = #tpu.dot_dimension_numbers<[1], [0], [0], [1], [0, 0, 1, 1], [], []>} : vector<64x128xbf16>, vector<128x128xbf16>, vector<64x128xf32> -> vector<64x128xf32>
    %48 = arith.addf %44, %47 : vector<64x128xf32>
    %c28 = arith.constant 28 : index
    %c0_35 = arith.constant 0 : index
    %49 = vector.load %arg5[%c28, %c0_35] : memref<288x128xbf16, #tpu.memory_space<vmem>>, vector<64x128xbf16>
    %c768 = arith.constant 768 : index
    %c0_36 = arith.constant 0 : index
    %50 = vector.load %arg2[%c768, %c0_36] : memref<1152x128xbf16, #tpu.memory_space<vmem>>, vector<128x128xbf16>
    %cst_37 = arith.constant dense<0.000000e+00> : vector<64x128xf32>
    %51 = tpu.matmul %49, %50, %cst_37 {dimension_numbers = #tpu.dot_dimension_numbers<[1], [0], [0], [1], [0, 0, 1, 1], [], []>} : vector<64x128xbf16>, vector<128x128xbf16>, vector<64x128xf32> -> vector<64x128xf32>
    %52 = arith.addf %48, %51 : vector<64x128xf32>
    %c29 = arith.constant 29 : index
    %c0_38 = arith.constant 0 : index
    %53 = vector.load %arg5[%c29, %c0_38] : memref<288x128xbf16, #tpu.memory_space<vmem>>, vector<64x128xbf16>
    %c896 = arith.constant 896 : index
    %c0_39 = arith.constant 0 : index
    %54 = vector.load %arg2[%c896, %c0_39] : memref<1152x128xbf16, #tpu.memory_space<vmem>>, vector<128x128xbf16>
    %cst_40 = arith.constant dense<0.000000e+00> : vector<64x128xf32>
    %55 = tpu.matmul %53, %54, %cst_40 {dimension_numbers = #tpu.dot_dimension_numbers<[1], [0], [0], [1], [0, 0, 1, 1], [], []>} : vector<64x128xbf16>, vector<128x128xbf16>, vector<64x128xf32> -> vector<64x128xf32>
    %56 = arith.addf %52, %55 : vector<64x128xf32>
    %c30 = arith.constant 30 : index
    %c0_41 = arith.constant 0 : index
    %57 = vector.load %arg5[%c30, %c0_41] : memref<288x128xbf16, #tpu.memory_space<vmem>>, vector<64x128xbf16>
    %c1024 = arith.constant 1024 : index
    %c0_42 = arith.constant 0 : index
    %58 = vector.load %arg2[%c1024, %c0_42] : memref<1152x128xbf16, #tpu.memory_space<vmem>>, vector<128x128xbf16>
    %cst_43 = arith.constant dense<0.000000e+00> : vector<64x128xf32>
    %59 = tpu.matmul %57, %58, %cst_43 {dimension_numbers = #tpu.dot_dimension_numbers<[1], [0], [0], [1], [0, 0, 1, 1], [], []>} : vector<64x128xbf16>, vector<128x128xbf16>, vector<64x128xf32> -> vector<64x128xf32>
    %60 = arith.addf %56, %59 : vector<64x128xf32>
    %c0_44 = arith.constant 0 : index
    %c0_45 = arith.constant 0 : index
    %61 = vector.load %arg3[%c0_44, %c0_45] : memref<2x128xf32, #tpu.memory_space<vmem>>, vector<1x128xf32>
    %62 = vector.broadcast %61 : vector<1x128xf32> to vector<64x128xf32>
    %63 = arith.mulf %60, %62 : vector<64x128xf32>
    %c1_46 = arith.constant 1 : index
    %c0_47 = arith.constant 0 : index
    %64 = vector.load %arg3[%c1_46, %c0_47] : memref<2x128xf32, #tpu.memory_space<vmem>>, vector<1x128xf32>
    %65 = vector.broadcast %64 : vector<1x128xf32> to vector<64x128xf32>
    %66 = arith.addf %63, %65 : vector<64x128xf32>
    %cst_48 = arith.constant 0.000000e+00 : f32
    %67 = vector.broadcast %cst_48 : f32 to vector<64x128xf32>
    %68 = arith.maximumf %66, %67 : vector<64x128xf32>
    %69 = arith.truncf %68 : vector<64x128xf32> to vector<64x128xbf16>
    %c0_49 = arith.constant 0 : index
    %c0_50 = arith.constant 0 : index
    %70 = vector.load %arg4[%c0_49, %c0_50] : memref<256x128xbf16, #tpu.memory_space<vmem>>, vector<64x128xbf16>
    tpu.vector_store %arg4[%c0_49, %c0_50], %69 {strides = array<i32>} : memref<256x128xbf16, #tpu.memory_space<vmem>>, vector<64x128xbf16>,
    %c1_i32_51 = arith.constant 1 : i32
    %c0_i32_52 = arith.constant 0 : i32
    %71 = tpu.memref_slice %arg1[%7, %c0_i32_52] : memref<288x128xbf16, #tpu.memory_space<any>> -> memref<64x128xbf16, #tpu.memory_space<any>>
    %c96_i32_53 = arith.constant 96 : i32
    %c0_i32_54 = arith.constant 0 : i32
    %72 = tpu.memref_slice %arg5[%c96_i32_53, %c0_i32_54] : memref<288x128xbf16, #tpu.memory_space<vmem>> -> memref<64x128xbf16, #tpu.memory_space<vmem>>
    %73 = tpu.memref_slice %arg6[%c1_i32_51] : memref<4x!tpu.dma_semaphore, #tpu.memory_space<semaphore_mem>> -> memref<1x!tpu.dma_semaphore, #tpu.memory_space<semaphore_mem>>
    %74 = tpu.memref_squeeze %73 : memref<1x!tpu.dma_semaphore, #tpu.memory_space<semaphore_mem>> -> memref<!tpu.dma_semaphore, #tpu.memory_space<semaphore_mem>>
    tpu.wait_dma2 semaphore(%74 : memref<!tpu.dma_semaphore, #tpu.memory_space<semaphore_mem>>) src(%71 : memref<64x128xbf16, #tpu.memory_space<any>>) dst(%72 : memref<64x128xbf16, #tpu.memory_space<vmem>>)
    %c64 = arith.constant 64 : index
    %c0_55 = arith.constant 0 : index
    %75 = vector.load %arg5[%c64, %c0_55] : memref<288x128xbf16, #tpu.memory_space<vmem>>, vector<64x128xbf16>
    %c0_56 = arith.constant 0 : index
    %c0_57 = arith.constant 0 : index
    %76 = vector.load %arg2[%c0_56, %c0_57] : memref<1152x128xbf16, #tpu.memory_space<vmem>>, vector<128x128xbf16>
    %cst_58 = arith.constant dense<0.000000e+00> : vector<64x128xf32>
    %77 = tpu.matmul %75, %76, %cst_58 {dimension_numbers = #tpu.dot_dimension_numbers<[1], [0], [0], [1], [0, 0, 1, 1], [], []>} : vector<64x128xbf16>, vector<128x128xbf16>, vector<64x128xf32> -> vector<64x128xf32>
    %c65 = arith.constant 65 : index
    %c0_59 = arith.constant 0 : index
    %78 = vector.load %arg5[%c65, %c0_59] : memref<288x128xbf16, #tpu.memory_space<vmem>>, vector<64x128xbf16>
    %c128_60 = arith.constant 128 : index
    %c0_61 = arith.constant 0 : index
    %79 = vector.load %arg2[%c128_60, %c0_61] : memref<1152x128xbf16, #tpu.memory_space<vmem>>, vector<128x128xbf16>
    %cst_62 = arith.constant dense<0.000000e+00> : vector<64x128xf32>
    %80 = tpu.matmul %78, %79, %cst_62 {dimension_numbers = #tpu.dot_dimension_numbers<[1], [0], [0], [1], [0, 0, 1, 1], [], []>} : vector<64x128xbf16>, vector<128x128xbf16>, vector<64x128xf32> -> vector<64x128xf32>
    %81 = arith.addf %77, %80 : vector<64x128xf32>
    %c66 = arith.constant 66 : index
    %c0_63 = arith.constant 0 : index
    %82 = vector.load %arg5[%c66, %c0_63] : memref<288x128xbf16, #tpu.memory_space<vmem>>, vector<64x128xbf16>
    %c256_64 = arith.constant 256 : index
    %c0_65 = arith.constant 0 : index
    %83 = vector.load %arg2[%c256_64, %c0_65] : memref<1152x128xbf16, #tpu.memory_space<vmem>>, vector<128x128xbf16>
    %cst_66 = arith.constant dense<0.000000e+00> : vector<64x128xf32>
    %84 = tpu.matmul %82, %83, %cst_66 {dimension_numbers = #tpu.dot_dimension_numbers<[1], [0], [0], [1], [0, 0, 1, 1], [], []>} : vector<64x128xbf16>, vector<128x128xbf16>, vector<64x128xf32> -> vector<64x128xf32>
    %85 = arith.addf %81, %84 : vector<64x128xf32>
    %c78 = arith.constant 78 : index
    %c0_67 = arith.constant 0 : index
    %86 = vector.load %arg5[%c78, %c0_67] : memref<288x128xbf16, #tpu.memory_space<vmem>>, vector<64x128xbf16>
    %c384_68 = arith.constant 384 : index
    %c0_69 = arith.constant 0 : index
    %87 = vector.load %arg2[%c384_68, %c0_69] : memref<1152x128xbf16, #tpu.memory_space<vmem>>, vector<128x128xbf16>
    %cst_70 = arith.constant dense<0.000000e+00> : vector<64x128xf32>
    %88 = tpu.matmul %86, %87, %cst_70 {dimension_numbers = #tpu.dot_dimension_numbers<[1], [0], [0], [1], [0, 0, 1, 1], [], []>} : vector<64x128xbf16>, vector<128x128xbf16>, vector<64x128xf32> -> vector<64x128xf32>
    %89 = arith.addf %85, %88 : vector<64x128xf32>
    %c79 = arith.constant 79 : index
    %c0_71 = arith.constant 0 : index
    %90 = vector.load %arg5[%c79, %c0_71] : memref<288x128xbf16, #tpu.memory_space<vmem>>, vector<64x128xbf16>
    %c512_72 = arith.constant 512 : index
    %c0_73 = arith.constant 0 : index
    %91 = vector.load %arg2[%c512_72, %c0_73] : memref<1152x128xbf16, #tpu.memory_space<vmem>>, vector<128x128xbf16>
    %cst_74 = arith.constant dense<0.000000e+00> : vector<64x128xf32>
    %92 = tpu.matmul %90, %91, %cst_74 {dimension_numbers = #tpu.dot_dimension_numbers<[1], [0], [0], [1], [0, 0, 1, 1], [], []>} : vector<64x128xbf16>, vector<128x128xbf16>, vector<64x128xf32> -> vector<64x128xf32>
    %93 = arith.addf %89, %92 : vector<64x128xf32>
    %c80 = arith.constant 80 : index
    %c0_75 = arith.constant 0 : index
    %94 = vector.load %arg5[%c80, %c0_75] : memref<288x128xbf16, #tpu.memory_space<vmem>>, vector<64x128xbf16>
    %c640_76 = arith.constant 640 : index
    %c0_77 = arith.constant 0 : index
    %95 = vector.load %arg2[%c640_76, %c0_77] : memref<1152x128xbf16, #tpu.memory_space<vmem>>, vector<128x128xbf16>
    %cst_78 = arith.constant dense<0.000000e+00> : vector<64x128xf32>
    %96 = tpu.matmul %94, %95, %cst_78 {dimension_numbers = #tpu.dot_dimension_numbers<[1], [0], [0], [1], [0, 0, 1, 1], [], []>} : vector<64x128xbf16>, vector<128x128xbf16>, vector<64x128xf32> -> vector<64x128xf32>
    %97 = arith.addf %93, %96 : vector<64x128xf32>
    %c92 = arith.constant 92 : index
    %c0_79 = arith.constant 0 : index
    %98 = vector.load %arg5[%c92, %c0_79] : memref<288x128xbf16, #tpu.memory_space<vmem>>, vector<64x128xbf16>
    %c768_80 = arith.constant 768 : index
    %c0_81 = arith.constant 0 : index
    %99 = vector.load %arg2[%c768_80, %c0_81] : memref<1152x128xbf16, #tpu.memory_space<vmem>>, vector<128x128xbf16>
    %cst_82 = arith.constant dense<0.000000e+00> : vector<64x128xf32>
    %100 = tpu.matmul %98, %99, %cst_82 {dimension_numbers = #tpu.dot_dimension_numbers<[1], [0], [0], [1], [0, 0, 1, 1], [], []>} : vector<64x128xbf16>, vector<128x128xbf16>, vector<64x128xf32> -> vector<64x128xf32>
    %101 = arith.addf %97, %100 : vector<64x128xf32>
    %c93 = arith.constant 93 : index
    %c0_83 = arith.constant 0 : index
    %102 = vector.load %arg5[%c93, %c0_83] : memref<288x128xbf16, #tpu.memory_space<vmem>>, vector<64x128xbf16>
    %c896_84 = arith.constant 896 : index
    %c0_85 = arith.constant 0 : index
    %103 = vector.load %arg2[%c896_84, %c0_85] : memref<1152x128xbf16, #tpu.memory_space<vmem>>, vector<128x128xbf16>
    %cst_86 = arith.constant dense<0.000000e+00> : vector<64x128xf32>
    %104 = tpu.matmul %102, %103, %cst_86 {dimension_numbers = #tpu.dot_dimension_numbers<[1], [0], [0], [1], [0, 0, 1, 1], [], []>} : vector<64x128xbf16>, vector<128x128xbf16>, vector<64x128xf32> -> vector<64x128xf32>
    %105 = arith.addf %101, %104 : vector<64x128xf32>
    %c94 = arith.constant 94 : index
    %c0_87 = arith.constant 0 : index
    %106 = vector.load %arg5[%c94, %c0_87] : memref<288x128xbf16, #tpu.memory_space<vmem>>, vector<64x128xbf16>
    %c1024_88 = arith.constant 1024 : index
    %c0_89 = arith.constant 0 : index
    %107 = vector.load %arg2[%c1024_88, %c0_89] : memref<1152x128xbf16, #tpu.memory_space<vmem>>, vector<128x128xbf16>
    %cst_90 = arith.constant dense<0.000000e+00> : vector<64x128xf32>
    %108 = tpu.matmul %106, %107, %cst_90 {dimension_numbers = #tpu.dot_dimension_numbers<[1], [0], [0], [1], [0, 0, 1, 1], [], []>} : vector<64x128xbf16>, vector<128x128xbf16>, vector<64x128xf32> -> vector<64x128xf32>
    %109 = arith.addf %105, %108 : vector<64x128xf32>
    %c0_91 = arith.constant 0 : index
    %c0_92 = arith.constant 0 : index
    %110 = vector.load %arg3[%c0_91, %c0_92] : memref<2x128xf32, #tpu.memory_space<vmem>>, vector<1x128xf32>
    %111 = vector.broadcast %110 : vector<1x128xf32> to vector<64x128xf32>
    %112 = arith.mulf %109, %111 : vector<64x128xf32>
    %c1_93 = arith.constant 1 : index
    %c0_94 = arith.constant 0 : index
    %113 = vector.load %arg3[%c1_93, %c0_94] : memref<2x128xf32, #tpu.memory_space<vmem>>, vector<1x128xf32>
    %114 = vector.broadcast %113 : vector<1x128xf32> to vector<64x128xf32>
    %115 = arith.addf %112, %114 : vector<64x128xf32>
    %cst_95 = arith.constant 0.000000e+00 : f32
    %116 = vector.broadcast %cst_95 : f32 to vector<64x128xf32>
    %117 = arith.maximumf %115, %116 : vector<64x128xf32>
    %118 = arith.truncf %117 : vector<64x128xf32> to vector<64x128xbf16>
    %c64_96 = arith.constant 64 : index
    %c0_97 = arith.constant 0 : index
    %119 = vector.load %arg4[%c64_96, %c0_97] : memref<256x128xbf16, #tpu.memory_space<vmem>>, vector<64x128xbf16>
    tpu.vector_store %arg4[%c64_96, %c0_97], %118 {strides = array<i32>} : memref<256x128xbf16, #tpu.memory_space<vmem>>, vector<64x128xbf16>,
    %c2_i32_98 = arith.constant 2 : i32
    %c0_i32_99 = arith.constant 0 : i32
    %120 = tpu.memref_slice %arg1[%12, %c0_i32_99] : memref<288x128xbf16, #tpu.memory_space<any>> -> memref<64x128xbf16, #tpu.memory_space<any>>
    %c160_i32_100 = arith.constant 160 : i32
    %c0_i32_101 = arith.constant 0 : i32
    %121 = tpu.memref_slice %arg5[%c160_i32_100, %c0_i32_101] : memref<288x128xbf16, #tpu.memory_space<vmem>> -> memref<64x128xbf16, #tpu.memory_space<vmem>>
    %122 = tpu.memref_slice %arg6[%c2_i32_98] : memref<4x!tpu.dma_semaphore, #tpu.memory_space<semaphore_mem>> -> memref<1x!tpu.dma_semaphore, #tpu.memory_space<semaphore_mem>>
    %123 = tpu.memref_squeeze %122 : memref<1x!tpu.dma_semaphore, #tpu.memory_space<semaphore_mem>> -> memref<!tpu.dma_semaphore, #tpu.memory_space<semaphore_mem>>
    tpu.wait_dma2 semaphore(%123 : memref<!tpu.dma_semaphore, #tpu.memory_space<semaphore_mem>>) src(%120 : memref<64x128xbf16, #tpu.memory_space<any>>) dst(%121 : memref<64x128xbf16, #tpu.memory_space<vmem>>)
    %c128_102 = arith.constant 128 : index
    %c0_103 = arith.constant 0 : index
    %124 = vector.load %arg5[%c128_102, %c0_103] : memref<288x128xbf16, #tpu.memory_space<vmem>>, vector<64x128xbf16>
    %c0_104 = arith.constant 0 : index
    %c0_105 = arith.constant 0 : index
    %125 = vector.load %arg2[%c0_104, %c0_105] : memref<1152x128xbf16, #tpu.memory_space<vmem>>, vector<128x128xbf16>
    %cst_106 = arith.constant dense<0.000000e+00> : vector<64x128xf32>
    %126 = tpu.matmul %124, %125, %cst_106 {dimension_numbers = #tpu.dot_dimension_numbers<[1], [0], [0], [1], [0, 0, 1, 1], [], []>} : vector<64x128xbf16>, vector<128x128xbf16>, vector<64x128xf32> -> vector<64x128xf32>
    %c129 = arith.constant 129 : index
    %c0_107 = arith.constant 0 : index
    %127 = vector.load %arg5[%c129, %c0_107] : memref<288x128xbf16, #tpu.memory_space<vmem>>, vector<64x128xbf16>
    %c128_108 = arith.constant 128 : index
    %c0_109 = arith.constant 0 : index
    %128 = vector.load %arg2[%c128_108, %c0_109] : memref<1152x128xbf16, #tpu.memory_space<vmem>>, vector<128x128xbf16>
    %cst_110 = arith.constant dense<0.000000e+00> : vector<64x128xf32>
    %129 = tpu.matmul %127, %128, %cst_110 {dimension_numbers = #tpu.dot_dimension_numbers<[1], [0], [0], [1], [0, 0, 1, 1], [], []>} : vector<64x128xbf16>, vector<128x128xbf16>, vector<64x128xf32> -> vector<64x128xf32>
    %130 = arith.addf %126, %129 : vector<64x128xf32>
    %c130 = arith.constant 130 : index
    %c0_111 = arith.constant 0 : index
    %131 = vector.load %arg5[%c130, %c0_111] : memref<288x128xbf16, #tpu.memory_space<vmem>>, vector<64x128xbf16>
    %c256_112 = arith.constant 256 : index
    %c0_113 = arith.constant 0 : index
    %132 = vector.load %arg2[%c256_112, %c0_113] : memref<1152x128xbf16, #tpu.memory_space<vmem>>, vector<128x128xbf16>
    %cst_114 = arith.constant dense<0.000000e+00> : vector<64x128xf32>
    %133 = tpu.matmul %131, %132, %cst_114 {dimension_numbers = #tpu.dot_dimension_numbers<[1], [0], [0], [1], [0, 0, 1, 1], [], []>} : vector<64x128xbf16>, vector<128x128xbf16>, vector<64x128xf32> -> vector<64x128xf32>
    %134 = arith.addf %130, %133 : vector<64x128xf32>
    %c142 = arith.constant 142 : index
    %c0_115 = arith.constant 0 : index
    %135 = vector.load %arg5[%c142, %c0_115] : memref<288x128xbf16, #tpu.memory_space<vmem>>, vector<64x128xbf16>
    %c384_116 = arith.constant 384 : index
    %c0_117 = arith.constant 0 : index
    %136 = vector.load %arg2[%c384_116, %c0_117] : memref<1152x128xbf16, #tpu.memory_space<vmem>>, vector<128x128xbf16>
    %cst_118 = arith.constant dense<0.000000e+00> : vector<64x128xf32>
    %137 = tpu.matmul %135, %136, %cst_118 {dimension_numbers = #tpu.dot_dimension_numbers<[1], [0], [0], [1], [0, 0, 1, 1], [], []>} : vector<64x128xbf16>, vector<128x128xbf16>, vector<64x128xf32> -> vector<64x128xf32>
    %138 = arith.addf %134, %137 : vector<64x128xf32>
    %c143 = arith.constant 143 : index
    %c0_119 = arith.constant 0 : index
    %139 = vector.load %arg5[%c143, %c0_119] : memref<288x128xbf16, #tpu.memory_space<vmem>>, vector<64x128xbf16>
    %c512_120 = arith.constant 512 : index
    %c0_121 = arith.constant 0 : index
    %140 = vector.load %arg2[%c512_120, %c0_121] : memref<1152x128xbf16, #tpu.memory_space<vmem>>, vector<128x128xbf16>
    %cst_122 = arith.constant dense<0.000000e+00> : vector<64x128xf32>
    %141 = tpu.matmul %139, %140, %cst_122 {dimension_numbers = #tpu.dot_dimension_numbers<[1], [0], [0], [1], [0, 0, 1, 1], [], []>} : vector<64x128xbf16>, vector<128x128xbf16>, vector<64x128xf32> -> vector<64x128xf32>
    %142 = arith.addf %138, %141 : vector<64x128xf32>
    %c144 = arith.constant 144 : index
    %c0_123 = arith.constant 0 : index
    %143 = vector.load %arg5[%c144, %c0_123] : memref<288x128xbf16, #tpu.memory_space<vmem>>, vector<64x128xbf16>
    %c640_124 = arith.constant 640 : index
    %c0_125 = arith.constant 0 : index
    %144 = vector.load %arg2[%c640_124, %c0_125] : memref<1152x128xbf16, #tpu.memory_space<vmem>>, vector<128x128xbf16>
    %cst_126 = arith.constant dense<0.000000e+00> : vector<64x128xf32>
    %145 = tpu.matmul %143, %144, %cst_126 {dimension_numbers = #tpu.dot_dimension_numbers<[1], [0], [0], [1], [0, 0, 1, 1], [], []>} : vector<64x128xbf16>, vector<128x128xbf16>, vector<64x128xf32> -> vector<64x128xf32>
    %146 = arith.addf %142, %145 : vector<64x128xf32>
    %c156 = arith.constant 156 : index
    %c0_127 = arith.constant 0 : index
    %147 = vector.load %arg5[%c156, %c0_127] : memref<288x128xbf16, #tpu.memory_space<vmem>>, vector<64x128xbf16>
    %c768_128 = arith.constant 768 : index
    %c0_129 = arith.constant 0 : index
    %148 = vector.load %arg2[%c768_128, %c0_129] : memref<1152x128xbf16, #tpu.memory_space<vmem>>, vector<128x128xbf16>
    %cst_130 = arith.constant dense<0.000000e+00> : vector<64x128xf32>
    %149 = tpu.matmul %147, %148, %cst_130 {dimension_numbers = #tpu.dot_dimension_numbers<[1], [0], [0], [1], [0, 0, 1, 1], [], []>} : vector<64x128xbf16>, vector<128x128xbf16>, vector<64x128xf32> -> vector<64x128xf32>
    %150 = arith.addf %146, %149 : vector<64x128xf32>
    %c157 = arith.constant 157 : index
    %c0_131 = arith.constant 0 : index
    %151 = vector.load %arg5[%c157, %c0_131] : memref<288x128xbf16, #tpu.memory_space<vmem>>, vector<64x128xbf16>
    %c896_132 = arith.constant 896 : index
    %c0_133 = arith.constant 0 : index
    %152 = vector.load %arg2[%c896_132, %c0_133] : memref<1152x128xbf16, #tpu.memory_space<vmem>>, vector<128x128xbf16>
    %cst_134 = arith.constant dense<0.000000e+00> : vector<64x128xf32>
    %153 = tpu.matmul %151, %152, %cst_134 {dimension_numbers = #tpu.dot_dimension_numbers<[1], [0], [0], [1], [0, 0, 1, 1], [], []>} : vector<64x128xbf16>, vector<128x128xbf16>, vector<64x128xf32> -> vector<64x128xf32>
    %154 = arith.addf %150, %153 : vector<64x128xf32>
    %c158 = arith.constant 158 : index
    %c0_135 = arith.constant 0 : index
    %155 = vector.load %arg5[%c158, %c0_135] : memref<288x128xbf16, #tpu.memory_space<vmem>>, vector<64x128xbf16>
    %c1024_136 = arith.constant 1024 : index
    %c0_137 = arith.constant 0 : index
    %156 = vector.load %arg2[%c1024_136, %c0_137] : memref<1152x128xbf16, #tpu.memory_space<vmem>>, vector<128x128xbf16>
    %cst_138 = arith.constant dense<0.000000e+00> : vector<64x128xf32>
    %157 = tpu.matmul %155, %156, %cst_138 {dimension_numbers = #tpu.dot_dimension_numbers<[1], [0], [0], [1], [0, 0, 1, 1], [], []>} : vector<64x128xbf16>, vector<128x128xbf16>, vector<64x128xf32> -> vector<64x128xf32>
    %158 = arith.addf %154, %157 : vector<64x128xf32>
    %c0_139 = arith.constant 0 : index
    %c0_140 = arith.constant 0 : index
    %159 = vector.load %arg3[%c0_139, %c0_140] : memref<2x128xf32, #tpu.memory_space<vmem>>, vector<1x128xf32>
    %160 = vector.broadcast %159 : vector<1x128xf32> to vector<64x128xf32>
    %161 = arith.mulf %158, %160 : vector<64x128xf32>
    %c1_141 = arith.constant 1 : index
    %c0_142 = arith.constant 0 : index
    %162 = vector.load %arg3[%c1_141, %c0_142] : memref<2x128xf32, #tpu.memory_space<vmem>>, vector<1x128xf32>
    %163 = vector.broadcast %162 : vector<1x128xf32> to vector<64x128xf32>
    %164 = arith.addf %161, %163 : vector<64x128xf32>
    %cst_143 = arith.constant 0.000000e+00 : f32
    %165 = vector.broadcast %cst_143 : f32 to vector<64x128xf32>
    %166 = arith.maximumf %164, %165 : vector<64x128xf32>
    %167 = arith.truncf %166 : vector<64x128xf32> to vector<64x128xbf16>
    %c128_144 = arith.constant 128 : index
    %c0_145 = arith.constant 0 : index
    %168 = vector.load %arg4[%c128_144, %c0_145] : memref<256x128xbf16, #tpu.memory_space<vmem>>, vector<64x128xbf16>
    tpu.vector_store %arg4[%c128_144, %c0_145], %167 {strides = array<i32>} : memref<256x128xbf16, #tpu.memory_space<vmem>>, vector<64x128xbf16>,
    %c3_i32_146 = arith.constant 3 : i32
    %c0_i32_147 = arith.constant 0 : i32
    %169 = tpu.memref_slice %arg1[%17, %c0_i32_147] : memref<288x128xbf16, #tpu.memory_space<any>> -> memref<64x128xbf16, #tpu.memory_space<any>>
    %c224_i32_148 = arith.constant 224 : i32
    %c0_i32_149 = arith.constant 0 : i32
    %170 = tpu.memref_slice %arg5[%c224_i32_148, %c0_i32_149] : memref<288x128xbf16, #tpu.memory_space<vmem>> -> memref<64x128xbf16, #tpu.memory_space<vmem>>
    %171 = tpu.memref_slice %arg6[%c3_i32_146] : memref<4x!tpu.dma_semaphore, #tpu.memory_space<semaphore_mem>> -> memref<1x!tpu.dma_semaphore, #tpu.memory_space<semaphore_mem>>
    %172 = tpu.memref_squeeze %171 : memref<1x!tpu.dma_semaphore, #tpu.memory_space<semaphore_mem>> -> memref<!tpu.dma_semaphore, #tpu.memory_space<semaphore_mem>>
    tpu.wait_dma2 semaphore(%172 : memref<!tpu.dma_semaphore, #tpu.memory_space<semaphore_mem>>) src(%169 : memref<64x128xbf16, #tpu.memory_space<any>>) dst(%170 : memref<64x128xbf16, #tpu.memory_space<vmem>>)
    %c192 = arith.constant 192 : index
    %c0_150 = arith.constant 0 : index
    %173 = vector.load %arg5[%c192, %c0_150] : memref<288x128xbf16, #tpu.memory_space<vmem>>, vector<64x128xbf16>
    %c0_151 = arith.constant 0 : index
    %c0_152 = arith.constant 0 : index
    %174 = vector.load %arg2[%c0_151, %c0_152] : memref<1152x128xbf16, #tpu.memory_space<vmem>>, vector<128x128xbf16>
    %cst_153 = arith.constant dense<0.000000e+00> : vector<64x128xf32>
    %175 = tpu.matmul %173, %174, %cst_153 {dimension_numbers = #tpu.dot_dimension_numbers<[1], [0], [0], [1], [0, 0, 1, 1], [], []>} : vector<64x128xbf16>, vector<128x128xbf16>, vector<64x128xf32> -> vector<64x128xf32>
    %c193 = arith.constant 193 : index
    %c0_154 = arith.constant 0 : index
    %176 = vector.load %arg5[%c193, %c0_154] : memref<288x128xbf16, #tpu.memory_space<vmem>>, vector<64x128xbf16>
    %c128_155 = arith.constant 128 : index
    %c0_156 = arith.constant 0 : index
    %177 = vector.load %arg2[%c128_155, %c0_156] : memref<1152x128xbf16, #tpu.memory_space<vmem>>, vector<128x128xbf16>
    %cst_157 = arith.constant dense<0.000000e+00> : vector<64x128xf32>
    %178 = tpu.matmul %176, %177, %cst_157 {dimension_numbers = #tpu.dot_dimension_numbers<[1], [0], [0], [1], [0, 0, 1, 1], [], []>} : vector<64x128xbf16>, vector<128x128xbf16>, vector<64x128xf32> -> vector<64x128xf32>
    %179 = arith.addf %175, %178 : vector<64x128xf32>
    %c194 = arith.constant 194 : index
    %c0_158 = arith.constant 0 : index
    %180 = vector.load %arg5[%c194, %c0_158] : memref<288x128xbf16, #tpu.memory_space<vmem>>, vector<64x128xbf16>
    %c256_159 = arith.constant 256 : index
    %c0_160 = arith.constant 0 : index
    %181 = vector.load %arg2[%c256_159, %c0_160] : memref<1152x128xbf16, #tpu.memory_space<vmem>>, vector<128x128xbf16>
    %cst_161 = arith.constant dense<0.000000e+00> : vector<64x128xf32>
    %182 = tpu.matmul %180, %181, %cst_161 {dimension_numbers = #tpu.dot_dimension_numbers<[1], [0], [0], [1], [0, 0, 1, 1], [], []>} : vector<64x128xbf16>, vector<128x128xbf16>, vector<64x128xf32> -> vector<64x128xf32>
    %183 = arith.addf %179, %182 : vector<64x128xf32>
    %c206 = arith.constant 206 : index
    %c0_162 = arith.constant 0 : index
    %184 = vector.load %arg5[%c206, %c0_162] : memref<288x128xbf16, #tpu.memory_space<vmem>>, vector<64x128xbf16>
    %c384_163 = arith.constant 384 : index
    %c0_164 = arith.constant 0 : index
    %185 = vector.load %arg2[%c384_163, %c0_164] : memref<1152x128xbf16, #tpu.memory_space<vmem>>, vector<128x128xbf16>
    %cst_165 = arith.constant dense<0.000000e+00> : vector<64x128xf32>
    %186 = tpu.matmul %184, %185, %cst_165 {dimension_numbers = #tpu.dot_dimension_numbers<[1], [0], [0], [1], [0, 0, 1, 1], [], []>} : vector<64x128xbf16>, vector<128x128xbf16>, vector<64x128xf32> -> vector<64x128xf32>
    %187 = arith.addf %183, %186 : vector<64x128xf32>
    %c207 = arith.constant 207 : index
    %c0_166 = arith.constant 0 : index
    %188 = vector.load %arg5[%c207, %c0_166] : memref<288x128xbf16, #tpu.memory_space<vmem>>, vector<64x128xbf16>
    %c512_167 = arith.constant 512 : index
    %c0_168 = arith.constant 0 : index
    %189 = vector.load %arg2[%c512_167, %c0_168] : memref<1152x128xbf16, #tpu.memory_space<vmem>>, vector<128x128xbf16>
    %cst_169 = arith.constant dense<0.000000e+00> : vector<64x128xf32>
    %190 = tpu.matmul %188, %189, %cst_169 {dimension_numbers = #tpu.dot_dimension_numbers<[1], [0], [0], [1], [0, 0, 1, 1], [], []>} : vector<64x128xbf16>, vector<128x128xbf16>, vector<64x128xf32> -> vector<64x128xf32>
    %191 = arith.addf %187, %190 : vector<64x128xf32>
    %c208 = arith.constant 208 : index
    %c0_170 = arith.constant 0 : index
    %192 = vector.load %arg5[%c208, %c0_170] : memref<288x128xbf16, #tpu.memory_space<vmem>>, vector<64x128xbf16>
    %c640_171 = arith.constant 640 : index
    %c0_172 = arith.constant 0 : index
    %193 = vector.load %arg2[%c640_171, %c0_172] : memref<1152x128xbf16, #tpu.memory_space<vmem>>, vector<128x128xbf16>
    %cst_173 = arith.constant dense<0.000000e+00> : vector<64x128xf32>
    %194 = tpu.matmul %192, %193, %cst_173 {dimension_numbers = #tpu.dot_dimension_numbers<[1], [0], [0], [1], [0, 0, 1, 1], [], []>} : vector<64x128xbf16>, vector<128x128xbf16>, vector<64x128xf32> -> vector<64x128xf32>
    %195 = arith.addf %191, %194 : vector<64x128xf32>
    %c220 = arith.constant 220 : index
    %c0_174 = arith.constant 0 : index
    %196 = vector.load %arg5[%c220, %c0_174] : memref<288x128xbf16, #tpu.memory_space<vmem>>, vector<64x128xbf16>
    %c768_175 = arith.constant 768 : index
    %c0_176 = arith.constant 0 : index
    %197 = vector.load %arg2[%c768_175, %c0_176] : memref<1152x128xbf16, #tpu.memory_space<vmem>>, vector<128x128xbf16>
    %cst_177 = arith.constant dense<0.000000e+00> : vector<64x128xf32>
    %198 = tpu.matmul %196, %197, %cst_177 {dimension_numbers = #tpu.dot_dimension_numbers<[1], [0], [0], [1], [0, 0, 1, 1], [], []>} : vector<64x128xbf16>, vector<128x128xbf16>, vector<64x128xf32> -> vector<64x128xf32>
    %199 = arith.addf %195, %198 : vector<64x128xf32>
    %c221 = arith.constant 221 : index
    %c0_178 = arith.constant 0 : index
    %200 = vector.load %arg5[%c221, %c0_178] : memref<288x128xbf16, #tpu.memory_space<vmem>>, vector<64x128xbf16>
    %c896_179 = arith.constant 896 : index
    %c0_180 = arith.constant 0 : index
    %201 = vector.load %arg2[%c896_179, %c0_180] : memref<1152x128xbf16, #tpu.memory_space<vmem>>, vector<128x128xbf16>
    %cst_181 = arith.constant dense<0.000000e+00> : vector<64x128xf32>
    %202 = tpu.matmul %200, %201, %cst_181 {dimension_numbers = #tpu.dot_dimension_numbers<[1], [0], [0], [1], [0, 0, 1, 1], [], []>} : vector<64x128xbf16>, vector<128x128xbf16>, vector<64x128xf32> -> vector<64x128xf32>
    %203 = arith.addf %199, %202 : vector<64x128xf32>
    %c222 = arith.constant 222 : index
    %c0_182 = arith.constant 0 : index
    %204 = vector.load %arg5[%c222, %c0_182] : memref<288x128xbf16, #tpu.memory_space<vmem>>, vector<64x128xbf16>
    %c1024_183 = arith.constant 1024 : index
    %c0_184 = arith.constant 0 : index
    %205 = vector.load %arg2[%c1024_183, %c0_184] : memref<1152x128xbf16, #tpu.memory_space<vmem>>, vector<128x128xbf16>
    %cst_185 = arith.constant dense<0.000000e+00> : vector<64x128xf32>
    %206 = tpu.matmul %204, %205, %cst_185 {dimension_numbers = #tpu.dot_dimension_numbers<[1], [0], [0], [1], [0, 0, 1, 1], [], []>} : vector<64x128xbf16>, vector<128x128xbf16>, vector<64x128xf32> -> vector<64x128xf32>
    %207 = arith.addf %203, %206 : vector<64x128xf32>
    %c0_186 = arith.constant 0 : index
    %c0_187 = arith.constant 0 : index
    %208 = vector.load %arg3[%c0_186, %c0_187] : memref<2x128xf32, #tpu.memory_space<vmem>>, vector<1x128xf32>
    %209 = vector.broadcast %208 : vector<1x128xf32> to vector<64x128xf32>
    %210 = arith.mulf %207, %209 : vector<64x128xf32>
    %c1_188 = arith.constant 1 : index
    %c0_189 = arith.constant 0 : index
    %211 = vector.load %arg3[%c1_188, %c0_189] : memref<2x128xf32, #tpu.memory_space<vmem>>, vector<1x128xf32>
    %212 = vector.broadcast %211 : vector<1x128xf32> to vector<64x128xf32>
    %213 = arith.addf %210, %212 : vector<64x128xf32>
    %cst_190 = arith.constant 0.000000e+00 : f32
    %214 = vector.broadcast %cst_190 : f32 to vector<64x128xf32>
    %215 = arith.maximumf %213, %214 : vector<64x128xf32>
    %216 = arith.truncf %215 : vector<64x128xf32> to vector<64x128xbf16>
    %c192_191 = arith.constant 192 : index
    %c0_192 = arith.constant 0 : index
    %217 = vector.load %arg4[%c192_191, %c0_192] : memref<256x128xbf16, #tpu.memory_space<vmem>>, vector<64x128xbf16>
    tpu.vector_store %arg4[%c192_191, %c0_192], %216 {strides = array<i32>} : memref<256x128xbf16, #tpu.memory_space<vmem>>, vector<64x128xbf16>,
    return
  }
  func.func @transform_1(%arg0: i32) -> (i32, i32) {
    %c0_i32 = arith.constant 0 : i32
    %c0_i32_0 = arith.constant 0 : i32
    %c0_i32_1 = arith.constant 0 : i32
    return %c0_i32, %c0_i32_0 : i32, i32
  }
  func.func @transform_2(%arg0: i32) -> (i32, i32) {
    %c0_i32 = arith.constant 0 : i32
    %c0_i32_0 = arith.constant 0 : i32
    %c0_i32_1 = arith.constant 0 : i32
    return %c0_i32, %c0_i32_0 : i32, i32
  }
  func.func @transform_3(%arg0: i32) -> (i32, i32) {
    %c0_i32 = arith.constant 0 : i32
    %c0_i32_0 = arith.constant 0 : i32
    return %arg0, %c0_i32 : i32, i32
  }
}

</mosaic_0001>

<llo_original>
// kernel: tpu_custom_call.1
$region0: #{tpu_custom_call.1}
  #allocation0 [shape = 'u32[]', space=smem, size = 0x4, offset = 0x4, fixed_abs, tag = 'smem constant byte address 0x4 - core index']
  #allocation1 [shape = 'u32[72,128]{1,0:T(1,128)}', space=vmem, size = 0x9000, scoped, tag = 'internal scratch']
  #allocation2 [shape = 'bf16[288,128]{1,0:T(8,128)(2,1)}', space=vmem, size = 0x12000, scoped, tag = 'scratch operand']
  #allocation3 [shape = 's32[4]{0}', space=sflag, size = 0x10, scoped, tag = 'scratch operand']
  #allocation10 [shape = 's32[]', space=sflag, size = 0x4, offset = 0, fixed_abs, tag = 'sflag constant byte address 0x0 - dummy sync flag']
  #allocation11 [shape = 's32[]', space=sflag, size = 0x4, offset = 0, fixed_abs, tag = 'sflag constant byte address 0x0 - dummy sync flag']
  #allocation12 [shape = 'u32[]', space=smem, size = 0x4, offset = 0x44, fixed_abs, tag = 'smem constant byte address 0x44 - assertion arg 0']
  #allocation13 [shape = 'u32[]', space=smem, size = 0x4, offset = 0x48, fixed_abs, tag = 'smem constant byte address 0x48 - assertion arg 1']
  #allocation14 [shape = 's32[]', space=sflag, size = 0x4, offset = 0, fixed_abs, tag = 'sflag constant byte address 0x0 - dummy sync flag']
  #allocation15 [shape = 's32[]', space=sflag, size = 0x4, offset = 0, fixed_abs, tag = 'sflag constant byte address 0x0 - dummy sync flag']
  #allocation16 [shape = 's32[]', space=sflag, size = 0x4, offset = 0, fixed_abs, tag = 'sflag constant byte address 0x0 - dummy sync flag']
  #allocation17 [shape = 's32[]', space=sflag, size = 0x4, offset = 0, fixed_abs, tag = 'sflag constant byte address 0x0 - dummy sync flag']
  #allocation18 [shape = 's32[]', space=sflag, size = 0x4, offset = 0, fixed_abs, tag = 'sflag constant byte address 0x0 - dummy sync flag']
  #allocation19 [shape = 's32[]', space=sflag, size = 0x4, offset = 0, fixed_abs, tag = 'sflag constant byte address 0x0 - dummy sync flag']
  %s0 = inlined_call_operand.hbm [shape: bf16[288,128], index: 0, kind: input, shape index: {}]
  %s1 = inlined_call_operand.hbm [shape: bf16[1152,128], index: 1, kind: input, shape index: {}]
  %s2 = inlined_call_operand.hbm [shape: f32[2,128], index: 2, kind: input, shape index: {}]
  %s3 = inlined_call_operand.hbm [shape: bf16[256,128], index: 3, kind: output, shape index: {}]
  %s4 = sld [smem:[#allocation0]]
  $region42: #{tpu_custom_call.1} parent=0
    _
  %s6 = ssub.s32 1, %s4
  %s7 = scalar_select 0, %s6, %s4
  $region1: #{tpu_custom_call.1} parent=0
    #allocation4 [shape = 'u8[294912]{0}', space=vmem, size = 0x48000, scoped, tag = 'input window, operand 1, single buffered']
    #allocation5 [shape = 's32[1]{0}', space=sflag, size = 0x4, scoped, tag = 'scoped memory for tpu_custom_call.1']
    #allocation6 [shape = 's32[1]{0}', space=sflag, size = 0x4, scoped, tag = 'scoped memory for tpu_custom_call.1']
    #allocation7 [shape = 'u8[1024]{0}', space=vmem, size = 0x400, scoped, tag = 'input window, operand 2, single buffered']
    #allocation8 [shape = 's32[1]{0}', space=sflag, size = 0x4, scoped, tag = 'scoped memory for tpu_custom_call.1']
    #allocation9 [shape = 'u8[65536]{0}', space=vmem, size = 0x10000, scoped, tag = 'output window, operand 0, single buffered']
    %8 = vsyncpa [#allocation5], 0
    %9 = vsyncpa [#allocation8], 0
    %10 = vsyncpa [#allocation6], 0
    // Predicated region
    $region2: #{tpu_custom_call.1} parent=1 // pred_check
      _
    $region3: #{tpu_custom_call.1} parent=1 // pred_check_branch
      %12 = sbr.rel (0) target = $region5
    $region4: #{tpu_custom_call.1} parent=1 // pred_region
      %14 = vsyncadd [#allocation5], 0
      %s15 = sshll.u32 %s1, 4
      %s16 = int_to_ptr.hbm [resolvable:$true] %s15
      %s17 = sshll.u32 [#allocation4], 4
      %s18 = int_to_ptr.vmem [resolvable:$true] %s17
      %23 = dma.hbm_to_vmem [thread:$0]  %s16, 9216, %s18, [#allocation5], 64, 64, 4
    $region5: #{tpu_custom_call.1} parent=1 // pred_fallthru
      _
    // Predicated region
    $region6: #{tpu_custom_call.1} parent=1 // pred_check
      _
    $region7: #{tpu_custom_call.1} parent=1 // pred_check_branch
      %25 = sbr.rel (0) target = $region9
    $region8: #{tpu_custom_call.1} parent=1 // pred_region
      %27 = vsyncadd [#allocation8], 0
      %s29 = sshll.u32 %s2, 4
      %s30 = int_to_ptr.hbm [resolvable:$true] %s29
      %s31 = sshll.u32 [#allocation7], 4
      %s32 = int_to_ptr.vmem [resolvable:$true] %s31
      %34 = dma.hbm_to_vmem [thread:$0]  %s30, 32, %s32, [#allocation8]
    $region9: #{tpu_custom_call.1} parent=1 // pred_fallthru
      _
    // Predicated region
    $region10: #{tpu_custom_call.1} parent=1 // pred_check
      _
    $region11: #{tpu_custom_call.1} parent=1 // pred_check_branch
      %36 = sbr.rel (0) target = $region13
    $region12: #{tpu_custom_call.1} parent=1 // pred_region
      %38 = dma.done [#allocation5], 9216
    $region13: #{tpu_custom_call.1} parent=1 // pred_fallthru
      _
    // Predicated region
    $region14: #{tpu_custom_call.1} parent=1 // pred_check
      _
    $region15: #{tpu_custom_call.1} parent=1 // pred_check_branch
      %40 = sbr.rel (0) target = $region17
    $region16: #{tpu_custom_call.1} parent=1 // pred_region
      %42 = dma.done [#allocation8], 32
    $region17: #{tpu_custom_call.1} parent=1 // pred_fallthru
      _
    %s43 = smul.u32 0, 256
    %s44 = sshra.s32 %s43, 3
    %s45 = sand.u32 %s43, 7
    %s46 = smul.addr %s44, 4
    %s47 = scalar_lea.hbm %s0, %s46
    // Predicated region
    $region18: #{tpu_custom_call.1} parent=1 // pred_check
      _
    $region19: #{tpu_custom_call.1} parent=1 // pred_check_branch
      %49 = sbr.rel target = $region21
    $region20: #{tpu_custom_call.1} parent=1 // pred_region
      %50 = sst [smem:[#allocation12]] [#allocation11]
      %51 = sst [smem:[#allocation13]] [#allocation10]
    $region21: #{tpu_custom_call.1} parent=1 // pred_fallthru
      _
    %53 = shalt.err (0)
    %s55 = sshll.u32 %s47, 4
    %s56 = int_to_ptr.hbm [resolvable:$true] %s55
    %s57 = sshll.u32 [#allocation2], 4
    %s58 = int_to_ptr.vmem [resolvable:$true] %s57
    %60 = dma.hbm_to_vmem [thread:$0]  %s56, 768, %s58, [#allocation3]
    %s61 = sadd.s32 %s43, 96
    %s62 = sshra.s32 %s61, 3
    %s63 = sand.u32 %s61, 7
    %s64 = smul.addr %s62, 4
    %s65 = scalar_lea.hbm %s0, %s64
    %s66 = scalar_lea.vmem [#allocation2], 48
    %s67 = scalar_lea.sflag [#allocation3], 1
    // Predicated region
    $region22: #{tpu_custom_call.1} parent=1 // pred_check
      _
    $region23: #{tpu_custom_call.1} parent=1 // pred_check_branch
      %69 = sbr.rel target = $region25
    $region24: #{tpu_custom_call.1} parent=1 // pred_region
      %70 = sst [smem:[#allocation12]] [#allocation15]
      %71 = sst [smem:[#allocation13]] [#allocation14]
    $region25: #{tpu_custom_call.1} parent=1 // pred_fallthru
      _
    %73 = shalt.err (0)
    %s75 = sshll.u32 %s65, 4
    %s76 = int_to_ptr.hbm [resolvable:$true] %s75
    %s77 = sshll.u32 %s66, 4
    %s78 = int_to_ptr.vmem [resolvable:$true] %s77
    %80 = dma.hbm_to_vmem [thread:$0]  %s76, 512, %s78, %s67
    %s81 = sadd.s32 %s43, 160
    %s82 = sshra.s32 %s81, 3
    %s83 = sand.u32 %s81, 7
    %s84 = smul.addr %s82, 4
    %s85 = scalar_lea.hbm %s0, %s84
    %s86 = scalar_lea.vmem [#allocation2], 80
    %s87 = scalar_lea.sflag [#allocation3], 2
    // Predicated region
    $region26: #{tpu_custom_call.1} parent=1 // pred_check
      _
    $region27: #{tpu_custom_call.1} parent=1 // pred_check_branch
      %89 = sbr.rel target = $region29
    $region28: #{tpu_custom_call.1} parent=1 // pred_region
      %90 = sst [smem:[#allocation12]] [#allocation17]
      %91 = sst [smem:[#allocation13]] [#allocation16]
    $region29: #{tpu_custom_call.1} parent=1 // pred_fallthru
      _
    %93 = shalt.err (0)
    %s95 = sshll.u32 %s85, 4
    %s96 = int_to_ptr.hbm [resolvable:$true] %s95
    %s97 = sshll.u32 %s86, 4
    %s98 = int_to_ptr.vmem [resolvable:$true] %s97
    %100 = dma.hbm_to_vmem [thread:$0]  %s96, 512, %s98, %s87
    %s101 = sadd.s32 %s43, 224
    %s102 = sshra.s32 %s101, 3
    %s103 = sand.u32 %s101, 7
    %s104 = smul.addr %s102, 4
    %s105 = scalar_lea.hbm %s0, %s104
    %s106 = scalar_lea.vmem [#allocation2], 112
    %s107 = scalar_lea.sflag [#allocation3], 3
    // Predicated region
    $region30: #{tpu_custom_call.1} parent=1 // pred_check
      _
    $region31: #{tpu_custom_call.1} parent=1 // pred_check_branch
      %109 = sbr.rel target = $region33
    $region32: #{tpu_custom_call.1} parent=1 // pred_region
      %110 = sst [smem:[#allocation12]] [#allocation19]
      %111 = sst [smem:[#allocation13]] [#allocation18]
    $region33: #{tpu_custom_call.1} parent=1 // pred_fallthru
      _
    %113 = shalt.err (0)
    %s115 = sshll.u32 %s105, 4
    %s116 = int_to_ptr.hbm [resolvable:$true] %s115
    %s117 = sshll.u32 %s106, 4
    %s118 = int_to_ptr.vmem [resolvable:$true] %s117
    %120 = dma.hbm_to_vmem [thread:$0]  %s116, 512, %s118, %s107
    %s121 = smul.u32 4, 12
    %s122 = smul.u32 %s121, 1
    %s123 = sshll.u32 %s122, 4
    %124 = dma.done [#allocation3], %s123
    %v125 = vld [vmem:[#allocation2] sm:$0xf]
    %v126 = vld [vmem:[#allocation2 + $0x4] sm:$0xf]
    %v127 = vld [vmem:[#allocation2 + $0x8] sm:$0xf]
    %v128 = vld [vmem:[#allocation2 + $0xc] sm:$0xf]
    %v129 = vld [vmem:[#allocation2 + $0x10] sm:$0xf]
    %v130 = vld [vmem:[#allocation2 + $0x14] sm:$0xf]
    %v131 = vld [vmem:[#allocation2 + $0x18] sm:$0xf]
    %v132 = vld [vmem:[#allocation2 + $0x1c] sm:$0xf]
    %v133 = vld [vmem:[#allocation4] sm:$0xf]
    %v134 = vld [vmem:[#allocation4 + $0x4] sm:$0xf]
    %v135 = vld [vmem:[#allocation4 + $0x8] sm:$0xf]
    %v136 = vld [vmem:[#allocation4 + $0xc] sm:$0xf]
    %v137 = vld [vmem:[#allocation4 + $0x10] sm:$0xf]
    %v138 = vld [vmem:[#allocation4 + $0x14] sm:$0xf]
    %v139 = vld [vmem:[#allocation4 + $0x18] sm:$0xf]
    %v140 = vld [vmem:[#allocation4 + $0x1c] sm:$0xf]
    %v141 = vld [vmem:[#allocation4 + $0x20] sm:$0xf]
    %v142 = vld [vmem:[#allocation4 + $0x24] sm:$0xf]
    %v143 = vld [vmem:[#allocation4 + $0x28] sm:$0xf]
    %v144 = vld [vmem:[#allocation4 + $0x2c] sm:$0xf]
    %v145 = vld [vmem:[#allocation4 + $0x30] sm:$0xf]
    %v146 = vld [vmem:[#allocation4 + $0x34] sm:$0xf]
    %v147 = vld [vmem:[#allocation4 + $0x38] sm:$0xf]
    %v148 = vld [vmem:[#allocation4 + $0x3c] sm:$0xf]
    %v149 = vld [vmem:[#allocation2 + $0x20] sm:$0x1]
    %v150 = vld [vmem:[#allocation4 + $0x40] sm:$0xf]
    %v151 = vld [vmem:[#allocation4 + $0x44] sm:$0xf]
    %v152 = vld [vmem:[#allocation4 + $0x48] sm:$0xf]
    %v153 = vld [vmem:[#allocation4 + $0x4c] sm:$0xf]
    %v154 = vld [vmem:[#allocation4 + $0x50] sm:$0xf]
    %v155 = vld [vmem:[#allocation4 + $0x54] sm:$0xf]
    %v156 = vld [vmem:[#allocation4 + $0x58] sm:$0xf]
    %v157 = vld [vmem:[#allocation4 + $0x5c] sm:$0xf]
    %v158 = vld [vmem:[#allocation4 + $0x60] sm:$0xf]
    %v159 = vld [vmem:[#allocation4 + $0x64] sm:$0xf]
    %v160 = vld [vmem:[#allocation4 + $0x68] sm:$0xf]
    %v161 = vld [vmem:[#allocation4 + $0x6c] sm:$0xf]
    %v162 = vld [vmem:[#allocation4 + $0x70] sm:$0xf]
    %v163 = vld [vmem:[#allocation4 + $0x74] sm:$0xf]
    %v164 = vld [vmem:[#allocation4 + $0x78] sm:$0xf]
    %v165 = vld [vmem:[#allocation4 + $0x7c] sm:$0xf]
    %v175 = vunpack.c.l.b16 %v125
    %v176 = vunpack.c.l.b16 %v126
    %v177 = vunpack.c.l.b16 %v127
    %v178 = vunpack.c.l.b16 %v128
    %v179 = vunpack.c.l.b16 %v129
    %v180 = vunpack.c.l.b16 %v130
    %v181 = vunpack.c.l.b16 %v131
    %v182 = vunpack.c.l.b16 %v132
    %v183 = vunpack.c.l.b16 %v149
    %v184 = vpack.c.b16 %v176, %v175
    %v185 = vpack.c.b16 %v178, %v177
    %v186 = vpack.c.b16 %v180, %v179
    %v187 = vpack.c.b16 %v182, %v181
    %v188 = vpack.c.b16 %v183, %v183
    %vm189 = vsmask.f32 7424
    %v191 = vshrl.u32 %v184, 16
    %v193 = vshll.u32 %v184, 16
    %v195 = vrot.slane %v193, 1
    %v196 = vor.u32 %v191, %v195
    %v198 = vshll.u32 %v185, 16
    %v200 = vrot.slane %v198, 1
    %v201 = vsel %vm189, %v196, %v200
    %v202 = vshrl.u32 %v185, 16
    %v204 = vor.u32 %v202, %v200
    %v206 = vshll.u32 %v186, 16
    %v208 = vrot.slane %v206, 1
    %v209 = vsel %vm189, %v204, %v208
    %v210 = vshrl.u32 %v186, 16
    %v212 = vor.u32 %v210, %v208
    %v214 = vshll.u32 %v187, 16
    %v216 = vrot.slane %v214, 1
    %v217 = vsel %vm189, %v212, %v216
    %v218 = vshrl.u32 %v187, 16
    %v220 = vor.u32 %v218, %v216
    %v222 = vshll.u32 %v188, 16
    %v224 = vrot.slane %v222, 1
    %v225 = vsel %vm189, %v220, %v224
    %v246 = vunpack.c.l.b16 %v150
    %v247 = vunpack.c.l.b16 %v151
    %v248 = vunpack.c.l.b16 %v152
    %v249 = vunpack.c.l.b16 %v153
    %v250 = vunpack.c.l.b16 %v154
    %v251 = vunpack.c.l.b16 %v155
    %v252 = vunpack.c.l.b16 %v156
    %v253 = vunpack.c.l.b16 %v157
    %v254 = vunpack.c.l.b16 %v158
    %v255 = vunpack.c.l.b16 %v159
    %v256 = vunpack.c.l.b16 %v160
    %v257 = vunpack.c.l.b16 %v161
    %v258 = vunpack.c.l.b16 %v162
    %v259 = vunpack.c.l.b16 %v163
    %v260 = vunpack.c.l.b16 %v164
    %v261 = vunpack.c.l.b16 %v165
    %v262 = vpack.c.b16 %v247, %v246
    %v263 = vpack.c.b16 %v249, %v248
    %v264 = vpack.c.b16 %v251, %v250
    %v265 = vpack.c.b16 %v253, %v252
    %v266 = vpack.c.b16 %v255, %v254
    %v267 = vpack.c.b16 %v257, %v256
    %v268 = vpack.c.b16 %v259, %v258
    %v269 = vpack.c.b16 %v261, %v260
    %278 = vmatpush.bf16.msra.mxu0 %v269
    %279 = vmatpush.bf16.msra.mxu0 %v268
    %280 = vmatpush.bf16.msra.mxu0 %v267
    %281 = vmatpush.bf16.msra.mxu0 %v266
    %282 = vmatpush.bf16.msra.mxu0 %v265
    %283 = vmatpush.bf16.msra.mxu0 %v264
    %284 = vmatpush.bf16.msra.mxu0 %v263
    %285 = vmatpush.bf16.msra.mxu0 %v262
    %286 = vmatmul.bf16.gmra.mxu0 %v201
    %v287 = vpop.f32.mrf.mxu0
    %v288 = vadd.f32 0.0, %v287
    %v289 = vpop.f32.mrf.mxu0
    %v290 = vadd.f32 0.0, %v289
    %291 = vmatmul.bf16.gmra.mxu0 %v209
    %v292 = vpop.f32.mrf.mxu0
    %v293 = vadd.f32 0.0, %v292
    %v294 = vpop.f32.mrf.mxu0
    %v295 = vadd.f32 0.0, %v294
    %296 = vmatmul.bf16.gmra.mxu0 %v217
    %v297 = vpop.f32.mrf.mxu0
    %v298 = vadd.f32 0.0, %v297
    %v299 = vpop.f32.mrf.mxu0
    %v300 = vadd.f32 0.0, %v299
    %301 = vmatmul.bf16.gmra.mxu0 %v225
    %v302 = vpop.f32.mrf.mxu0
    %v303 = vadd.f32 0.0, %v302
    %v304 = vpop.f32.mrf.mxu0
    %v305 = vadd.f32 0.0, %v304
    %306 = vdwg.mxu0
    %v327 = vunpack.c.l.b16 %v133
    %v328 = vunpack.c.l.b16 %v134
    %v329 = vunpack.c.l.b16 %v135
    %v330 = vunpack.c.l.b16 %v136
    %v331 = vunpack.c.l.b16 %v137
    %v332 = vunpack.c.l.b16 %v138
    %v333 = vunpack.c.l.b16 %v139
    %v334 = vunpack.c.l.b16 %v140
    %v335 = vunpack.c.l.b16 %v141
    %v336 = vunpack.c.l.b16 %v142
    %v337 = vunpack.c.l.b16 %v143
    %v338 = vunpack.c.l.b16 %v144
    %v339 = vunpack.c.l.b16 %v145
    %v340 = vunpack.c.l.b16 %v146
    %v341 = vunpack.c.l.b16 %v147
    %v342 = vunpack.c.l.b16 %v148
    %v343 = vpack.c.b16 %v328, %v327
    %v344 = vpack.c.b16 %v330, %v329
    %v345 = vpack.c.b16 %v332, %v331
    %v346 = vpack.c.b16 %v334, %v333
    %v347 = vpack.c.b16 %v336, %v335
    %v348 = vpack.c.b16 %v338, %v337
    %v349 = vpack.c.b16 %v340, %v339
    %v350 = vpack.c.b16 %v342, %v341
    %359 = vmatpush.bf16.msra.mxu0 %v350
    %360 = vmatpush.bf16.msra.mxu0 %v349
    %361 = vmatpush.bf16.msra.mxu0 %v348
    %362 = vmatpush.bf16.msra.mxu0 %v347
    %363 = vmatpush.bf16.msra.mxu0 %v346
    %364 = vmatpush.bf16.msra.mxu0 %v345
    %365 = vmatpush.bf16.msra.mxu0 %v344
    %366 = vmatpush.bf16.msra.mxu0 %v343
    %367 = vmatmul.bf16.gmra.mxu0 %v184
    %v368 = vpop.f32.mrf.mxu0
    %v369 = vadd.f32 %v288, %v368
    %v370 = vpop.f32.mrf.mxu0
    %v371 = vadd.f32 %v290, %v370
    %372 = vmatmul.bf16.gmra.mxu0 %v185
    %v373 = vpop.f32.mrf.mxu0
    %v374 = vadd.f32 %v293, %v373
    %v375 = vpop.f32.mrf.mxu0
    %v376 = vadd.f32 %v295, %v375
    %377 = vmatmul.bf16.gmra.mxu0 %v186
    %v378 = vpop.f32.mrf.mxu0
    %v379 = vadd.f32 %v298, %v378
    %v380 = vpop.f32.mrf.mxu0
    %v381 = vadd.f32 %v300, %v380
    %382 = vmatmul.bf16.gmra.mxu0 %v187
    %v383 = vpop.f32.mrf.mxu0
    %v384 = vadd.f32 %v303, %v383
    %v385 = vpop.f32.mrf.mxu0
    %v386 = vadd.f32 %v305, %v385
    %387 = vdwg.mxu0
    %v388 = vld [vmem:[#allocation2] sm:$0xe]
    %v389 = vld [vmem:[#allocation4 + $0x80] sm:$0xf]
    %v390 = vld [vmem:[#allocation4 + $0x84] sm:$0xf]
    %v391 = vld [vmem:[#allocation4 + $0x88] sm:$0xf]
    %v392 = vld [vmem:[#allocation4 + $0x8c] sm:$0xf]
    %v393 = vld [vmem:[#allocation4 + $0x90] sm:$0xf]
    %v394 = vld [vmem:[#allocation4 + $0x94] sm:$0xf]
    %v395 = vld [vmem:[#allocation4 + $0x98] sm:$0xf]
    %v396 = vld [vmem:[#allocation4 + $0x9c] sm:$0xf]
    %v397 = vld [vmem:[#allocation4 + $0xa0] sm:$0xf]
    %v398 = vld [vmem:[#allocation4 + $0xa4] sm:$0xf]
    %v399 = vld [vmem:[#allocation4 + $0xa8] sm:$0xf]
    %v400 = vld [vmem:[#allocation4 + $0xac] sm:$0xf]
    %v401 = vld [vmem:[#allocation4 + $0xb0] sm:$0xf]
    %v402 = vld [vmem:[#allocation4 + $0xb4] sm:$0xf]
    %v403 = vld [vmem:[#allocation4 + $0xb8] sm:$0xf]
    %v404 = vld [vmem:[#allocation4 + $0xbc] sm:$0xf]
    %v406 = vunpack.c.l.b16 %v388
    %v407 = vpack.c.b16 %v176, %v406
    %vm408 = vcmask 1046528
    %v409 = vrot.slane %v407, 1
    %v410 = vrot.slane %v185, 1
    %v411 = vsel %vm408, %v409, %v410
    %v412 = vrot.slane %v186, 1
    %v413 = vsel %vm408, %v410, %v412
    %v414 = vrot.slane %v187, 1
    %v415 = vsel %vm408, %v412, %v414
    %v416 = vrot.slane %v188, 1
    %v417 = vsel %vm408, %v414, %v416
    %v438 = vunpack.c.l.b16 %v389
    %v439 = vunpack.c.l.b16 %v390
    %v440 = vunpack.c.l.b16 %v391
    %v441 = vunpack.c.l.b16 %v392
    %v442 = vunpack.c.l.b16 %v393
    %v443 = vunpack.c.l.b16 %v394
    %v444 = vunpack.c.l.b16 %v395
    %v445 = vunpack.c.l.b16 %v396
    %v446 = vunpack.c.l.b16 %v397
    %v447 = vunpack.c.l.b16 %v398
    %v448 = vunpack.c.l.b16 %v399
    %v449 = vunpack.c.l.b16 %v400
    %v450 = vunpack.c.l.b16 %v401
    %v451 = vunpack.c.l.b16 %v402
    %v452 = vunpack.c.l.b16 %v403
    %v453 = vunpack.c.l.b16 %v404
    %v454 = vpack.c.b16 %v439, %v438
    %v455 = vpack.c.b16 %v441, %v440
    %v456 = vpack.c.b16 %v443, %v442
    %v457 = vpack.c.b16 %v445, %v444
    %v458 = vpack.c.b16 %v447, %v446
    %v459 = vpack.c.b16 %v449, %v448
    %v460 = vpack.c.b16 %v451, %v450
    %v461 = vpack.c.b16 %v453, %v452
    %470 = vmatpush.bf16.msra.mxu0 %v461
    %471 = vmatpush.bf16.msra.mxu0 %v460
    %472 = vmatpush.bf16.msra.mxu0 %v459
    %473 = vmatpush.bf16.msra.mxu0 %v458
    %474 = vmatpush.bf16.msra.mxu0 %v457
    %475 = vmatpush.bf16.msra.mxu0 %v456
    %476 = vmatpush.bf16.msra.mxu0 %v455
    %477 = vmatpush.bf16.msra.mxu0 %v454
    %478 = vmatmul.bf16.gmra.mxu0 %v411
    %v479 = vpop.f32.mrf.mxu0
    %v480 = vadd.f32 0.0, %v479
    %v481 = vpop.f32.mrf.mxu0
    %v482 = vadd.f32 0.0, %v481
    %483 = vmatmul.bf16.gmra.mxu0 %v413
    %v484 = vpop.f32.mrf.mxu0
    %v485 = vadd.f32 0.0, %v484
    %v486 = vpop.f32.mrf.mxu0
    %v487 = vadd.f32 0.0, %v486
    %488 = vmatmul.bf16.gmra.mxu0 %v415
    %v489 = vpop.f32.mrf.mxu0
    %v490 = vadd.f32 0.0, %v489
    %v491 = vpop.f32.mrf.mxu0
    %v492 = vadd.f32 0.0, %v491
    %493 = vmatmul.bf16.gmra.mxu0 %v417
    %v494 = vpop.f32.mrf.mxu0
    %v495 = vadd.f32 0.0, %v494
    %v496 = vpop.f32.mrf.mxu0
    %v497 = vadd.f32 0.0, %v496
    %498 = vdwg.mxu0
    %v499 = vadd.f32 %v369, %v480
    %v500 = vadd.f32 %v371, %v482
    %v501 = vadd.f32 %v374, %v485
    %v502 = vadd.f32 %v376, %v487
    %v503 = vadd.f32 %v379, %v490
    %v504 = vadd.f32 %v381, %v492
    %v505 = vadd.f32 %v384, %v495
    %v506 = vadd.f32 %v386, %v497
    %v507 = vld [vmem:[#allocation2 + $0x4] sm:$0x8]
    %v508 = vld [vmem:[#allocation2 + $0x8] sm:$0xf]
    %v509 = vld [vmem:[#allocation2 + $0xc] sm:$0xf]
    %v510 = vld [vmem:[#allocation2 + $0x10] sm:$0xf]
    %v511 = vld [vmem:[#allocation2 + $0x14] sm:$0xf]
    %v512 = vld [vmem:[#allocation2 + $0x18] sm:$0xf]
    %v513 = vld [vmem:[#allocation2 + $0x1c] sm:$0xf]
    %v514 = vld [vmem:[#allocation2 + $0x20] sm:$0xf]
    %v515 = vld [vmem:[#allocation2 + $0x24] sm:$0x7]
    %v516 = vld [vmem:[#allocation4 + $0xc0] sm:$0xf]
    %v517 = vld [vmem:[#allocation4 + $0xc4] sm:$0xf]
    %v518 = vld [vmem:[#allocation4 + $0xc8] sm:$0xf]
    %v519 = vld [vmem:[#allocation4 + $0xcc] sm:$0xf]
    %v520 = vld [vmem:[#allocation4 + $0xd0] sm:$0xf]
    %v521 = vld [vmem:[#allocation4 + $0xd4] sm:$0xf]
    %v522 = vld [vmem:[#allocation4 + $0xd8] sm:$0xf]
    %v523 = vld [vmem:[#allocation4 + $0xdc] sm:$0xf]
    %v524 = vld [vmem:[#allocation4 + $0xe0] sm:$0xf]
    %v525 = vld [vmem:[#allocation4 + $0xe4] sm:$0xf]
    %v526 = vld [vmem:[#allocation4 + $0xe8] sm:$0xf]
    %v527 = vld [vmem:[#allocation4 + $0xec] sm:$0xf]
    %v528 = vld [vmem:[#allocation4 + $0xf0] sm:$0xf]
    %v529 = vld [vmem:[#allocation4 + $0xf4] sm:$0xf]
    %v530 = vld [vmem:[#allocation4 + $0xf8] sm:$0xf]
    %v531 = vld [vmem:[#allocation4 + $0xfc] sm:$0xf]
    %v541 = vunpack.c.l.b16 %v507
    %v542 = vunpack.c.l.b16 %v508
    %v543 = vunpack.c.l.b16 %v509
    %v544 = vunpack.c.l.b16 %v510
    %v545 = vunpack.c.l.b16 %v511
    %v546 = vunpack.c.l.b16 %v512
    %v547 = vunpack.c.l.b16 %v513
    %v548 = vunpack.c.l.b16 %v514
    %v549 = vunpack.c.l.b16 %v515
    %v550 = vpack.c.b16 %v542, %v541
    %v551 = vpack.c.b16 %v544, %v543
    %v552 = vpack.c.b16 %v546, %v545
    %v553 = vpack.c.b16 %v548, %v547
    %v554 = vpack.c.b16 %v549, %v549
    %vm555 = vcmask 1044480
    %v556 = vrot.slane %v550, 3
    %v557 = vrot.slane %v551, 3
    %v558 = vsel %vm555, %v556, %v557
    %v559 = vrot.slane %v552, 3
    %v560 = vsel %vm555, %v557, %v559
    %v561 = vrot.slane %v553, 3
    %v562 = vsel %vm555, %v559, %v561
    %v563 = vrot.slane %v554, 3
    %v564 = vsel %vm555, %v561, %v563
    %v585 = vunpack.c.l.b16 %v516
    %v586 = vunpack.c.l.b16 %v517
    %v587 = vunpack.c.l.b16 %v518
    %v588 = vunpack.c.l.b16 %v519
    %v589 = vunpack.c.l.b16 %v520
    %v590 = vunpack.c.l.b16 %v521
    %v591 = vunpack.c.l.b16 %v522
    %v592 = vunpack.c.l.b16 %v523
    %v593 = vunpack.c.l.b16 %v524
    %v594 = vunpack.c.l.b16 %v525
    %v595 = vunpack.c.l.b16 %v526
    %v596 = vunpack.c.l.b16 %v527
    %v597 = vunpack.c.l.b16 %v528
    %v598 = vunpack.c.l.b16 %v529
    %v599 = vunpack.c.l.b16 %v530
    %v600 = vunpack.c.l.b16 %v531
    %v601 = vpack.c.b16 %v586, %v585
    %v602 = vpack.c.b16 %v588, %v587
    %v603 = vpack.c.b16 %v590, %v589
    %v604 = vpack.c.b16 %v592, %v591
    %v605 = vpack.c.b16 %v594, %v593
    %v606 = vpack.c.b16 %v596, %v595
    %v607 = vpack.c.b16 %v598, %v597
    %v608 = vpack.c.b16 %v600, %v599
    %617 = vmatpush.bf16.msra.mxu0 %v608
    %618 = vmatpush.bf16.msra.mxu0 %v607
    %619 = vmatpush.bf16.msra.mxu0 %v606
    %620 = vmatpush.bf16.msra.mxu0 %v605
    %621 = vmatpush.bf16.msra.mxu0 %v604
    %622 = vmatpush.bf16.msra.mxu0 %v603
    %623 = vmatpush.bf16.msra.mxu0 %v602
    %624 = vmatpush.bf16.msra.mxu0 %v601
    %625 = vmatmul.bf16.gmra.mxu0 %v558
    %v626 = vpop.f32.mrf.mxu0
    %v627 = vadd.f32 0.0, %v626
    %v628 = vpop.f32.mrf.mxu0
    %v629 = vadd.f32 0.0, %v628
    %630 = vmatmul.bf16.gmra.mxu0 %v560
    %v631 = vpop.f32.mrf.mxu0
    %v632 = vadd.f32 0.0, %v631
    %v633 = vpop.f32.mrf.mxu0
    %v634 = vadd.f32 0.0, %v633
    %635 = vmatmul.bf16.gmra.mxu0 %v562
    %v636 = vpop.f32.mrf.mxu0
    %v637 = vadd.f32 0.0, %v636
    %v638 = vpop.f32.mrf.mxu0
    %v639 = vadd.f32 0.0, %v638
    %640 = vmatmul.bf16.gmra.mxu0 %v564
    %v641 = vpop.f32.mrf.mxu0
    %v642 = vadd.f32 0.0, %v641
    %v643 = vpop.f32.mrf.mxu0
    %v644 = vadd.f32 0.0, %v643
    %645 = vdwg.mxu0
    %v646 = vadd.f32 %v499, %v627
    %v647 = vadd.f32 %v500, %v629
    %v648 = vadd.f32 %v501, %v632
    %v649 = vadd.f32 %v502, %v634
    %v650 = vadd.f32 %v503, %v637
    %v651 = vadd.f32 %v504, %v639
    %v652 = vadd.f32 %v505, %v642
    %v653 = vadd.f32 %v506, %v644
    %v654 = vld [vmem:[#allocation2 + $0x24] sm:$0xf]
    %v655 = vld [vmem:[#allocation4 + $0x100] sm:$0xf]
    %v656 = vld [vmem:[#allocation4 + $0x104] sm:$0xf]
    %v657 = vld [vmem:[#allocation4 + $0x108] sm:$0xf]
    %v658 = vld [vmem:[#allocation4 + $0x10c] sm:$0xf]
    %v659 = vld [vmem:[#allocation4 + $0x110] sm:$0xf]
    %v660 = vld [vmem:[#allocation4 + $0x114] sm:$0xf]
    %v661 = vld [vmem:[#allocation4 + $0x118] sm:$0xf]
    %v662 = vld [vmem:[#allocation4 + $0x11c] sm:$0xf]
    %v663 = vld [vmem:[#allocation4 + $0x120] sm:$0xf]
    %v664 = vld [vmem:[#allocation4 + $0x124] sm:$0xf]
    %v665 = vld [vmem:[#allocation4 + $0x128] sm:$0xf]
    %v666 = vld [vmem:[#allocation4 + $0x12c] sm:$0xf]
    %v667 = vld [vmem:[#allocation4 + $0x130] sm:$0xf]
    %v668 = vld [vmem:[#allocation4 + $0x134] sm:$0xf]
    %v669 = vld [vmem:[#allocation4 + $0x138] sm:$0xf]
    %v670 = vld [vmem:[#allocation4 + $0x13c] sm:$0xf]
    %v672 = vunpack.c.l.b16 %v654
    %v673 = vpack.c.b16 %v672, %v672
    %vm674 = vsmask.f32 4352
    %v676 = vshrl.u32 %v550, 16
    %v678 = vrot.slane %v676, 3
    %v679 = vshll.u32 %v550, 16
    %v681 = vrot.slane %v679, 4
    %v682 = vor.u32 %v678, %v681
    %v684 = vshrl.u32 %v551, 16
    %v686 = vrot.slane %v684, 3
    %v687 = vshll.u32 %v551, 16
    %v689 = vrot.slane %v687, 4
    %v690 = vor.u32 %v686, %v689
    %v691 = vsel %vm674, %v682, %v690
    %v693 = vshrl.u32 %v552, 16
    %v695 = vrot.slane %v693, 3
    %v696 = vshll.u32 %v552, 16
    %v698 = vrot.slane %v696, 4
    %v699 = vor.u32 %v695, %v698
    %v700 = vsel %vm674, %v690, %v699
    %v702 = vshrl.u32 %v553, 16
    %v704 = vrot.slane %v702, 3
    %v705 = vshll.u32 %v553, 16
    %v707 = vrot.slane %v705, 4
    %v708 = vor.u32 %v704, %v707
    %v709 = vsel %vm674, %v699, %v708
    %v711 = vshrl.u32 %v673, 16
    %v713 = vrot.slane %v711, 3
    %v714 = vshll.u32 %v673, 16
    %v716 = vrot.slane %v714, 4
    %v717 = vor.u32 %v713, %v716
    %v718 = vsel %vm674, %v708, %v717
    %v739 = vunpack.c.l.b16 %v655
    %v740 = vunpack.c.l.b16 %v656
    %v741 = vunpack.c.l.b16 %v657
    %v742 = vunpack.c.l.b16 %v658
    %v743 = vunpack.c.l.b16 %v659
    %v744 = vunpack.c.l.b16 %v660
    %v745 = vunpack.c.l.b16 %v661
    %v746 = vunpack.c.l.b16 %v662
    %v747 = vunpack.c.l.b16 %v663
    %v748 = vunpack.c.l.b16 %v664
    %v749 = vunpack.c.l.b16 %v665
    %v750 = vunpack.c.l.b16 %v666
    %v751 = vunpack.c.l.b16 %v667
    %v752 = vunpack.c.l.b16 %v668
    %v753 = vunpack.c.l.b16 %v669
    %v754 = vunpack.c.l.b16 %v670
    %v755 = vpack.c.b16 %v740, %v739
    %v756 = vpack.c.b16 %v742, %v741
    %v757 = vpack.c.b16 %v744, %v743
    %v758 = vpack.c.b16 %v746, %v745
    %v759 = vpack.c.b16 %v748, %v747
    %v760 = vpack.c.b16 %v750, %v749
    %v761 = vpack.c.b16 %v752, %v751
    %v762 = vpack.c.b16 %v754, %v753
    %771 = vmatpush.bf16.msra.mxu0 %v762
    %772 = vmatpush.bf16.msra.mxu0 %v761
    %773 = vmatpush.bf16.msra.mxu0 %v760
    %774 = vmatpush.bf16.msra.mxu0 %v759
    %775 = vmatpush.bf16.msra.mxu0 %v758
    %776 = vmatpush.bf16.msra.mxu0 %v757
    %777 = vmatpush.bf16.msra.mxu0 %v756
    %778 = vmatpush.bf16.msra.mxu0 %v755
    %779 = vmatmul.bf16.gmra.mxu0 %v691
    %v780 = vpop.f32.mrf.mxu0
    %v781 = vadd.f32 0.0, %v780
    %v782 = vpop.f32.mrf.mxu0
    %v783 = vadd.f32 0.0, %v782
    %784 = vmatmul.bf16.gmra.mxu0 %v700
    %v785 = vpop.f32.mrf.mxu0
    %v786 = vadd.f32 0.0, %v785
    %v787 = vpop.f32.mrf.mxu0
    %v788 = vadd.f32 0.0, %v787
    %789 = vmatmul.bf16.gmra.mxu0 %v709
    %v790 = vpop.f32.mrf.mxu0
    %v791 = vadd.f32 0.0, %v790
    %v792 = vpop.f32.mrf.mxu0
    %v793 = vadd.f32 0.0, %v792
    %794 = vmatmul.bf16.gmra.mxu0 %v718
    %v795 = vpop.f32.mrf.mxu0
    %v796 = vadd.f32 0.0, %v795
    %v797 = vpop.f32.mrf.mxu0
    %v798 = vadd.f32 0.0, %v797
    %799 = vdwg.mxu0
    %v800 = vadd.f32 %v646, %v781
    %v801 = vadd.f32 %v647, %v783
    %v802 = vadd.f32 %v648, %v786
    %v803 = vadd.f32 %v649, %v788
    %v804 = vadd.f32 %v650, %v791
    %v805 = vadd.f32 %v651, %v793
    %v806 = vadd.f32 %v652, %v796
    %v807 = vadd.f32 %v653, %v798
    %v808 = vld [vmem:[#allocation4 + $0x140] sm:$0xf]
    %v809 = vld [vmem:[#allocation4 + $0x144] sm:$0xf]
    %v810 = vld [vmem:[#allocation4 + $0x148] sm:$0xf]
    %v811 = vld [vmem:[#allocation4 + $0x14c] sm:$0xf]
    %v812 = vld [vmem:[#allocation4 + $0x150] sm:$0xf]
    %v813 = vld [vmem:[#allocation4 + $0x154] sm:$0xf]
    %v814 = vld [vmem:[#allocation4 + $0x158] sm:$0xf]
    %v815 = vld [vmem:[#allocation4 + $0x15c] sm:$0xf]
    %v816 = vld [vmem:[#allocation4 + $0x160] sm:$0xf]
    %v817 = vld [vmem:[#allocation4 + $0x164] sm:$0xf]
    %v818 = vld [vmem:[#allocation4 + $0x168] sm:$0xf]
    %v819 = vld [vmem:[#allocation4 + $0x16c] sm:$0xf]
    %v820 = vld [vmem:[#allocation4 + $0x170] sm:$0xf]
    %v821 = vld [vmem:[#allocation4 + $0x174] sm:$0xf]
    %v822 = vld [vmem:[#allocation4 + $0x178] sm:$0xf]
    %v823 = vld [vmem:[#allocation4 + $0x17c] sm:$0xf]
    %v824 = vpack.c.b16 %v543, %v542
    %v825 = vpack.c.b16 %v545, %v544
    %v826 = vpack.c.b16 %v547, %v546
    %v827 = vpack.c.b16 %v672, %v548
    %v848 = vunpack.c.l.b16 %v808
    %v849 = vunpack.c.l.b16 %v809
    %v850 = vunpack.c.l.b16 %v810
    %v851 = vunpack.c.l.b16 %v811
    %v852 = vunpack.c.l.b16 %v812
    %v853 = vunpack.c.l.b16 %v813
    %v854 = vunpack.c.l.b16 %v814
    %v855 = vunpack.c.l.b16 %v815
    %v856 = vunpack.c.l.b16 %v816
    %v857 = vunpack.c.l.b16 %v817
    %v858 = vunpack.c.l.b16 %v818
    %v859 = vunpack.c.l.b16 %v819
    %v860 = vunpack.c.l.b16 %v820
    %v861 = vunpack.c.l.b16 %v821
    %v862 = vunpack.c.l.b16 %v822
    %v863 = vunpack.c.l.b16 %v823
    %v864 = vpack.c.b16 %v849, %v848
    %v865 = vpack.c.b16 %v851, %v850
    %v866 = vpack.c.b16 %v853, %v852
    %v867 = vpack.c.b16 %v855, %v854
    %v868 = vpack.c.b16 %v857, %v856
    %v869 = vpack.c.b16 %v859, %v858
    %v870 = vpack.c.b16 %v861, %v860
    %v871 = vpack.c.b16 %v863, %v862
    %880 = vmatpush.bf16.msra.mxu0 %v871
    %881 = vmatpush.bf16.msra.mxu0 %v870
    %882 = vmatpush.bf16.msra.mxu0 %v869
    %883 = vmatpush.bf16.msra.mxu0 %v868
    %884 = vmatpush.bf16.msra.mxu0 %v867
    %885 = vmatpush.bf16.msra.mxu0 %v866
    %886 = vmatpush.bf16.msra.mxu0 %v865
    %887 = vmatpush.bf16.msra.mxu0 %v864
    %888 = vmatmul.bf16.gmra.mxu0 %v824
    %v889 = vpop.f32.mrf.mxu0
    %v890 = vadd.f32 0.0, %v889
    %v891 = vpop.f32.mrf.mxu0
    %v892 = vadd.f32 0.0, %v891
    %893 = vmatmul.bf16.gmra.mxu0 %v825
    %v894 = vpop.f32.mrf.mxu0
    %v895 = vadd.f32 0.0, %v894
    %v896 = vpop.f32.mrf.mxu0
    %v897 = vadd.f32 0.0, %v896
    %898 = vmatmul.bf16.gmra.mxu0 %v826
    %v899 = vpop.f32.mrf.mxu0
    %v900 = vadd.f32 0.0, %v899
    %v901 = vpop.f32.mrf.mxu0
    %v902 = vadd.f32 0.0, %v901
    %903 = vmatmul.bf16.gmra.mxu0 %v827
    %v904 = vpop.f32.mrf.mxu0
    %v905 = vadd.f32 0.0, %v904
    %v906 = vpop.f32.mrf.mxu0
    %v907 = vadd.f32 0.0, %v906
    %908 = vdwg.mxu0
    %v909 = vadd.f32 %v800, %v890
    %v910 = vadd.f32 %v801, %v892
    %v911 = vadd.f32 %v802, %v895
    %v912 = vadd.f32 %v803, %v897
    %v913 = vadd.f32 %v804, %v900
    %v914 = vadd.f32 %v805, %v902
    %v915 = vadd.f32 %v806, %v905
    %v916 = vadd.f32 %v807, %v907
    %v917 = vld [vmem:[#allocation2 + $0xc] sm:$0xc]
    %v918 = vld [vmem:[#allocation2 + $0x10] sm:$0xf]
    %v919 = vld [vmem:[#allocation2 + $0x14] sm:$0xf]
    %v920 = vld [vmem:[#allocation2 + $0x18] sm:$0xf]
    %v921 = vld [vmem:[#allocation2 + $0x1c] sm:$0xf]
    %v922 = vld [vmem:[#allocation2 + $0x20] sm:$0xf]
    %v923 = vld [vmem:[#allocation2 + $0x24] sm:$0xf]
    %v924 = vld [vmem:[#allocation2 + $0x28] sm:$0xf]
    %v925 = vld [vmem:[#allocation2 + $0x2c] sm:$0x3]
    %v926 = vld [vmem:[#allocation4 + $0x180] sm:$0xf]
    %v927 = vld [vmem:[#allocation4 + $0x184] sm:$0xf]
    %v928 = vld [vmem:[#allocation4 + $0x188] sm:$0xf]
    %v929 = vld [vmem:[#allocation4 + $0x18c] sm:$0xf]
    %v930 = vld [vmem:[#allocation4 + $0x190] sm:$0xf]
    %v931 = vld [vmem:[#allocation4 + $0x194] sm:$0xf]
    %v932 = vld [vmem:[#allocation4 + $0x198] sm:$0xf]
    %v933 = vld [vmem:[#allocation4 + $0x19c] sm:$0xf]
    %v934 = vld [vmem:[#allocation4 + $0x1a0] sm:$0xf]
    %v935 = vld [vmem:[#allocation4 + $0x1a4] sm:$0xf]
    %v936 = vld [vmem:[#allocation4 + $0x1a8] sm:$0xf]
    %v937 = vld [vmem:[#allocation4 + $0x1ac] sm:$0xf]
    %v938 = vld [vmem:[#allocation4 + $0x1b0] sm:$0xf]
    %v939 = vld [vmem:[#allocation4 + $0x1b4] sm:$0xf]
    %v940 = vld [vmem:[#allocation4 + $0x1b8] sm:$0xf]
    %v941 = vld [vmem:[#allocation4 + $0x1bc] sm:$0xf]
    %v951 = vunpack.c.l.b16 %v917
    %v952 = vunpack.c.l.b16 %v918
    %v953 = vunpack.c.l.b16 %v919
    %v954 = vunpack.c.l.b16 %v920
    %v955 = vunpack.c.l.b16 %v921
    %v956 = vunpack.c.l.b16 %v922
    %v957 = vunpack.c.l.b16 %v923
    %v958 = vunpack.c.l.b16 %v924
    %v959 = vunpack.c.l.b16 %v925
    %v960 = vpack.c.b16 %v952, %v951
    %v961 = vpack.c.b16 %v954, %v953
    %v962 = vpack.c.b16 %v956, %v955
    %v963 = vpack.c.b16 %v958, %v957
    %v964 = vpack.c.b16 %v959, %v959
    %vm965 = vcmask 1045504
    %v966 = vrot.slane %v960, 2
    %v967 = vrot.slane %v961, 2
    %v968 = vsel %vm965, %v966, %v967
    %v969 = vrot.slane %v962, 2
    %v970 = vsel %vm965, %v967, %v969
    %v971 = vrot.slane %v963, 2
    %v972 = vsel %vm965, %v969, %v971
    %v973 = vrot.slane %v964, 2
    %v974 = vsel %vm965, %v971, %v973
    %v995 = vunpack.c.l.b16 %v926
    %v996 = vunpack.c.l.b16 %v927
    %v997 = vunpack.c.l.b16 %v928
    %v998 = vunpack.c.l.b16 %v929
    %v999 = vunpack.c.l.b16 %v930
    %v1000 = vunpack.c.l.b16 %v931
    %v1001 = vunpack.c.l.b16 %v932
    %v1002 = vunpack.c.l.b16 %v933
    %v1003 = vunpack.c.l.b16 %v934
    %v1004 = vunpack.c.l.b16 %v935
    %v1005 = vunpack.c.l.b16 %v936
    %v1006 = vunpack.c.l.b16 %v937
    %v1007 = vunpack.c.l.b16 %v938
    %v1008 = vunpack.c.l.b16 %v939
    %v1009 = vunpack.c.l.b16 %v940
    %v1010 = vunpack.c.l.b16 %v941
    %v1011 = vpack.c.b16 %v996, %v995
    %v1012 = vpack.c.b16 %v998, %v997
    %v1013 = vpack.c.b16 %v1000, %v999
    %v1014 = vpack.c.b16 %v1002, %v1001
    %v1015 = vpack.c.b16 %v1004, %v1003
    %v1016 = vpack.c.b16 %v1006, %v1005
    %v1017 = vpack.c.b16 %v1008, %v1007
    %v1018 = vpack.c.b16 %v1010, %v1009
    %1027 = vmatpush.bf16.msra.mxu0 %v1018
    %1028 = vmatpush.bf16.msra.mxu0 %v1017
    %1029 = vmatpush.bf16.msra.mxu0 %v1016
    %1030 = vmatpush.bf16.msra.mxu0 %v1015
    %1031 = vmatpush.bf16.msra.mxu0 %v1014
    %1032 = vmatpush.bf16.msra.mxu0 %v1013
    %1033 = vmatpush.bf16.msra.mxu0 %v1012
    %1034 = vmatpush.bf16.msra.mxu0 %v1011
    %1035 = vmatmul.bf16.gmra.mxu0 %v968
    %v1036 = vpop.f32.mrf.mxu0
    %v1037 = vadd.f32 0.0, %v1036
    %v1038 = vpop.f32.mrf.mxu0
    %v1039 = vadd.f32 0.0, %v1038
    %1040 = vmatmul.bf16.gmra.mxu0 %v970
    %v1041 = vpop.f32.mrf.mxu0
    %v1042 = vadd.f32 0.0, %v1041
    %v1043 = vpop.f32.mrf.mxu0
    %v1044 = vadd.f32 0.0, %v1043
    %1045 = vmatmul.bf16.gmra.mxu0 %v972
    %v1046 = vpop.f32.mrf.mxu0
    %v1047 = vadd.f32 0.0, %v1046
    %v1048 = vpop.f32.mrf.mxu0
    %v1049 = vadd.f32 0.0, %v1048
    %1050 = vmatmul.bf16.gmra.mxu0 %v974
    %v1051 = vpop.f32.mrf.mxu0
    %v1052 = vadd.f32 0.0, %v1051
    %v1053 = vpop.f32.mrf.mxu0
    %v1054 = vadd.f32 0.0, %v1053
    %1055 = vdwg.mxu0
    %v1056 = vadd.f32 %v909, %v1037
    %v1057 = vadd.f32 %v910, %v1039
    %v1058 = vadd.f32 %v911, %v1042
    %v1059 = vadd.f32 %v912, %v1044
    %v1060 = vadd.f32 %v913, %v1047
    %v1061 = vadd.f32 %v914, %v1049
    %v1062 = vadd.f32 %v915, %v1052
    %v1063 = vadd.f32 %v916, %v1054
    %v1064 = vld [vmem:[#allocation2 + $0x2c] sm:$0x7]
    %v1065 = vld [vmem:[#allocation4 + $0x1c0] sm:$0xf]
    %v1066 = vld [vmem:[#allocation4 + $0x1c4] sm:$0xf]
    %v1067 = vld [vmem:[#allocation4 + $0x1c8] sm:$0xf]
    %v1068 = vld [vmem:[#allocation4 + $0x1cc] sm:$0xf]
    %v1069 = vld [vmem:[#allocation4 + $0x1d0] sm:$0xf]
    %v1070 = vld [vmem:[#allocation4 + $0x1d4] sm:$0xf]
    %v1071 = vld [vmem:[#allocation4 + $0x1d8] sm:$0xf]
    %v1072 = vld [vmem:[#allocation4 + $0x1dc] sm:$0xf]
    %v1073 = vld [vmem:[#allocation4 + $0x1e0] sm:$0xf]
    %v1074 = vld [vmem:[#allocation4 + $0x1e4] sm:$0xf]
    %v1075 = vld [vmem:[#allocation4 + $0x1e8] sm:$0xf]
    %v1076 = vld [vmem:[#allocation4 + $0x1ec] sm:$0xf]
    %v1077 = vld [vmem:[#allocation4 + $0x1f0] sm:$0xf]
    %v1078 = vld [vmem:[#allocation4 + $0x1f4] sm:$0xf]
    %v1079 = vld [vmem:[#allocation4 + $0x1f8] sm:$0xf]
    %v1080 = vld [vmem:[#allocation4 + $0x1fc] sm:$0xf]
    %v1082 = vunpack.c.l.b16 %v1064
    %v1083 = vpack.c.b16 %v1082, %v1082
    %vm1084 = vsmask.f32 5376
    %v1086 = vshrl.u32 %v960, 16
    %v1088 = vrot.slane %v1086, 2
    %v1089 = vshll.u32 %v960, 16
    %v1091 = vrot.slane %v1089, 3
    %v1092 = vor.u32 %v1088, %v1091
    %v1094 = vshrl.u32 %v961, 16
    %v1096 = vrot.slane %v1094, 2
    %v1097 = vshll.u32 %v961, 16
    %v1099 = vrot.slane %v1097, 3
    %v1100 = vor.u32 %v1096, %v1099
    %v1101 = vsel %vm1084, %v1092, %v1100
    %v1103 = vshrl.u32 %v962, 16
    %v1105 = vrot.slane %v1103, 2
    %v1106 = vshll.u32 %v962, 16
    %v1108 = vrot.slane %v1106, 3
    %v1109 = vor.u32 %v1105, %v1108
    %v1110 = vsel %vm1084, %v1100, %v1109
    %v1112 = vshrl.u32 %v963, 16
    %v1114 = vrot.slane %v1112, 2
    %v1115 = vshll.u32 %v963, 16
    %v1117 = vrot.slane %v1115, 3
    %v1118 = vor.u32 %v1114, %v1117
    %v1119 = vsel %vm1084, %v1109, %v1118
    %v1121 = vshrl.u32 %v1083, 16
    %v1123 = vrot.slane %v1121, 2
    %v1124 = vshll.u32 %v1083, 16
    %v1126 = vrot.slane %v1124, 3
    %v1127 = vor.u32 %v1123, %v1126
    %v1128 = vsel %vm1084, %v1118, %v1127
    %v1149 = vunpack.c.l.b16 %v1065
    %v1150 = vunpack.c.l.b16 %v1066
    %v1151 = vunpack.c.l.b16 %v1067
    %v1152 = vunpack.c.l.b16 %v1068
    %v1153 = vunpack.c.l.b16 %v1069
    %v1154 = vunpack.c.l.b16 %v1070
    %v1155 = vunpack.c.l.b16 %v1071
    %v1156 = vunpack.c.l.b16 %v1072
    %v1157 = vunpack.c.l.b16 %v1073
    %v1158 = vunpack.c.l.b16 %v1074
    %v1159 = vunpack.c.l.b16 %v1075
    %v1160 = vunpack.c.l.b16 %v1076
    %v1161 = vunpack.c.l.b16 %v1077
    %v1162 = vunpack.c.l.b16 %v1078
    %v1163 = vunpack.c.l.b16 %v1079
    %v1164 = vunpack.c.l.b16 %v1080
    %v1165 = vpack.c.b16 %v1150, %v1149
    %v1166 = vpack.c.b16 %v1152, %v1151
    %v1167 = vpack.c.b16 %v1154, %v1153
    %v1168 = vpack.c.b16 %v1156, %v1155
    %v1169 = vpack.c.b16 %v1158, %v1157
    %v1170 = vpack.c.b16 %v1160, %v1159
    %v1171 = vpack.c.b16 %v1162, %v1161
    %v1172 = vpack.c.b16 %v1164, %v1163
    %1181 = vmatpush.bf16.msra.mxu0 %v1172
    %1182 = vmatpush.bf16.msra.mxu0 %v1171
    %1183 = vmatpush.bf16.msra.mxu0 %v1170
    %1184 = vmatpush.bf16.msra.mxu0 %v1169
    %1185 = vmatpush.bf16.msra.mxu0 %v1168
    %1186 = vmatpush.bf16.msra.mxu0 %v1167
    %1187 = vmatpush.bf16.msra.mxu0 %v1166
    %1188 = vmatpush.bf16.msra.mxu0 %v1165
    %1189 = vmatmul.bf16.gmra.mxu0 %v1101
    %v1190 = vpop.f32.mrf.mxu0
    %v1191 = vadd.f32 0.0, %v1190
    %v1192 = vpop.f32.mrf.mxu0
    %v1193 = vadd.f32 0.0, %v1192
    %1194 = vmatmul.bf16.gmra.mxu0 %v1110
    %v1195 = vpop.f32.mrf.mxu0
    %v1196 = vadd.f32 0.0, %v1195
    %v1197 = vpop.f32.mrf.mxu0
    %v1198 = vadd.f32 0.0, %v1197
    %1199 = vmatmul.bf16.gmra.mxu0 %v1119
    %v1200 = vpop.f32.mrf.mxu0
    %v1201 = vadd.f32 0.0, %v1200
    %v1202 = vpop.f32.mrf.mxu0
    %v1203 = vadd.f32 0.0, %v1202
    %1204 = vmatmul.bf16.gmra.mxu0 %v1128
    %v1205 = vpop.f32.mrf.mxu0
    %v1206 = vadd.f32 0.0, %v1205
    %v1207 = vpop.f32.mrf.mxu0
    %v1208 = vadd.f32 0.0, %v1207
    %1209 = vdwg.mxu0
    %v1210 = vadd.f32 %v1056, %v1191
    %v1211 = vadd.f32 %v1057, %v1193
    %v1212 = vadd.f32 %v1058, %v1196
    %v1213 = vadd.f32 %v1059, %v1198
    %v1214 = vadd.f32 %v1060, %v1201
    %v1215 = vadd.f32 %v1061, %v1203
    %v1216 = vadd.f32 %v1062, %v1206
    %v1217 = vadd.f32 %v1063, %v1208
    %v1218 = vld [vmem:[#allocation2 + $0xc] sm:$0x8]
    %v1219 = vld [vmem:[#allocation4 + $0x200] sm:$0xf]
    %v1220 = vld [vmem:[#allocation4 + $0x204] sm:$0xf]
    %v1221 = vld [vmem:[#allocation4 + $0x208] sm:$0xf]
    %v1222 = vld [vmem:[#allocation4 + $0x20c] sm:$0xf]
    %v1223 = vld [vmem:[#allocation4 + $0x210] sm:$0xf]
    %v1224 = vld [vmem:[#allocation4 + $0x214] sm:$0xf]
    %v1225 = vld [vmem:[#allocation4 + $0x218] sm:$0xf]
    %v1226 = vld [vmem:[#allocation4 + $0x21c] sm:$0xf]
    %v1227 = vld [vmem:[#allocation4 + $0x220] sm:$0xf]
    %v1228 = vld [vmem:[#allocation4 + $0x224] sm:$0xf]
    %v1229 = vld [vmem:[#allocation4 + $0x228] sm:$0xf]
    %v1230 = vld [vmem:[#allocation4 + $0x22c] sm:$0xf]
    %v1231 = vld [vmem:[#allocation4 + $0x230] sm:$0xf]
    %v1232 = vld [vmem:[#allocation4 + $0x234] sm:$0xf]
    %v1233 = vld [vmem:[#allocation4 + $0x238] sm:$0xf]
    %v1234 = vld [vmem:[#allocation4 + $0x23c] sm:$0xf]
    %v1236 = vunpack.c.l.b16 %v1218
    %v1237 = vpack.c.b16 %v952, %v1236
    %v1238 = vrot.slane %v1237, 3
    %v1239 = vrot.slane %v961, 3
    %v1240 = vsel %vm555, %v1238, %v1239
    %v1241 = vrot.slane %v962, 3
    %v1242 = vsel %vm555, %v1239, %v1241
    %v1243 = vrot.slane %v963, 3
    %v1244 = vsel %vm555, %v1241, %v1243
    %v1245 = vrot.slane %v1083, 3
    %v1246 = vsel %vm555, %v1243, %v1245
    %v1267 = vunpack.c.l.b16 %v1219
    %v1268 = vunpack.c.l.b16 %v1220
    %v1269 = vunpack.c.l.b16 %v1221
    %v1270 = vunpack.c.l.b16 %v1222
    %v1271 = vunpack.c.l.b16 %v1223
    %v1272 = vunpack.c.l.b16 %v1224
    %v1273 = vunpack.c.l.b16 %v1225
    %v1274 = vunpack.c.l.b16 %v1226
    %v1275 = vunpack.c.l.b16 %v1227
    %v1276 = vunpack.c.l.b16 %v1228
    %v1277 = vunpack.c.l.b16 %v1229
    %v1278 = vunpack.c.l.b16 %v1230
    %v1279 = vunpack.c.l.b16 %v1231
    %v1280 = vunpack.c.l.b16 %v1232
    %v1281 = vunpack.c.l.b16 %v1233
    %v1282 = vunpack.c.l.b16 %v1234
    %v1283 = vpack.c.b16 %v1268, %v1267
    %v1284 = vpack.c.b16 %v1270, %v1269
    %v1285 = vpack.c.b16 %v1272, %v1271
    %v1286 = vpack.c.b16 %v1274, %v1273
    %v1287 = vpack.c.b16 %v1276, %v1275
    %v1288 = vpack.c.b16 %v1278, %v1277
    %v1289 = vpack.c.b16 %v1280, %v1279
    %v1290 = vpack.c.b16 %v1282, %v1281
    %1299 = vmatpush.bf16.msra.mxu0 %v1290
    %1300 = vmatpush.bf16.msra.mxu0 %v1289
    %1301 = vmatpush.bf16.msra.mxu0 %v1288
    %1302 = vmatpush.bf16.msra.mxu0 %v1287
    %1303 = vmatpush.bf16.msra.mxu0 %v1286
    %1304 = vmatpush.bf16.msra.mxu0 %v1285
    %1305 = vmatpush.bf16.msra.mxu0 %v1284
    %1306 = vmatpush.bf16.msra.mxu0 %v1283
    %1307 = vmatmul.bf16.gmra.mxu0 %v1240
    %v1308 = vpop.f32.mrf.mxu0
    %v1309 = vadd.f32 0.0, %v1308
    %v1310 = vpop.f32.mrf.mxu0
    %v1311 = vadd.f32 0.0, %v1310
    %1312 = vmatmul.bf16.gmra.mxu0 %v1242
    %v1313 = vpop.f32.mrf.mxu0
    %v1314 = vadd.f32 0.0, %v1313
    %v1315 = vpop.f32.mrf.mxu0
    %v1316 = vadd.f32 0.0, %v1315
    %1317 = vmatmul.bf16.gmra.mxu0 %v1244
    %v1318 = vpop.f32.mrf.mxu0
    %v1319 = vadd.f32 0.0, %v1318
    %v1320 = vpop.f32.mrf.mxu0
    %v1321 = vadd.f32 0.0, %v1320
    %1322 = vmatmul.bf16.gmra.mxu0 %v1246
    %v1323 = vpop.f32.mrf.mxu0
    %v1324 = vadd.f32 0.0, %v1323
    %v1325 = vpop.f32.mrf.mxu0
    %v1326 = vadd.f32 0.0, %v1325
    %1327 = vdwg.mxu0
    %v1328 = vadd.f32 %v1210, %v1309
    %v1329 = vadd.f32 %v1211, %v1311
    %v1330 = vadd.f32 %v1212, %v1314
    %v1331 = vadd.f32 %v1213, %v1316
    %v1332 = vadd.f32 %v1214, %v1319
    %v1333 = vadd.f32 %v1215, %v1321
    %v1334 = vadd.f32 %v1216, %v1324
    %v1335 = vadd.f32 %v1217, %v1326
    %v1336 = vld [vmem:[#allocation7] sm:$0x1]
    %v1337 = vperm.slane %v1336, 0
    %v1338 = vmul.f32 %v1328, %v1337
    %v1339 = vmul.f32 %v1329, %v1337
    %v1340 = vmul.f32 %v1330, %v1337
    %v1341 = vmul.f32 %v1331, %v1337
    %v1342 = vmul.f32 %v1332, %v1337
    %v1343 = vmul.f32 %v1333, %v1337
    %v1344 = vmul.f32 %v1334, %v1337
    %v1345 = vmul.f32 %v1335, %v1337
    %v1346 = vld [vmem:[#allocation7 + $0x1] sm:$0x1]
    %v1347 = vperm.slane %v1346, 0
    %v1348 = vadd.f32 %v1338, %v1347
    %v1349 = vadd.f32 %v1339, %v1347
    %v1350 = vadd.f32 %v1340, %v1347
    %v1351 = vadd.f32 %v1341, %v1347
    %v1352 = vadd.f32 %v1342, %v1347
    %v1353 = vadd.f32 %v1343, %v1347
    %v1354 = vadd.f32 %v1344, %v1347
    %v1355 = vadd.f32 %v1345, %v1347
    %v1356 = vmax.f32 %v1348, 0.0
    %v1357 = vmax.f32 %v1349, 0.0
    %v1358 = vmax.f32 %v1350, 0.0
    %v1359 = vmax.f32 %v1351, 0.0
    %v1360 = vmax.f32 %v1352, 0.0
    %v1361 = vmax.f32 %v1353, 0.0
    %v1362 = vmax.f32 %v1354, 0.0
    %v1363 = vmax.f32 %v1355, 0.0
    %v1364 = vpack.c.bf16 %v1356, %v1356
    %v1365 = vpack.c.bf16 %v1357, %v1357
    %v1366 = vpack.c.bf16 %v1358, %v1358
    %v1367 = vpack.c.bf16 %v1359, %v1359
    %v1368 = vpack.c.bf16 %v1360, %v1360
    %v1369 = vpack.c.bf16 %v1361, %v1361
    %v1370 = vpack.c.bf16 %v1362, %v1362
    %v1371 = vpack.c.bf16 %v1363, %v1363
    %1372 = vst [vmem:[#allocation9] sm:$0xf] %v1364
    %1373 = vst [vmem:[#allocation9 + $0x4] sm:$0xf] %v1365
    %1374 = vst [vmem:[#allocation9 + $0x8] sm:$0xf] %v1366
    %1375 = vst [vmem:[#allocation9 + $0xc] sm:$0xf] %v1367
    %1376 = vst [vmem:[#allocation9 + $0x10] sm:$0xf] %v1368
    %1377 = vst [vmem:[#allocation9 + $0x14] sm:$0xf] %v1369
    %1378 = vst [vmem:[#allocation9 + $0x18] sm:$0xf] %v1370
    %1379 = vst [vmem:[#allocation9 + $0x1c] sm:$0xf] %v1371
    %s1380 = smul.u32 4, 8
    %s1381 = smul.u32 %s1380, 1
    %s1382 = sshll.u32 %s1381, 4
    %1383 = dma.done %s67, %s1382
    %v1384 = vld [vmem:[#allocation2 + $0x20] sm:$0xf]
    %v1385 = vld [vmem:[#allocation2 + $0x24] sm:$0xf]
    %v1386 = vld [vmem:[#allocation2 + $0x28] sm:$0xf]
    %v1387 = vld [vmem:[#allocation2 + $0x2c] sm:$0xf]
    %v1388 = vld [vmem:[#allocation2 + $0x30] sm:$0xf]
    %v1389 = vld [vmem:[#allocation2 + $0x34] sm:$0xf]
    %v1390 = vld [vmem:[#allocation2 + $0x38] sm:$0xf]
    %v1391 = vld [vmem:[#allocation2 + $0x3c] sm:$0xf]
    %v1392 = vld [vmem:[#allocation4] sm:$0xf]
    %v1393 = vld [vmem:[#allocation4 + $0x4] sm:$0xf]
    %v1394 = vld [vmem:[#allocation4 + $0x8] sm:$0xf]
    %v1395 = vld [vmem:[#allocation4 + $0xc] sm:$0xf]
    %v1396 = vld [vmem:[#allocation4 + $0x10] sm:$0xf]
    %v1397 = vld [vmem:[#allocation4 + $0x14] sm:$0xf]
    %v1398 = vld [vmem:[#allocation4 + $0x18] sm:$0xf]
    %v1399 = vld [vmem:[#allocation4 + $0x1c] sm:$0xf]
    %v1400 = vld [vmem:[#allocation4 + $0x20] sm:$0xf]
    %v1401 = vld [vmem:[#allocation4 + $0x24] sm:$0xf]
    %v1402 = vld [vmem:[#allocation4 + $0x28] sm:$0xf]
    %v1403 = vld [vmem:[#allocation4 + $0x2c] sm:$0xf]
    %v1404 = vld [vmem:[#allocation4 + $0x30] sm:$0xf]
    %v1405 = vld [vmem:[#allocation4 + $0x34] sm:$0xf]
    %v1406 = vld [vmem:[#allocation4 + $0x38] sm:$0xf]
    %v1407 = vld [vmem:[#allocation4 + $0x3c] sm:$0xf]
    %v1408 = vld [vmem:[#allocation2 + $0x40] sm:$0x1]
    %v1409 = vld [vmem:[#allocation4 + $0x40] sm:$0xf]
    %v1410 = vld [vmem:[#allocation4 + $0x44] sm:$0xf]
    %v1411 = vld [vmem:[#allocation4 + $0x48] sm:$0xf]
    %v1412 = vld [vmem:[#allocation4 + $0x4c] sm:$0xf]
    %v1413 = vld [vmem:[#allocation4 + $0x50] sm:$0xf]
    %v1414 = vld [vmem:[#allocation4 + $0x54] sm:$0xf]
    %v1415 = vld [vmem:[#allocation4 + $0x58] sm:$0xf]
    %v1416 = vld [vmem:[#allocation4 + $0x5c] sm:$0xf]
    %v1417 = vld [vmem:[#allocation4 + $0x60] sm:$0xf]
    %v1418 = vld [vmem:[#allocation4 + $0x64] sm:$0xf]
    %v1419 = vld [vmem:[#allocation4 + $0x68] sm:$0xf]
    %v1420 = vld [vmem:[#allocation4 + $0x6c] sm:$0xf]
    %v1421 = vld [vmem:[#allocation4 + $0x70] sm:$0xf]
    %v1422 = vld [vmem:[#allocation4 + $0x74] sm:$0xf]
    %v1423 = vld [vmem:[#allocation4 + $0x78] sm:$0xf]
    %v1424 = vld [vmem:[#allocation4 + $0x7c] sm:$0xf]
    %v1434 = vunpack.c.l.b16 %v1384
    %v1435 = vunpack.c.l.b16 %v1385
    %v1436 = vunpack.c.l.b16 %v1386
    %v1437 = vunpack.c.l.b16 %v1387
    %v1438 = vunpack.c.l.b16 %v1388
    %v1439 = vunpack.c.l.b16 %v1389
    %v1440 = vunpack.c.l.b16 %v1390
    %v1441 = vunpack.c.l.b16 %v1391
    %v1442 = vunpack.c.l.b16 %v1408
    %v1443 = vpack.c.b16 %v1435, %v1434
    %v1444 = vpack.c.b16 %v1437, %v1436
    %v1445 = vpack.c.b16 %v1439, %v1438
    %v1446 = vpack.c.b16 %v1441, %v1440
    %v1447 = vpack.c.b16 %v1442, %v1442
    %v1449 = vshrl.u32 %v1443, 16
    %v1451 = vshll.u32 %v1443, 16
    %v1453 = vrot.slane %v1451, 1
    %v1454 = vor.u32 %v1449, %v1453
    %v1456 = vshll.u32 %v1444, 16
    %v1458 = vrot.slane %v1456, 1
    %v1459 = vsel %vm189, %v1454, %v1458
    %v1460 = vshrl.u32 %v1444, 16
    %v1462 = vor.u32 %v1460, %v1458
    %v1464 = vshll.u32 %v1445, 16
    %v1466 = vrot.slane %v1464, 1
    %v1467 = vsel %vm189, %v1462, %v1466
    %v1468 = vshrl.u32 %v1445, 16
    %v1470 = vor.u32 %v1468, %v1466
    %v1472 = vshll.u32 %v1446, 16
    %v1474 = vrot.slane %v1472, 1
    %v1475 = vsel %vm189, %v1470, %v1474
    %v1476 = vshrl.u32 %v1446, 16
    %v1478 = vor.u32 %v1476, %v1474
    %v1480 = vshll.u32 %v1447, 16
    %v1482 = vrot.slane %v1480, 1
    %v1483 = vsel %vm189, %v1478, %v1482
    %v1504 = vunpack.c.l.b16 %v1409
    %v1505 = vunpack.c.l.b16 %v1410
    %v1506 = vunpack.c.l.b16 %v1411
    %v1507 = vunpack.c.l.b16 %v1412
    %v1508 = vunpack.c.l.b16 %v1413
    %v1509 = vunpack.c.l.b16 %v1414
    %v1510 = vunpack.c.l.b16 %v1415
    %v1511 = vunpack.c.l.b16 %v1416
    %v1512 = vunpack.c.l.b16 %v1417
    %v1513 = vunpack.c.l.b16 %v1418
    %v1514 = vunpack.c.l.b16 %v1419
    %v1515 = vunpack.c.l.b16 %v1420
    %v1516 = vunpack.c.l.b16 %v1421
    %v1517 = vunpack.c.l.b16 %v1422
    %v1518 = vunpack.c.l.b16 %v1423
    %v1519 = vunpack.c.l.b16 %v1424
    %v1520 = vpack.c.b16 %v1505, %v1504
    %v1521 = vpack.c.b16 %v1507, %v1506
    %v1522 = vpack.c.b16 %v1509, %v1508
    %v1523 = vpack.c.b16 %v1511, %v1510
    %v1524 = vpack.c.b16 %v1513, %v1512
    %v1525 = vpack.c.b16 %v1515, %v1514
    %v1526 = vpack.c.b16 %v1517, %v1516
    %v1527 = vpack.c.b16 %v1519, %v1518
    %1536 = vmatpush.bf16.msra.mxu0 %v1527
    %1537 = vmatpush.bf16.msra.mxu0 %v1526
    %1538 = vmatpush.bf16.msra.mxu0 %v1525
    %1539 = vmatpush.bf16.msra.mxu0 %v1524
    %1540 = vmatpush.bf16.msra.mxu0 %v1523
    %1541 = vmatpush.bf16.msra.mxu0 %v1522
    %1542 = vmatpush.bf16.msra.mxu0 %v1521
    %1543 = vmatpush.bf16.msra.mxu0 %v1520
    %1544 = vmatmul.bf16.gmra.mxu0 %v1459
    %v1545 = vpop.f32.mrf.mxu0
    %v1546 = vadd.f32 0.0, %v1545
    %v1547 = vpop.f32.mrf.mxu0
    %v1548 = vadd.f32 0.0, %v1547
    %1549 = vmatmul.bf16.gmra.mxu0 %v1467
    %v1550 = vpop.f32.mrf.mxu0
    %v1551 = vadd.f32 0.0, %v1550
    %v1552 = vpop.f32.mrf.mxu0
    %v1553 = vadd.f32 0.0, %v1552
    %1554 = vmatmul.bf16.gmra.mxu0 %v1475
    %v1555 = vpop.f32.mrf.mxu0
    %v1556 = vadd.f32 0.0, %v1555
    %v1557 = vpop.f32.mrf.mxu0
    %v1558 = vadd.f32 0.0, %v1557
    %1559 = vmatmul.bf16.gmra.mxu0 %v1483
    %v1560 = vpop.f32.mrf.mxu0
    %v1561 = vadd.f32 0.0, %v1560
    %v1562 = vpop.f32.mrf.mxu0
    %v1563 = vadd.f32 0.0, %v1562
    %1564 = vdwg.mxu0
    %v1585 = vunpack.c.l.b16 %v1392
    %v1586 = vunpack.c.l.b16 %v1393
    %v1587 = vunpack.c.l.b16 %v1394
    %v1588 = vunpack.c.l.b16 %v1395
    %v1589 = vunpack.c.l.b16 %v1396
    %v1590 = vunpack.c.l.b16 %v1397
    %v1591 = vunpack.c.l.b16 %v1398
    %v1592 = vunpack.c.l.b16 %v1399
    %v1593 = vunpack.c.l.b16 %v1400
    %v1594 = vunpack.c.l.b16 %v1401
    %v1595 = vunpack.c.l.b16 %v1402
    %v1596 = vunpack.c.l.b16 %v1403
    %v1597 = vunpack.c.l.b16 %v1404
    %v1598 = vunpack.c.l.b16 %v1405
    %v1599 = vunpack.c.l.b16 %v1406
    %v1600 = vunpack.c.l.b16 %v1407
    %v1601 = vpack.c.b16 %v1586, %v1585
    %v1602 = vpack.c.b16 %v1588, %v1587
    %v1603 = vpack.c.b16 %v1590, %v1589
    %v1604 = vpack.c.b16 %v1592, %v1591
    %v1605 = vpack.c.b16 %v1594, %v1593
    %v1606 = vpack.c.b16 %v1596, %v1595
    %v1607 = vpack.c.b16 %v1598, %v1597
    %v1608 = vpack.c.b16 %v1600, %v1599
    %1617 = vmatpush.bf16.msra.mxu0 %v1608
    %1618 = vmatpush.bf16.msra.mxu0 %v1607
    %1619 = vmatpush.bf16.msra.mxu0 %v1606
    %1620 = vmatpush.bf16.msra.mxu0 %v1605
    %1621 = vmatpush.bf16.msra.mxu0 %v1604
    %1622 = vmatpush.bf16.msra.mxu0 %v1603
    %1623 = vmatpush.bf16.msra.mxu0 %v1602
    %1624 = vmatpush.bf16.msra.mxu0 %v1601
    %1625 = vmatmul.bf16.gmra.mxu0 %v1443
    %v1626 = vpop.f32.mrf.mxu0
    %v1627 = vadd.f32 %v1546, %v1626
    %v1628 = vpop.f32.mrf.mxu0
    %v1629 = vadd.f32 %v1548, %v1628
    %1630 = vmatmul.bf16.gmra.mxu0 %v1444
    %v1631 = vpop.f32.mrf.mxu0
    %v1632 = vadd.f32 %v1551, %v1631
    %v1633 = vpop.f32.mrf.mxu0
    %v1634 = vadd.f32 %v1553, %v1633
    %1635 = vmatmul.bf16.gmra.mxu0 %v1445
    %v1636 = vpop.f32.mrf.mxu0
    %v1637 = vadd.f32 %v1556, %v1636
    %v1638 = vpop.f32.mrf.mxu0
    %v1639 = vadd.f32 %v1558, %v1638
    %1640 = vmatmul.bf16.gmra.mxu0 %v1446
    %v1641 = vpop.f32.mrf.mxu0
    %v1642 = vadd.f32 %v1561, %v1641
    %v1643 = vpop.f32.mrf.mxu0
    %v1644 = vadd.f32 %v1563, %v1643
    %1645 = vdwg.mxu0
    %v1646 = vld [vmem:[#allocation2 + $0x20] sm:$0xe]
    %v1647 = vld [vmem:[#allocation4 + $0x80] sm:$0xf]
    %v1648 = vld [vmem:[#allocation4 + $0x84] sm:$0xf]
    %v1649 = vld [vmem:[#allocation4 + $0x88] sm:$0xf]
    %v1650 = vld [vmem:[#allocation4 + $0x8c] sm:$0xf]
    %v1651 = vld [vmem:[#allocation4 + $0x90] sm:$0xf]
    %v1652 = vld [vmem:[#allocation4 + $0x94] sm:$0xf]
    %v1653 = vld [vmem:[#allocation4 + $0x98] sm:$0xf]
    %v1654 = vld [vmem:[#allocation4 + $0x9c] sm:$0xf]
    %v1655 = vld [vmem:[#allocation4 + $0xa0] sm:$0xf]
    %v1656 = vld [vmem:[#allocation4 + $0xa4] sm:$0xf]
    %v1657 = vld [vmem:[#allocation4 + $0xa8] sm:$0xf]
    %v1658 = vld [vmem:[#allocation4 + $0xac] sm:$0xf]
    %v1659 = vld [vmem:[#allocation4 + $0xb0] sm:$0xf]
    %v1660 = vld [vmem:[#allocation4 + $0xb4] sm:$0xf]
    %v1661 = vld [vmem:[#allocation4 + $0xb8] sm:$0xf]
    %v1662 = vld [vmem:[#allocation4 + $0xbc] sm:$0xf]
    %v1664 = vunpack.c.l.b16 %v1646
    %v1665 = vpack.c.b16 %v1435, %v1664
    %v1666 = vrot.slane %v1665, 1
    %v1667 = vrot.slane %v1444, 1
    %v1668 = vsel %vm408, %v1666, %v1667
    %v1669 = vrot.slane %v1445, 1
    %v1670 = vsel %vm408, %v1667, %v1669
    %v1671 = vrot.slane %v1446, 1
    %v1672 = vsel %vm408, %v1669, %v1671
    %v1673 = vrot.slane %v1447, 1
    %v1674 = vsel %vm408, %v1671, %v1673
    %v1695 = vunpack.c.l.b16 %v1647
    %v1696 = vunpack.c.l.b16 %v1648
    %v1697 = vunpack.c.l.b16 %v1649
    %v1698 = vunpack.c.l.b16 %v1650
    %v1699 = vunpack.c.l.b16 %v1651
    %v1700 = vunpack.c.l.b16 %v1652
    %v1701 = vunpack.c.l.b16 %v1653
    %v1702 = vunpack.c.l.b16 %v1654
    %v1703 = vunpack.c.l.b16 %v1655
    %v1704 = vunpack.c.l.b16 %v1656
    %v1705 = vunpack.c.l.b16 %v1657
    %v1706 = vunpack.c.l.b16 %v1658
    %v1707 = vunpack.c.l.b16 %v1659
    %v1708 = vunpack.c.l.b16 %v1660
    %v1709 = vunpack.c.l.b16 %v1661
    %v1710 = vunpack.c.l.b16 %v1662
    %v1711 = vpack.c.b16 %v1696, %v1695
    %v1712 = vpack.c.b16 %v1698, %v1697
    %v1713 = vpack.c.b16 %v1700, %v1699
    %v1714 = vpack.c.b16 %v1702, %v1701
    %v1715 = vpack.c.b16 %v1704, %v1703
    %v1716 = vpack.c.b16 %v1706, %v1705
    %v1717 = vpack.c.b16 %v1708, %v1707
    %v1718 = vpack.c.b16 %v1710, %v1709
    %1727 = vmatpush.bf16.msra.mxu0 %v1718
    %1728 = vmatpush.bf16.msra.mxu0 %v1717
    %1729 = vmatpush.bf16.msra.mxu0 %v1716
    %1730 = vmatpush.bf16.msra.mxu0 %v1715
    %1731 = vmatpush.bf16.msra.mxu0 %v1714
    %1732 = vmatpush.bf16.msra.mxu0 %v1713
    %1733 = vmatpush.bf16.msra.mxu0 %v1712
    %1734 = vmatpush.bf16.msra.mxu0 %v1711
    %1735 = vmatmul.bf16.gmra.mxu0 %v1668
    %v1736 = vpop.f32.mrf.mxu0
    %v1737 = vadd.f32 0.0, %v1736
    %v1738 = vpop.f32.mrf.mxu0
    %v1739 = vadd.f32 0.0, %v1738
    %1740 = vmatmul.bf16.gmra.mxu0 %v1670
    %v1741 = vpop.f32.mrf.mxu0
    %v1742 = vadd.f32 0.0, %v1741
    %v1743 = vpop.f32.mrf.mxu0
    %v1744 = vadd.f32 0.0, %v1743
    %1745 = vmatmul.bf16.gmra.mxu0 %v1672
    %v1746 = vpop.f32.mrf.mxu0
    %v1747 = vadd.f32 0.0, %v1746
    %v1748 = vpop.f32.mrf.mxu0
    %v1749 = vadd.f32 0.0, %v1748
    %1750 = vmatmul.bf16.gmra.mxu0 %v1674
    %v1751 = vpop.f32.mrf.mxu0
    %v1752 = vadd.f32 0.0, %v1751
    %v1753 = vpop.f32.mrf.mxu0
    %v1754 = vadd.f32 0.0, %v1753
    %1755 = vdwg.mxu0
    %v1756 = vadd.f32 %v1627, %v1737
    %v1757 = vadd.f32 %v1629, %v1739
    %v1758 = vadd.f32 %v1632, %v1742
    %v1759 = vadd.f32 %v1634, %v1744
    %v1760 = vadd.f32 %v1637, %v1747
    %v1761 = vadd.f32 %v1639, %v1749
    %v1762 = vadd.f32 %v1642, %v1752
    %v1763 = vadd.f32 %v1644, %v1754
    %v1764 = vld [vmem:[#allocation2 + $0x24] sm:$0x8]
    %v1765 = vld [vmem:[#allocation2 + $0x28] sm:$0xf]
    %v1766 = vld [vmem:[#allocation2 + $0x2c] sm:$0xf]
    %v1767 = vld [vmem:[#allocation2 + $0x30] sm:$0xf]
    %v1768 = vld [vmem:[#allocation2 + $0x34] sm:$0xf]
    %v1769 = vld [vmem:[#allocation2 + $0x38] sm:$0xf]
    %v1770 = vld [vmem:[#allocation2 + $0x3c] sm:$0xf]
    %v1771 = vld [vmem:[#allocation2 + $0x40] sm:$0xf]
    %v1772 = vld [vmem:[#allocation2 + $0x44] sm:$0x7]
    %v1773 = vld [vmem:[#allocation4 + $0xc0] sm:$0xf]
    %v1774 = vld [vmem:[#allocation4 + $0xc4] sm:$0xf]
    %v1775 = vld [vmem:[#allocation4 + $0xc8] sm:$0xf]
    %v1776 = vld [vmem:[#allocation4 + $0xcc] sm:$0xf]
    %v1777 = vld [vmem:[#allocation4 + $0xd0] sm:$0xf]
    %v1778 = vld [vmem:[#allocation4 + $0xd4] sm:$0xf]
    %v1779 = vld [vmem:[#allocation4 + $0xd8] sm:$0xf]
    %v1780 = vld [vmem:[#allocation4 + $0xdc] sm:$0xf]
    %v1781 = vld [vmem:[#allocation4 + $0xe0] sm:$0xf]
    %v1782 = vld [vmem:[#allocation4 + $0xe4] sm:$0xf]
    %v1783 = vld [vmem:[#allocation4 + $0xe8] sm:$0xf]
    %v1784 = vld [vmem:[#allocation4 + $0xec] sm:$0xf]
    %v1785 = vld [vmem:[#allocation4 + $0xf0] sm:$0xf]
    %v1786 = vld [vmem:[#allocation4 + $0xf4] sm:$0xf]
    %v1787 = vld [vmem:[#allocation4 + $0xf8] sm:$0xf]
    %v1788 = vld [vmem:[#allocation4 + $0xfc] sm:$0xf]
    %v1798 = vunpack.c.l.b16 %v1764
    %v1799 = vunpack.c.l.b16 %v1765
    %v1800 = vunpack.c.l.b16 %v1766
    %v1801 = vunpack.c.l.b16 %v1767
    %v1802 = vunpack.c.l.b16 %v1768
    %v1803 = vunpack.c.l.b16 %v1769
    %v1804 = vunpack.c.l.b16 %v1770
    %v1805 = vunpack.c.l.b16 %v1771
    %v1806 = vunpack.c.l.b16 %v1772
    %v1807 = vpack.c.b16 %v1799, %v1798
    %v1808 = vpack.c.b16 %v1801, %v1800
    %v1809 = vpack.c.b16 %v1803, %v1802
    %v1810 = vpack.c.b16 %v1805, %v1804
    %v1811 = vpack.c.b16 %v1806, %v1806
    %v1812 = vrot.slane %v1807, 3
    %v1813 = vrot.slane %v1808, 3
    %v1814 = vsel %vm555, %v1812, %v1813
    %v1815 = vrot.slane %v1809, 3
    %v1816 = vsel %vm555, %v1813, %v1815
    %v1817 = vrot.slane %v1810, 3
    %v1818 = vsel %vm555, %v1815, %v1817
    %v1819 = vrot.slane %v1811, 3
    %v1820 = vsel %vm555, %v1817, %v1819
    %v1841 = vunpack.c.l.b16 %v1773
    %v1842 = vunpack.c.l.b16 %v1774
    %v1843 = vunpack.c.l.b16 %v1775
    %v1844 = vunpack.c.l.b16 %v1776
    %v1845 = vunpack.c.l.b16 %v1777
    %v1846 = vunpack.c.l.b16 %v1778
    %v1847 = vunpack.c.l.b16 %v1779
    %v1848 = vunpack.c.l.b16 %v1780
    %v1849 = vunpack.c.l.b16 %v1781
    %v1850 = vunpack.c.l.b16 %v1782
    %v1851 = vunpack.c.l.b16 %v1783
    %v1852 = vunpack.c.l.b16 %v1784
    %v1853 = vunpack.c.l.b16 %v1785
    %v1854 = vunpack.c.l.b16 %v1786
    %v1855 = vunpack.c.l.b16 %v1787
    %v1856 = vunpack.c.l.b16 %v1788
    %v1857 = vpack.c.b16 %v1842, %v1841
    %v1858 = vpack.c.b16 %v1844, %v1843
    %v1859 = vpack.c.b16 %v1846, %v1845
    %v1860 = vpack.c.b16 %v1848, %v1847
    %v1861 = vpack.c.b16 %v1850, %v1849
    %v1862 = vpack.c.b16 %v1852, %v1851
    %v1863 = vpack.c.b16 %v1854, %v1853
    %v1864 = vpack.c.b16 %v1856, %v1855
    %1873 = vmatpush.bf16.msra.mxu0 %v1864
    %1874 = vmatpush.bf16.msra.mxu0 %v1863
    %1875 = vmatpush.bf16.msra.mxu0 %v1862
    %1876 = vmatpush.bf16.msra.mxu0 %v1861
    %1877 = vmatpush.bf16.msra.mxu0 %v1860
    %1878 = vmatpush.bf16.msra.mxu0 %v1859
    %1879 = vmatpush.bf16.msra.mxu0 %v1858
    %1880 = vmatpush.bf16.msra.mxu0 %v1857
    %1881 = vmatmul.bf16.gmra.mxu0 %v1814
    %v1882 = vpop.f32.mrf.mxu0
    %v1883 = vadd.f32 0.0, %v1882
    %v1884 = vpop.f32.mrf.mxu0
    %v1885 = vadd.f32 0.0, %v1884
    %1886 = vmatmul.bf16.gmra.mxu0 %v1816
    %v1887 = vpop.f32.mrf.mxu0
    %v1888 = vadd.f32 0.0, %v1887
    %v1889 = vpop.f32.mrf.mxu0
    %v1890 = vadd.f32 0.0, %v1889
    %1891 = vmatmul.bf16.gmra.mxu0 %v1818
    %v1892 = vpop.f32.mrf.mxu0
    %v1893 = vadd.f32 0.0, %v1892
    %v1894 = vpop.f32.mrf.mxu0
    %v1895 = vadd.f32 0.0, %v1894
    %1896 = vmatmul.bf16.gmra.mxu0 %v1820
    %v1897 = vpop.f32.mrf.mxu0
    %v1898 = vadd.f32 0.0, %v1897
    %v1899 = vpop.f32.mrf.mxu0
    %v1900 = vadd.f32 0.0, %v1899
    %1901 = vdwg.mxu0
    %v1902 = vadd.f32 %v1756, %v1883
    %v1903 = vadd.f32 %v1757, %v1885
    %v1904 = vadd.f32 %v1758, %v1888
    %v1905 = vadd.f32 %v1759, %v1890
    %v1906 = vadd.f32 %v1760, %v1893
    %v1907 = vadd.f32 %v1761, %v1895
    %v1908 = vadd.f32 %v1762, %v1898
    %v1909 = vadd.f32 %v1763, %v1900
    %v1910 = vld [vmem:[#allocation2 + $0x44] sm:$0xf]
    %v1911 = vld [vmem:[#allocation4 + $0x100] sm:$0xf]
    %v1912 = vld [vmem:[#allocation4 + $0x104] sm:$0xf]
    %v1913 = vld [vmem:[#allocation4 + $0x108] sm:$0xf]
    %v1914 = vld [vmem:[#allocation4 + $0x10c] sm:$0xf]
    %v1915 = vld [vmem:[#allocation4 + $0x110] sm:$0xf]
    %v1916 = vld [vmem:[#allocation4 + $0x114] sm:$0xf]
    %v1917 = vld [vmem:[#allocation4 + $0x118] sm:$0xf]
    %v1918 = vld [vmem:[#allocation4 + $0x11c] sm:$0xf]
    %v1919 = vld [vmem:[#allocation4 + $0x120] sm:$0xf]
    %v1920 = vld [vmem:[#allocation4 + $0x124] sm:$0xf]
    %v1921 = vld [vmem:[#allocation4 + $0x128] sm:$0xf]
    %v1922 = vld [vmem:[#allocation4 + $0x12c] sm:$0xf]
    %v1923 = vld [vmem:[#allocation4 + $0x130] sm:$0xf]
    %v1924 = vld [vmem:[#allocation4 + $0x134] sm:$0xf]
    %v1925 = vld [vmem:[#allocation4 + $0x138] sm:$0xf]
    %v1926 = vld [vmem:[#allocation4 + $0x13c] sm:$0xf]
    %v1928 = vunpack.c.l.b16 %v1910
    %v1929 = vpack.c.b16 %v1928, %v1928
    %v1931 = vshrl.u32 %v1807, 16
    %v1933 = vrot.slane %v1931, 3
    %v1934 = vshll.u32 %v1807, 16
    %v1936 = vrot.slane %v1934, 4
    %v1937 = vor.u32 %v1933, %v1936
    %v1939 = vshrl.u32 %v1808, 16
    %v1941 = vrot.slane %v1939, 3
    %v1942 = vshll.u32 %v1808, 16
    %v1944 = vrot.slane %v1942, 4
    %v1945 = vor.u32 %v1941, %v1944
    %v1946 = vsel %vm674, %v1937, %v1945
    %v1948 = vshrl.u32 %v1809, 16
    %v1950 = vrot.slane %v1948, 3
    %v1951 = vshll.u32 %v1809, 16
    %v1953 = vrot.slane %v1951, 4
    %v1954 = vor.u32 %v1950, %v1953
    %v1955 = vsel %vm674, %v1945, %v1954
    %v1957 = vshrl.u32 %v1810, 16
    %v1959 = vrot.slane %v1957, 3
    %v1960 = vshll.u32 %v1810, 16
    %v1962 = vrot.slane %v1960, 4
    %v1963 = vor.u32 %v1959, %v1962
    %v1964 = vsel %vm674, %v1954, %v1963
    %v1966 = vshrl.u32 %v1929, 16
    %v1968 = vrot.slane %v1966, 3
    %v1969 = vshll.u32 %v1929, 16
    %v1971 = vrot.slane %v1969, 4
    %v1972 = vor.u32 %v1968, %v1971
    %v1973 = vsel %vm674, %v1963, %v1972
    %v1994 = vunpack.c.l.b16 %v1911
    %v1995 = vunpack.c.l.b16 %v1912
    %v1996 = vunpack.c.l.b16 %v1913
    %v1997 = vunpack.c.l.b16 %v1914
    %v1998 = vunpack.c.l.b16 %v1915
    %v1999 = vunpack.c.l.b16 %v1916
    %v2000 = vunpack.c.l.b16 %v1917
    %v2001 = vunpack.c.l.b16 %v1918
    %v2002 = vunpack.c.l.b16 %v1919
    %v2003 = vunpack.c.l.b16 %v1920
    %v2004 = vunpack.c.l.b16 %v1921
    %v2005 = vunpack.c.l.b16 %v1922
    %v2006 = vunpack.c.l.b16 %v1923
    %v2007 = vunpack.c.l.b16 %v1924
    %v2008 = vunpack.c.l.b16 %v1925
    %v2009 = vunpack.c.l.b16 %v1926
    %v2010 = vpack.c.b16 %v1995, %v1994
    %v2011 = vpack.c.b16 %v1997, %v1996
    %v2012 = vpack.c.b16 %v1999, %v1998
    %v2013 = vpack.c.b16 %v2001, %v2000
    %v2014 = vpack.c.b16 %v2003, %v2002
    %v2015 = vpack.c.b16 %v2005, %v2004
    %v2016 = vpack.c.b16 %v2007, %v2006
    %v2017 = vpack.c.b16 %v2009, %v2008
    %2026 = vmatpush.bf16.msra.mxu0 %v2017
    %2027 = vmatpush.bf16.msra.mxu0 %v2016
    %2028 = vmatpush.bf16.msra.mxu0 %v2015
    %2029 = vmatpush.bf16.msra.mxu0 %v2014
    %2030 = vmatpush.bf16.msra.mxu0 %v2013
    %2031 = vmatpush.bf16.msra.mxu0 %v2012
    %2032 = vmatpush.bf16.msra.mxu0 %v2011
    %2033 = vmatpush.bf16.msra.mxu0 %v2010
    %2034 = vmatmul.bf16.gmra.mxu0 %v1946
    %v2035 = vpop.f32.mrf.mxu0
    %v2036 = vadd.f32 0.0, %v2035
    %v2037 = vpop.f32.mrf.mxu0
    %v2038 = vadd.f32 0.0, %v2037
    %2039 = vmatmul.bf16.gmra.mxu0 %v1955
    %v2040 = vpop.f32.mrf.mxu0
    %v2041 = vadd.f32 0.0, %v2040
    %v2042 = vpop.f32.mrf.mxu0
    %v2043 = vadd.f32 0.0, %v2042
    %2044 = vmatmul.bf16.gmra.mxu0 %v1964
    %v2045 = vpop.f32.mrf.mxu0
    %v2046 = vadd.f32 0.0, %v2045
    %v2047 = vpop.f32.mrf.mxu0
    %v2048 = vadd.f32 0.0, %v2047
    %2049 = vmatmul.bf16.gmra.mxu0 %v1973
    %v2050 = vpop.f32.mrf.mxu0
    %v2051 = vadd.f32 0.0, %v2050
    %v2052 = vpop.f32.mrf.mxu0
    %v2053 = vadd.f32 0.0, %v2052
    %2054 = vdwg.mxu0
    %v2055 = vadd.f32 %v1902, %v2036
    %v2056 = vadd.f32 %v1903, %v2038
    %v2057 = vadd.f32 %v1904, %v2041
    %v2058 = vadd.f32 %v1905, %v2043
    %v2059 = vadd.f32 %v1906, %v2046
    %v2060 = vadd.f32 %v1907, %v2048
    %v2061 = vadd.f32 %v1908, %v2051
    %v2062 = vadd.f32 %v1909, %v2053
    %v2063 = vld [vmem:[#allocation4 + $0x140] sm:$0xf]
    %v2064 = vld [vmem:[#allocation4 + $0x144] sm:$0xf]
    %v2065 = vld [vmem:[#allocation4 + $0x148] sm:$0xf]
    %v2066 = vld [vmem:[#allocation4 + $0x14c] sm:$0xf]
    %v2067 = vld [vmem:[#allocation4 + $0x150] sm:$0xf]
    %v2068 = vld [vmem:[#allocation4 + $0x154] sm:$0xf]
    %v2069 = vld [vmem:[#allocation4 + $0x158] sm:$0xf]
    %v2070 = vld [vmem:[#allocation4 + $0x15c] sm:$0xf]
    %v2071 = vld [vmem:[#allocation4 + $0x160] sm:$0xf]
    %v2072 = vld [vmem:[#allocation4 + $0x164] sm:$0xf]
    %v2073 = vld [vmem:[#allocation4 + $0x168] sm:$0xf]
    %v2074 = vld [vmem:[#allocation4 + $0x16c] sm:$0xf]
    %v2075 = vld [vmem:[#allocation4 + $0x170] sm:$0xf]
    %v2076 = vld [vmem:[#allocation4 + $0x174] sm:$0xf]
    %v2077 = vld [vmem:[#allocation4 + $0x178] sm:$0xf]
    %v2078 = vld [vmem:[#allocation4 + $0x17c] sm:$0xf]
    %v2079 = vpack.c.b16 %v1800, %v1799
    %v2080 = vpack.c.b16 %v1802, %v1801
    %v2081 = vpack.c.b16 %v1804, %v1803
    %v2082 = vpack.c.b16 %v1928, %v1805
    %v2103 = vunpack.c.l.b16 %v2063
    %v2104 = vunpack.c.l.b16 %v2064
    %v2105 = vunpack.c.l.b16 %v2065
    %v2106 = vunpack.c.l.b16 %v2066
    %v2107 = vunpack.c.l.b16 %v2067
    %v2108 = vunpack.c.l.b16 %v2068
    %v2109 = vunpack.c.l.b16 %v2069
    %v2110 = vunpack.c.l.b16 %v2070
    %v2111 = vunpack.c.l.b16 %v2071
    %v2112 = vunpack.c.l.b16 %v2072
    %v2113 = vunpack.c.l.b16 %v2073
    %v2114 = vunpack.c.l.b16 %v2074
    %v2115 = vunpack.c.l.b16 %v2075
    %v2116 = vunpack.c.l.b16 %v2076
    %v2117 = vunpack.c.l.b16 %v2077
    %v2118 = vunpack.c.l.b16 %v2078
    %v2119 = vpack.c.b16 %v2104, %v2103
    %v2120 = vpack.c.b16 %v2106, %v2105
    %v2121 = vpack.c.b16 %v2108, %v2107
    %v2122 = vpack.c.b16 %v2110, %v2109
    %v2123 = vpack.c.b16 %v2112, %v2111
    %v2124 = vpack.c.b16 %v2114, %v2113
    %v2125 = vpack.c.b16 %v2116, %v2115
    %v2126 = vpack.c.b16 %v2118, %v2117
    %2135 = vmatpush.bf16.msra.mxu0 %v2126
    %2136 = vmatpush.bf16.msra.mxu0 %v2125
    %2137 = vmatpush.bf16.msra.mxu0 %v2124
    %2138 = vmatpush.bf16.msra.mxu0 %v2123
    %2139 = vmatpush.bf16.msra.mxu0 %v2122
    %2140 = vmatpush.bf16.msra.mxu0 %v2121
    %2141 = vmatpush.bf16.msra.mxu0 %v2120
    %2142 = vmatpush.bf16.msra.mxu0 %v2119
    %2143 = vmatmul.bf16.gmra.mxu0 %v2079
    %v2144 = vpop.f32.mrf.mxu0
    %v2145 = vadd.f32 0.0, %v2144
    %v2146 = vpop.f32.mrf.mxu0
    %v2147 = vadd.f32 0.0, %v2146
    %2148 = vmatmul.bf16.gmra.mxu0 %v2080
    %v2149 = vpop.f32.mrf.mxu0
    %v2150 = vadd.f32 0.0, %v2149
    %v2151 = vpop.f32.mrf.mxu0
    %v2152 = vadd.f32 0.0, %v2151
    %2153 = vmatmul.bf16.gmra.mxu0 %v2081
    %v2154 = vpop.f32.mrf.mxu0
    %v2155 = vadd.f32 0.0, %v2154
    %v2156 = vpop.f32.mrf.mxu0
    %v2157 = vadd.f32 0.0, %v2156
    %2158 = vmatmul.bf16.gmra.mxu0 %v2082
    %v2159 = vpop.f32.mrf.mxu0
    %v2160 = vadd.f32 0.0, %v2159
    %v2161 = vpop.f32.mrf.mxu0
    %v2162 = vadd.f32 0.0, %v2161
    %2163 = vdwg.mxu0
    %v2164 = vadd.f32 %v2055, %v2145
    %v2165 = vadd.f32 %v2056, %v2147
    %v2166 = vadd.f32 %v2057, %v2150
    %v2167 = vadd.f32 %v2058, %v2152
    %v2168 = vadd.f32 %v2059, %v2155
    %v2169 = vadd.f32 %v2060, %v2157
    %v2170 = vadd.f32 %v2061, %v2160
    %v2171 = vadd.f32 %v2062, %v2162
    %v2172 = vld [vmem:[#allocation2 + $0x2c] sm:$0xc]
    %v2173 = vld [vmem:[#allocation2 + $0x30] sm:$0xf]
    %v2174 = vld [vmem:[#allocation2 + $0x34] sm:$0xf]
    %v2175 = vld [vmem:[#allocation2 + $0x38] sm:$0xf]
    %v2176 = vld [vmem:[#allocation2 + $0x3c] sm:$0xf]
    %v2177 = vld [vmem:[#allocation2 + $0x40] sm:$0xf]
    %v2178 = vld [vmem:[#allocation2 + $0x44] sm:$0xf]
    %v2179 = vld [vmem:[#allocation2 + $0x48] sm:$0xf]
    %v2180 = vld [vmem:[#allocation2 + $0x4c] sm:$0x3]
    %v2181 = vld [vmem:[#allocation4 + $0x180] sm:$0xf]
    %v2182 = vld [vmem:[#allocation4 + $0x184] sm:$0xf]
    %v2183 = vld [vmem:[#allocation4 + $0x188] sm:$0xf]
    %v2184 = vld [vmem:[#allocation4 + $0x18c] sm:$0xf]
    %v2185 = vld [vmem:[#allocation4 + $0x190] sm:$0xf]
    %v2186 = vld [vmem:[#allocation4 + $0x194] sm:$0xf]
    %v2187 = vld [vmem:[#allocation4 + $0x198] sm:$0xf]
    %v2188 = vld [vmem:[#allocation4 + $0x19c] sm:$0xf]
    %v2189 = vld [vmem:[#allocation4 + $0x1a0] sm:$0xf]
    %v2190 = vld [vmem:[#allocation4 + $0x1a4] sm:$0xf]
    %v2191 = vld [vmem:[#allocation4 + $0x1a8] sm:$0xf]
    %v2192 = vld [vmem:[#allocation4 + $0x1ac] sm:$0xf]
    %v2193 = vld [vmem:[#allocation4 + $0x1b0] sm:$0xf]
    %v2194 = vld [vmem:[#allocation4 + $0x1b4] sm:$0xf]
    %v2195 = vld [vmem:[#allocation4 + $0x1b8] sm:$0xf]
    %v2196 = vld [vmem:[#allocation4 + $0x1bc] sm:$0xf]
    %v2206 = vunpack.c.l.b16 %v2172
    %v2207 = vunpack.c.l.b16 %v2173
    %v2208 = vunpack.c.l.b16 %v2174
    %v2209 = vunpack.c.l.b16 %v2175
    %v2210 = vunpack.c.l.b16 %v2176
    %v2211 = vunpack.c.l.b16 %v2177
    %v2212 = vunpack.c.l.b16 %v2178
    %v2213 = vunpack.c.l.b16 %v2179
    %v2214 = vunpack.c.l.b16 %v2180
    %v2215 = vpack.c.b16 %v2207, %v2206
    %v2216 = vpack.c.b16 %v2209, %v2208
    %v2217 = vpack.c.b16 %v2211, %v2210
    %v2218 = vpack.c.b16 %v2213, %v2212
    %v2219 = vpack.c.b16 %v2214, %v2214
    %v2220 = vrot.slane %v2215, 2
    %v2221 = vrot.slane %v2216, 2
    %v2222 = vsel %vm965, %v2220, %v2221
    %v2223 = vrot.slane %v2217, 2
    %v2224 = vsel %vm965, %v2221, %v2223
    %v2225 = vrot.slane %v2218, 2
    %v2226 = vsel %vm965, %v2223, %v2225
    %v2227 = vrot.slane %v2219, 2
    %v2228 = vsel %vm965, %v2225, %v2227
    %v2249 = vunpack.c.l.b16 %v2181
    %v2250 = vunpack.c.l.b16 %v2182
    %v2251 = vunpack.c.l.b16 %v2183
    %v2252 = vunpack.c.l.b16 %v2184
    %v2253 = vunpack.c.l.b16 %v2185
    %v2254 = vunpack.c.l.b16 %v2186
    %v2255 = vunpack.c.l.b16 %v2187
    %v2256 = vunpack.c.l.b16 %v2188
    %v2257 = vunpack.c.l.b16 %v2189
    %v2258 = vunpack.c.l.b16 %v2190
    %v2259 = vunpack.c.l.b16 %v2191
    %v2260 = vunpack.c.l.b16 %v2192
    %v2261 = vunpack.c.l.b16 %v2193
    %v2262 = vunpack.c.l.b16 %v2194
    %v2263 = vunpack.c.l.b16 %v2195
    %v2264 = vunpack.c.l.b16 %v2196
    %v2265 = vpack.c.b16 %v2250, %v2249
    %v2266 = vpack.c.b16 %v2252, %v2251
    %v2267 = vpack.c.b16 %v2254, %v2253
    %v2268 = vpack.c.b16 %v2256, %v2255
    %v2269 = vpack.c.b16 %v2258, %v2257
    %v2270 = vpack.c.b16 %v2260, %v2259
    %v2271 = vpack.c.b16 %v2262, %v2261
    %v2272 = vpack.c.b16 %v2264, %v2263
    %2281 = vmatpush.bf16.msra.mxu0 %v2272
    %2282 = vmatpush.bf16.msra.mxu0 %v2271
    %2283 = vmatpush.bf16.msra.mxu0 %v2270
    %2284 = vmatpush.bf16.msra.mxu0 %v2269
    %2285 = vmatpush.bf16.msra.mxu0 %v2268
    %2286 = vmatpush.bf16.msra.mxu0 %v2267
    %2287 = vmatpush.bf16.msra.mxu0 %v2266
    %2288 = vmatpush.bf16.msra.mxu0 %v2265
    %2289 = vmatmul.bf16.gmra.mxu0 %v2222
    %v2290 = vpop.f32.mrf.mxu0
    %v2291 = vadd.f32 0.0, %v2290
    %v2292 = vpop.f32.mrf.mxu0
    %v2293 = vadd.f32 0.0, %v2292
    %2294 = vmatmul.bf16.gmra.mxu0 %v2224
    %v2295 = vpop.f32.mrf.mxu0
    %v2296 = vadd.f32 0.0, %v2295
    %v2297 = vpop.f32.mrf.mxu0
    %v2298 = vadd.f32 0.0, %v2297
    %2299 = vmatmul.bf16.gmra.mxu0 %v2226
    %v2300 = vpop.f32.mrf.mxu0
    %v2301 = vadd.f32 0.0, %v2300
    %v2302 = vpop.f32.mrf.mxu0
    %v2303 = vadd.f32 0.0, %v2302
    %2304 = vmatmul.bf16.gmra.mxu0 %v2228
    %v2305 = vpop.f32.mrf.mxu0
    %v2306 = vadd.f32 0.0, %v2305
    %v2307 = vpop.f32.mrf.mxu0
    %v2308 = vadd.f32 0.0, %v2307
    %2309 = vdwg.mxu0
    %v2310 = vadd.f32 %v2164, %v2291
    %v2311 = vadd.f32 %v2165, %v2293
    %v2312 = vadd.f32 %v2166, %v2296
    %v2313 = vadd.f32 %v2167, %v2298
    %v2314 = vadd.f32 %v2168, %v2301
    %v2315 = vadd.f32 %v2169, %v2303
    %v2316 = vadd.f32 %v2170, %v2306
    %v2317 = vadd.f32 %v2171, %v2308
    %v2318 = vld [vmem:[#allocation2 + $0x4c] sm:$0x7]
    %v2319 = vld [vmem:[#allocation4 + $0x1c0] sm:$0xf]
    %v2320 = vld [vmem:[#allocation4 + $0x1c4] sm:$0xf]
    %v2321 = vld [vmem:[#allocation4 + $0x1c8] sm:$0xf]
    %v2322 = vld [vmem:[#allocation4 + $0x1cc] sm:$0xf]
    %v2323 = vld [vmem:[#allocation4 + $0x1d0] sm:$0xf]
    %v2324 = vld [vmem:[#allocation4 + $0x1d4] sm:$0xf]
    %v2325 = vld [vmem:[#allocation4 + $0x1d8] sm:$0xf]
    %v2326 = vld [vmem:[#allocation4 + $0x1dc] sm:$0xf]
    %v2327 = vld [vmem:[#allocation4 + $0x1e0] sm:$0xf]
    %v2328 = vld [vmem:[#allocation4 + $0x1e4] sm:$0xf]
    %v2329 = vld [vmem:[#allocation4 + $0x1e8] sm:$0xf]
    %v2330 = vld [vmem:[#allocation4 + $0x1ec] sm:$0xf]
    %v2331 = vld [vmem:[#allocation4 + $0x1f0] sm:$0xf]
    %v2332 = vld [vmem:[#allocation4 + $0x1f4] sm:$0xf]
    %v2333 = vld [vmem:[#allocation4 + $0x1f8] sm:$0xf]
    %v2334 = vld [vmem:[#allocation4 + $0x1fc] sm:$0xf]
    %v2336 = vunpack.c.l.b16 %v2318
    %v2337 = vpack.c.b16 %v2336, %v2336
    %v2339 = vshrl.u32 %v2215, 16
    %v2341 = vrot.slane %v2339, 2
    %v2342 = vshll.u32 %v2215, 16
    %v2344 = vrot.slane %v2342, 3
    %v2345 = vor.u32 %v2341, %v2344
    %v2347 = vshrl.u32 %v2216, 16
    %v2349 = vrot.slane %v2347, 2
    %v2350 = vshll.u32 %v2216, 16
    %v2352 = vrot.slane %v2350, 3
    %v2353 = vor.u32 %v2349, %v2352
    %v2354 = vsel %vm1084, %v2345, %v2353
    %v2356 = vshrl.u32 %v2217, 16
    %v2358 = vrot.slane %v2356, 2
    %v2359 = vshll.u32 %v2217, 16
    %v2361 = vrot.slane %v2359, 3
    %v2362 = vor.u32 %v2358, %v2361
    %v2363 = vsel %vm1084, %v2353, %v2362
    %v2365 = vshrl.u32 %v2218, 16
    %v2367 = vrot.slane %v2365, 2
    %v2368 = vshll.u32 %v2218, 16
    %v2370 = vrot.slane %v2368, 3
    %v2371 = vor.u32 %v2367, %v2370
    %v2372 = vsel %vm1084, %v2362, %v2371
    %v2374 = vshrl.u32 %v2337, 16
    %v2376 = vrot.slane %v2374, 2
    %v2377 = vshll.u32 %v2337, 16
    %v2379 = vrot.slane %v2377, 3
    %v2380 = vor.u32 %v2376, %v2379
    %v2381 = vsel %vm1084, %v2371, %v2380
    %v2402 = vunpack.c.l.b16 %v2319
    %v2403 = vunpack.c.l.b16 %v2320
    %v2404 = vunpack.c.l.b16 %v2321
    %v2405 = vunpack.c.l.b16 %v2322
    %v2406 = vunpack.c.l.b16 %v2323
    %v2407 = vunpack.c.l.b16 %v2324
    %v2408 = vunpack.c.l.b16 %v2325
    %v2409 = vunpack.c.l.b16 %v2326
    %v2410 = vunpack.c.l.b16 %v2327
    %v2411 = vunpack.c.l.b16 %v2328
    %v2412 = vunpack.c.l.b16 %v2329
    %v2413 = vunpack.c.l.b16 %v2330
    %v2414 = vunpack.c.l.b16 %v2331
    %v2415 = vunpack.c.l.b16 %v2332
    %v2416 = vunpack.c.l.b16 %v2333
    %v2417 = vunpack.c.l.b16 %v2334
    %v2418 = vpack.c.b16 %v2403, %v2402
    %v2419 = vpack.c.b16 %v2405, %v2404
    %v2420 = vpack.c.b16 %v2407, %v2406
    %v2421 = vpack.c.b16 %v2409, %v2408
    %v2422 = vpack.c.b16 %v2411, %v2410
    %v2423 = vpack.c.b16 %v2413, %v2412
    %v2424 = vpack.c.b16 %v2415, %v2414
    %v2425 = vpack.c.b16 %v2417, %v2416
    %2434 = vmatpush.bf16.msra.mxu0 %v2425
    %2435 = vmatpush.bf16.msra.mxu0 %v2424
    %2436 = vmatpush.bf16.msra.mxu0 %v2423
    %2437 = vmatpush.bf16.msra.mxu0 %v2422
    %2438 = vmatpush.bf16.msra.mxu0 %v2421
    %2439 = vmatpush.bf16.msra.mxu0 %v2420
    %2440 = vmatpush.bf16.msra.mxu0 %v2419
    %2441 = vmatpush.bf16.msra.mxu0 %v2418
    %2442 = vmatmul.bf16.gmra.mxu0 %v2354
    %v2443 = vpop.f32.mrf.mxu0
    %v2444 = vadd.f32 0.0, %v2443
    %v2445 = vpop.f32.mrf.mxu0
    %v2446 = vadd.f32 0.0, %v2445
    %2447 = vmatmul.bf16.gmra.mxu0 %v2363
    %v2448 = vpop.f32.mrf.mxu0
    %v2449 = vadd.f32 0.0, %v2448
    %v2450 = vpop.f32.mrf.mxu0
    %v2451 = vadd.f32 0.0, %v2450
    %2452 = vmatmul.bf16.gmra.mxu0 %v2372
    %v2453 = vpop.f32.mrf.mxu0
    %v2454 = vadd.f32 0.0, %v2453
    %v2455 = vpop.f32.mrf.mxu0
    %v2456 = vadd.f32 0.0, %v2455
    %2457 = vmatmul.bf16.gmra.mxu0 %v2381
    %v2458 = vpop.f32.mrf.mxu0
    %v2459 = vadd.f32 0.0, %v2458
    %v2460 = vpop.f32.mrf.mxu0
    %v2461 = vadd.f32 0.0, %v2460
    %2462 = vdwg.mxu0
    %v2463 = vadd.f32 %v2310, %v2444
    %v2464 = vadd.f32 %v2311, %v2446
    %v2465 = vadd.f32 %v2312, %v2449
    %v2466 = vadd.f32 %v2313, %v2451
    %v2467 = vadd.f32 %v2314, %v2454
    %v2468 = vadd.f32 %v2315, %v2456
    %v2469 = vadd.f32 %v2316, %v2459
    %v2470 = vadd.f32 %v2317, %v2461
    %v2471 = vld [vmem:[#allocation2 + $0x2c] sm:$0x8]
    %v2472 = vld [vmem:[#allocation4 + $0x200] sm:$0xf]
    %v2473 = vld [vmem:[#allocation4 + $0x204] sm:$0xf]
    %v2474 = vld [vmem:[#allocation4 + $0x208] sm:$0xf]
    %v2475 = vld [vmem:[#allocation4 + $0x20c] sm:$0xf]
    %v2476 = vld [vmem:[#allocation4 + $0x210] sm:$0xf]
    %v2477 = vld [vmem:[#allocation4 + $0x214] sm:$0xf]
    %v2478 = vld [vmem:[#allocation4 + $0x218] sm:$0xf]
    %v2479 = vld [vmem:[#allocation4 + $0x21c] sm:$0xf]
    %v2480 = vld [vmem:[#allocation4 + $0x220] sm:$0xf]
    %v2481 = vld [vmem:[#allocation4 + $0x224] sm:$0xf]
    %v2482 = vld [vmem:[#allocation4 + $0x228] sm:$0xf]
    %v2483 = vld [vmem:[#allocation4 + $0x22c] sm:$0xf]
    %v2484 = vld [vmem:[#allocation4 + $0x230] sm:$0xf]
    %v2485 = vld [vmem:[#allocation4 + $0x234] sm:$0xf]
    %v2486 = vld [vmem:[#allocation4 + $0x238] sm:$0xf]
    %v2487 = vld [vmem:[#allocation4 + $0x23c] sm:$0xf]
    %v2489 = vunpack.c.l.b16 %v2471
    %v2490 = vpack.c.b16 %v2207, %v2489
    %v2491 = vrot.slane %v2490, 3
    %v2492 = vrot.slane %v2216, 3
    %v2493 = vsel %vm555, %v2491, %v2492
    %v2494 = vrot.slane %v2217, 3
    %v2495 = vsel %vm555, %v2492, %v2494
    %v2496 = vrot.slane %v2218, 3
    %v2497 = vsel %vm555, %v2494, %v2496
    %v2498 = vrot.slane %v2337, 3
    %v2499 = vsel %vm555, %v2496, %v2498
    %v2520 = vunpack.c.l.b16 %v2472
    %v2521 = vunpack.c.l.b16 %v2473
    %v2522 = vunpack.c.l.b16 %v2474
    %v2523 = vunpack.c.l.b16 %v2475
    %v2524 = vunpack.c.l.b16 %v2476
    %v2525 = vunpack.c.l.b16 %v2477
    %v2526 = vunpack.c.l.b16 %v2478
    %v2527 = vunpack.c.l.b16 %v2479
    %v2528 = vunpack.c.l.b16 %v2480
    %v2529 = vunpack.c.l.b16 %v2481
    %v2530 = vunpack.c.l.b16 %v2482
    %v2531 = vunpack.c.l.b16 %v2483
    %v2532 = vunpack.c.l.b16 %v2484
    %v2533 = vunpack.c.l.b16 %v2485
    %v2534 = vunpack.c.l.b16 %v2486
    %v2535 = vunpack.c.l.b16 %v2487
    %v2536 = vpack.c.b16 %v2521, %v2520
    %v2537 = vpack.c.b16 %v2523, %v2522
    %v2538 = vpack.c.b16 %v2525, %v2524
    %v2539 = vpack.c.b16 %v2527, %v2526
    %v2540 = vpack.c.b16 %v2529, %v2528
    %v2541 = vpack.c.b16 %v2531, %v2530
    %v2542 = vpack.c.b16 %v2533, %v2532
    %v2543 = vpack.c.b16 %v2535, %v2534
    %2552 = vmatpush.bf16.msra.mxu0 %v2543
    %2553 = vmatpush.bf16.msra.mxu0 %v2542
    %2554 = vmatpush.bf16.msra.mxu0 %v2541
    %2555 = vmatpush.bf16.msra.mxu0 %v2540
    %2556 = vmatpush.bf16.msra.mxu0 %v2539
    %2557 = vmatpush.bf16.msra.mxu0 %v2538
    %2558 = vmatpush.bf16.msra.mxu0 %v2537
    %2559 = vmatpush.bf16.msra.mxu0 %v2536
    %2560 = vmatmul.bf16.gmra.mxu0 %v2493
    %v2561 = vpop.f32.mrf.mxu0
    %v2562 = vadd.f32 0.0, %v2561
    %v2563 = vpop.f32.mrf.mxu0
    %v2564 = vadd.f32 0.0, %v2563
    %2565 = vmatmul.bf16.gmra.mxu0 %v2495
    %v2566 = vpop.f32.mrf.mxu0
    %v2567 = vadd.f32 0.0, %v2566
    %v2568 = vpop.f32.mrf.mxu0
    %v2569 = vadd.f32 0.0, %v2568
    %2570 = vmatmul.bf16.gmra.mxu0 %v2497
    %v2571 = vpop.f32.mrf.mxu0
    %v2572 = vadd.f32 0.0, %v2571
    %v2573 = vpop.f32.mrf.mxu0
    %v2574 = vadd.f32 0.0, %v2573
    %2575 = vmatmul.bf16.gmra.mxu0 %v2499
    %v2576 = vpop.f32.mrf.mxu0
    %v2577 = vadd.f32 0.0, %v2576
    %v2578 = vpop.f32.mrf.mxu0
    %v2579 = vadd.f32 0.0, %v2578
    %2580 = vdwg.mxu0
    %v2581 = vadd.f32 %v2463, %v2562
    %v2582 = vadd.f32 %v2464, %v2564
    %v2583 = vadd.f32 %v2465, %v2567
    %v2584 = vadd.f32 %v2466, %v2569
    %v2585 = vadd.f32 %v2467, %v2572
    %v2586 = vadd.f32 %v2468, %v2574
    %v2587 = vadd.f32 %v2469, %v2577
    %v2588 = vadd.f32 %v2470, %v2579
    %v2589 = vld [vmem:[#allocation7] sm:$0x1]
    %v2590 = vperm.slane %v2589, 0
    %v2591 = vmul.f32 %v2581, %v2590
    %v2592 = vmul.f32 %v2582, %v2590
    %v2593 = vmul.f32 %v2583, %v2590
    %v2594 = vmul.f32 %v2584, %v2590
    %v2595 = vmul.f32 %v2585, %v2590
    %v2596 = vmul.f32 %v2586, %v2590
    %v2597 = vmul.f32 %v2587, %v2590
    %v2598 = vmul.f32 %v2588, %v2590
    %v2599 = vld [vmem:[#allocation7 + $0x1] sm:$0x1]
    %v2600 = vperm.slane %v2599, 0
    %v2601 = vadd.f32 %v2591, %v2600
    %v2602 = vadd.f32 %v2592, %v2600
    %v2603 = vadd.f32 %v2593, %v2600
    %v2604 = vadd.f32 %v2594, %v2600
    %v2605 = vadd.f32 %v2595, %v2600
    %v2606 = vadd.f32 %v2596, %v2600
    %v2607 = vadd.f32 %v2597, %v2600
    %v2608 = vadd.f32 %v2598, %v2600
    %v2609 = vmax.f32 %v2601, 0.0
    %v2610 = vmax.f32 %v2602, 0.0
    %v2611 = vmax.f32 %v2603, 0.0
    %v2612 = vmax.f32 %v2604, 0.0
    %v2613 = vmax.f32 %v2605, 0.0
    %v2614 = vmax.f32 %v2606, 0.0
    %v2615 = vmax.f32 %v2607, 0.0
    %v2616 = vmax.f32 %v2608, 0.0
    %v2617 = vpack.c.bf16 %v2609, %v2609
    %v2618 = vpack.c.bf16 %v2610, %v2610
    %v2619 = vpack.c.bf16 %v2611, %v2611
    %v2620 = vpack.c.bf16 %v2612, %v2612
    %v2621 = vpack.c.bf16 %v2613, %v2613
    %v2622 = vpack.c.bf16 %v2614, %v2614
    %v2623 = vpack.c.bf16 %v2615, %v2615
    %v2624 = vpack.c.bf16 %v2616, %v2616
    %2625 = vst [vmem:[#allocation9 + $0x20] sm:$0xf] %v2617
    %2626 = vst [vmem:[#allocation9 + $0x24] sm:$0xf] %v2618
    %2627 = vst [vmem:[#allocation9 + $0x28] sm:$0xf] %v2619
    %2628 = vst [vmem:[#allocation9 + $0x2c] sm:$0xf] %v2620
    %2629 = vst [vmem:[#allocation9 + $0x30] sm:$0xf] %v2621
    %2630 = vst [vmem:[#allocation9 + $0x34] sm:$0xf] %v2622
    %2631 = vst [vmem:[#allocation9 + $0x38] sm:$0xf] %v2623
    %2632 = vst [vmem:[#allocation9 + $0x3c] sm:$0xf] %v2624
    %s2633 = sshll.u32 %s1381, 4
    %2634 = dma.done %s87, %s2633
    %v2635 = vld [vmem:[#allocation2 + $0x40] sm:$0xf]
    %v2636 = vld [vmem:[#allocation2 + $0x44] sm:$0xf]
    %v2637 = vld [vmem:[#allocation2 + $0x48] sm:$0xf]
    %v2638 = vld [vmem:[#allocation2 + $0x4c] sm:$0xf]
    %v2639 = vld [vmem:[#allocation2 + $0x50] sm:$0xf]
    %v2640 = vld [vmem:[#allocation2 + $0x54] sm:$0xf]
    %v2641 = vld [vmem:[#allocation2 + $0x58] sm:$0xf]
    %v2642 = vld [vmem:[#allocation2 + $0x5c] sm:$0xf]
    %v2643 = vld [vmem:[#allocation4] sm:$0xf]
    %v2644 = vld [vmem:[#allocation4 + $0x4] sm:$0xf]
    %v2645 = vld [vmem:[#allocation4 + $0x8] sm:$0xf]
    %v2646 = vld [vmem:[#allocation4 + $0xc] sm:$0xf]
    %v2647 = vld [vmem:[#allocation4 + $0x10] sm:$0xf]
    %v2648 = vld [vmem:[#allocation4 + $0x14] sm:$0xf]
    %v2649 = vld [vmem:[#allocation4 + $0x18] sm:$0xf]
    %v2650 = vld [vmem:[#allocation4 + $0x1c] sm:$0xf]
    %v2651 = vld [vmem:[#allocation4 + $0x20] sm:$0xf]
    %v2652 = vld [vmem:[#allocation4 + $0x24] sm:$0xf]
    %v2653 = vld [vmem:[#allocation4 + $0x28] sm:$0xf]
    %v2654 = vld [vmem:[#allocation4 + $0x2c] sm:$0xf]
    %v2655 = vld [vmem:[#allocation4 + $0x30] sm:$0xf]
    %v2656 = vld [vmem:[#allocation4 + $0x34] sm:$0xf]
    %v2657 = vld [vmem:[#allocation4 + $0x38] sm:$0xf]
    %v2658 = vld [vmem:[#allocation4 + $0x3c] sm:$0xf]
    %v2659 = vld [vmem:[#allocation2 + $0x60] sm:$0x1]
    %v2660 = vld [vmem:[#allocation4 + $0x40] sm:$0xf]
    %v2661 = vld [vmem:[#allocation4 + $0x44] sm:$0xf]
    %v2662 = vld [vmem:[#allocation4 + $0x48] sm:$0xf]
    %v2663 = vld [vmem:[#allocation4 + $0x4c] sm:$0xf]
    %v2664 = vld [vmem:[#allocation4 + $0x50] sm:$0xf]
    %v2665 = vld [vmem:[#allocation4 + $0x54] sm:$0xf]
    %v2666 = vld [vmem:[#allocation4 + $0x58] sm:$0xf]
    %v2667 = vld [vmem:[#allocation4 + $0x5c] sm:$0xf]
    %v2668 = vld [vmem:[#allocation4 + $0x60] sm:$0xf]
    %v2669 = vld [vmem:[#allocation4 + $0x64] sm:$0xf]
    %v2670 = vld [vmem:[#allocation4 + $0x68] sm:$0xf]
    %v2671 = vld [vmem:[#allocation4 + $0x6c] sm:$0xf]
    %v2672 = vld [vmem:[#allocation4 + $0x70] sm:$0xf]
    %v2673 = vld [vmem:[#allocation4 + $0x74] sm:$0xf]
    %v2674 = vld [vmem:[#allocation4 + $0x78] sm:$0xf]
    %v2675 = vld [vmem:[#allocation4 + $0x7c] sm:$0xf]
    %v2685 = vunpack.c.l.b16 %v2635
    %v2686 = vunpack.c.l.b16 %v2636
    %v2687 = vunpack.c.l.b16 %v2637
    %v2688 = vunpack.c.l.b16 %v2638
    %v2689 = vunpack.c.l.b16 %v2639
    %v2690 = vunpack.c.l.b16 %v2640
    %v2691 = vunpack.c.l.b16 %v2641
    %v2692 = vunpack.c.l.b16 %v2642
    %v2693 = vunpack.c.l.b16 %v2659
    %v2694 = vpack.c.b16 %v2686, %v2685
    %v2695 = vpack.c.b16 %v2688, %v2687
    %v2696 = vpack.c.b16 %v2690, %v2689
    %v2697 = vpack.c.b16 %v2692, %v2691
    %v2698 = vpack.c.b16 %v2693, %v2693
    %v2700 = vshrl.u32 %v2694, 16
    %v2702 = vshll.u32 %v2694, 16
    %v2704 = vrot.slane %v2702, 1
    %v2705 = vor.u32 %v2700, %v2704
    %v2707 = vshll.u32 %v2695, 16
    %v2709 = vrot.slane %v2707, 1
    %v2710 = vsel %vm189, %v2705, %v2709
    %v2711 = vshrl.u32 %v2695, 16
    %v2713 = vor.u32 %v2711, %v2709
    %v2715 = vshll.u32 %v2696, 16
    %v2717 = vrot.slane %v2715, 1
    %v2718 = vsel %vm189, %v2713, %v2717
    %v2719 = vshrl.u32 %v2696, 16
    %v2721 = vor.u32 %v2719, %v2717
    %v2723 = vshll.u32 %v2697, 16
    %v2725 = vrot.slane %v2723, 1
    %v2726 = vsel %vm189, %v2721, %v2725
    %v2727 = vshrl.u32 %v2697, 16
    %v2729 = vor.u32 %v2727, %v2725
    %v2731 = vshll.u32 %v2698, 16
    %v2733 = vrot.slane %v2731, 1
    %v2734 = vsel %vm189, %v2729, %v2733
    %v2755 = vunpack.c.l.b16 %v2660
    %v2756 = vunpack.c.l.b16 %v2661
    %v2757 = vunpack.c.l.b16 %v2662
    %v2758 = vunpack.c.l.b16 %v2663
    %v2759 = vunpack.c.l.b16 %v2664
    %v2760 = vunpack.c.l.b16 %v2665
    %v2761 = vunpack.c.l.b16 %v2666
    %v2762 = vunpack.c.l.b16 %v2667
    %v2763 = vunpack.c.l.b16 %v2668
    %v2764 = vunpack.c.l.b16 %v2669
    %v2765 = vunpack.c.l.b16 %v2670
    %v2766 = vunpack.c.l.b16 %v2671
    %v2767 = vunpack.c.l.b16 %v2672
    %v2768 = vunpack.c.l.b16 %v2673
    %v2769 = vunpack.c.l.b16 %v2674
    %v2770 = vunpack.c.l.b16 %v2675
    %v2771 = vpack.c.b16 %v2756, %v2755
    %v2772 = vpack.c.b16 %v2758, %v2757
    %v2773 = vpack.c.b16 %v2760, %v2759
    %v2774 = vpack.c.b16 %v2762, %v2761
    %v2775 = vpack.c.b16 %v2764, %v2763
    %v2776 = vpack.c.b16 %v2766, %v2765
    %v2777 = vpack.c.b16 %v2768, %v2767
    %v2778 = vpack.c.b16 %v2770, %v2769
    %2787 = vmatpush.bf16.msra.mxu0 %v2778
    %2788 = vmatpush.bf16.msra.mxu0 %v2777
    %2789 = vmatpush.bf16.msra.mxu0 %v2776
    %2790 = vmatpush.bf16.msra.mxu0 %v2775
    %2791 = vmatpush.bf16.msra.mxu0 %v2774
    %2792 = vmatpush.bf16.msra.mxu0 %v2773
    %2793 = vmatpush.bf16.msra.mxu0 %v2772
    %2794 = vmatpush.bf16.msra.mxu0 %v2771
    %2795 = vmatmul.bf16.gmra.mxu0 %v2710
    %v2796 = vpop.f32.mrf.mxu0
    %v2797 = vadd.f32 0.0, %v2796
    %v2798 = vpop.f32.mrf.mxu0
    %v2799 = vadd.f32 0.0, %v2798
    %2800 = vmatmul.bf16.gmra.mxu0 %v2718
    %v2801 = vpop.f32.mrf.mxu0
    %v2802 = vadd.f32 0.0, %v2801
    %v2803 = vpop.f32.mrf.mxu0
    %v2804 = vadd.f32 0.0, %v2803
    %2805 = vmatmul.bf16.gmra.mxu0 %v2726
    %v2806 = vpop.f32.mrf.mxu0
    %v2807 = vadd.f32 0.0, %v2806
    %v2808 = vpop.f32.mrf.mxu0
    %v2809 = vadd.f32 0.0, %v2808
    %2810 = vmatmul.bf16.gmra.mxu0 %v2734
    %v2811 = vpop.f32.mrf.mxu0
    %v2812 = vadd.f32 0.0, %v2811
    %v2813 = vpop.f32.mrf.mxu0
    %v2814 = vadd.f32 0.0, %v2813
    %2815 = vdwg.mxu0
    %v2836 = vunpack.c.l.b16 %v2643
    %v2837 = vunpack.c.l.b16 %v2644
    %v2838 = vunpack.c.l.b16 %v2645
    %v2839 = vunpack.c.l.b16 %v2646
    %v2840 = vunpack.c.l.b16 %v2647
    %v2841 = vunpack.c.l.b16 %v2648
    %v2842 = vunpack.c.l.b16 %v2649
    %v2843 = vunpack.c.l.b16 %v2650
    %v2844 = vunpack.c.l.b16 %v2651
    %v2845 = vunpack.c.l.b16 %v2652
    %v2846 = vunpack.c.l.b16 %v2653
    %v2847 = vunpack.c.l.b16 %v2654
    %v2848 = vunpack.c.l.b16 %v2655
    %v2849 = vunpack.c.l.b16 %v2656
    %v2850 = vunpack.c.l.b16 %v2657
    %v2851 = vunpack.c.l.b16 %v2658
    %v2852 = vpack.c.b16 %v2837, %v2836
    %v2853 = vpack.c.b16 %v2839, %v2838
    %v2854 = vpack.c.b16 %v2841, %v2840
    %v2855 = vpack.c.b16 %v2843, %v2842
    %v2856 = vpack.c.b16 %v2845, %v2844
    %v2857 = vpack.c.b16 %v2847, %v2846
    %v2858 = vpack.c.b16 %v2849, %v2848
    %v2859 = vpack.c.b16 %v2851, %v2850
    %2868 = vmatpush.bf16.msra.mxu0 %v2859
    %2869 = vmatpush.bf16.msra.mxu0 %v2858
    %2870 = vmatpush.bf16.msra.mxu0 %v2857
    %2871 = vmatpush.bf16.msra.mxu0 %v2856
    %2872 = vmatpush.bf16.msra.mxu0 %v2855
    %2873 = vmatpush.bf16.msra.mxu0 %v2854
    %2874 = vmatpush.bf16.msra.mxu0 %v2853
    %2875 = vmatpush.bf16.msra.mxu0 %v2852
    %2876 = vmatmul.bf16.gmra.mxu0 %v2694
    %v2877 = vpop.f32.mrf.mxu0
    %v2878 = vadd.f32 %v2797, %v2877
    %v2879 = vpop.f32.mrf.mxu0
    %v2880 = vadd.f32 %v2799, %v2879
    %2881 = vmatmul.bf16.gmra.mxu0 %v2695
    %v2882 = vpop.f32.mrf.mxu0
    %v2883 = vadd.f32 %v2802, %v2882
    %v2884 = vpop.f32.mrf.mxu0
    %v2885 = vadd.f32 %v2804, %v2884
    %2886 = vmatmul.bf16.gmra.mxu0 %v2696
    %v2887 = vpop.f32.mrf.mxu0
    %v2888 = vadd.f32 %v2807, %v2887
    %v2889 = vpop.f32.mrf.mxu0
    %v2890 = vadd.f32 %v2809, %v2889
    %2891 = vmatmul.bf16.gmra.mxu0 %v2697
    %v2892 = vpop.f32.mrf.mxu0
    %v2893 = vadd.f32 %v2812, %v2892
    %v2894 = vpop.f32.mrf.mxu0
    %v2895 = vadd.f32 %v2814, %v2894
    %2896 = vdwg.mxu0
    %v2897 = vld [vmem:[#allocation2 + $0x40] sm:$0xe]
    %v2898 = vld [vmem:[#allocation4 + $0x80] sm:$0xf]
    %v2899 = vld [vmem:[#allocation4 + $0x84] sm:$0xf]
    %v2900 = vld [vmem:[#allocation4 + $0x88] sm:$0xf]
    %v2901 = vld [vmem:[#allocation4 + $0x8c] sm:$0xf]
    %v2902 = vld [vmem:[#allocation4 + $0x90] sm:$0xf]
    %v2903 = vld [vmem:[#allocation4 + $0x94] sm:$0xf]
    %v2904 = vld [vmem:[#allocation4 + $0x98] sm:$0xf]
    %v2905 = vld [vmem:[#allocation4 + $0x9c] sm:$0xf]
    %v2906 = vld [vmem:[#allocation4 + $0xa0] sm:$0xf]
    %v2907 = vld [vmem:[#allocation4 + $0xa4] sm:$0xf]
    %v2908 = vld [vmem:[#allocation4 + $0xa8] sm:$0xf]
    %v2909 = vld [vmem:[#allocation4 + $0xac] sm:$0xf]
    %v2910 = vld [vmem:[#allocation4 + $0xb0] sm:$0xf]
    %v2911 = vld [vmem:[#allocation4 + $0xb4] sm:$0xf]
    %v2912 = vld [vmem:[#allocation4 + $0xb8] sm:$0xf]
    %v2913 = vld [vmem:[#allocation4 + $0xbc] sm:$0xf]
    %v2915 = vunpack.c.l.b16 %v2897
    %v2916 = vpack.c.b16 %v2686, %v2915
    %v2917 = vrot.slane %v2916, 1
    %v2918 = vrot.slane %v2695, 1
    %v2919 = vsel %vm408, %v2917, %v2918
    %v2920 = vrot.slane %v2696, 1
    %v2921 = vsel %vm408, %v2918, %v2920
    %v2922 = vrot.slane %v2697, 1
    %v2923 = vsel %vm408, %v2920, %v2922
    %v2924 = vrot.slane %v2698, 1
    %v2925 = vsel %vm408, %v2922, %v2924
    %v2946 = vunpack.c.l.b16 %v2898
    %v2947 = vunpack.c.l.b16 %v2899
    %v2948 = vunpack.c.l.b16 %v2900
    %v2949 = vunpack.c.l.b16 %v2901
    %v2950 = vunpack.c.l.b16 %v2902
    %v2951 = vunpack.c.l.b16 %v2903
    %v2952 = vunpack.c.l.b16 %v2904
    %v2953 = vunpack.c.l.b16 %v2905
    %v2954 = vunpack.c.l.b16 %v2906
    %v2955 = vunpack.c.l.b16 %v2907
    %v2956 = vunpack.c.l.b16 %v2908
    %v2957 = vunpack.c.l.b16 %v2909
    %v2958 = vunpack.c.l.b16 %v2910
    %v2959 = vunpack.c.l.b16 %v2911
    %v2960 = vunpack.c.l.b16 %v2912
    %v2961 = vunpack.c.l.b16 %v2913
    %v2962 = vpack.c.b16 %v2947, %v2946
    %v2963 = vpack.c.b16 %v2949, %v2948
    %v2964 = vpack.c.b16 %v2951, %v2950
    %v2965 = vpack.c.b16 %v2953, %v2952
    %v2966 = vpack.c.b16 %v2955, %v2954
    %v2967 = vpack.c.b16 %v2957, %v2956
    %v2968 = vpack.c.b16 %v2959, %v2958
    %v2969 = vpack.c.b16 %v2961, %v2960
    %2978 = vmatpush.bf16.msra.mxu0 %v2969
    %2979 = vmatpush.bf16.msra.mxu0 %v2968
    %2980 = vmatpush.bf16.msra.mxu0 %v2967
    %2981 = vmatpush.bf16.msra.mxu0 %v2966
    %2982 = vmatpush.bf16.msra.mxu0 %v2965
    %2983 = vmatpush.bf16.msra.mxu0 %v2964
    %2984 = vmatpush.bf16.msra.mxu0 %v2963
    %2985 = vmatpush.bf16.msra.mxu0 %v2962
    %2986 = vmatmul.bf16.gmra.mxu0 %v2919
    %v2987 = vpop.f32.mrf.mxu0
    %v2988 = vadd.f32 0.0, %v2987
    %v2989 = vpop.f32.mrf.mxu0
    %v2990 = vadd.f32 0.0, %v2989
    %2991 = vmatmul.bf16.gmra.mxu0 %v2921
    %v2992 = vpop.f32.mrf.mxu0
    %v2993 = vadd.f32 0.0, %v2992
    %v2994 = vpop.f32.mrf.mxu0
    %v2995 = vadd.f32 0.0, %v2994
    %2996 = vmatmul.bf16.gmra.mxu0 %v2923
    %v2997 = vpop.f32.mrf.mxu0
    %v2998 = vadd.f32 0.0, %v2997
    %v2999 = vpop.f32.mrf.mxu0
    %v3000 = vadd.f32 0.0, %v2999
    %3001 = vmatmul.bf16.gmra.mxu0 %v2925
    %v3002 = vpop.f32.mrf.mxu0
    %v3003 = vadd.f32 0.0, %v3002
    %v3004 = vpop.f32.mrf.mxu0
    %v3005 = vadd.f32 0.0, %v3004
    %3006 = vdwg.mxu0
    %v3007 = vadd.f32 %v2878, %v2988
    %v3008 = vadd.f32 %v2880, %v2990
    %v3009 = vadd.f32 %v2883, %v2993
    %v3010 = vadd.f32 %v2885, %v2995
    %v3011 = vadd.f32 %v2888, %v2998
    %v3012 = vadd.f32 %v2890, %v3000
    %v3013 = vadd.f32 %v2893, %v3003
    %v3014 = vadd.f32 %v2895, %v3005
    %v3015 = vld [vmem:[#allocation2 + $0x44] sm:$0x8]
    %v3016 = vld [vmem:[#allocation2 + $0x48] sm:$0xf]
    %v3017 = vld [vmem:[#allocation2 + $0x4c] sm:$0xf]
    %v3018 = vld [vmem:[#allocation2 + $0x50] sm:$0xf]
    %v3019 = vld [vmem:[#allocation2 + $0x54] sm:$0xf]
    %v3020 = vld [vmem:[#allocation2 + $0x58] sm:$0xf]
    %v3021 = vld [vmem:[#allocation2 + $0x5c] sm:$0xf]
    %v3022 = vld [vmem:[#allocation2 + $0x60] sm:$0xf]
    %v3023 = vld [vmem:[#allocation2 + $0x64] sm:$0x7]
    %v3024 = vld [vmem:[#allocation4 + $0xc0] sm:$0xf]
    %v3025 = vld [vmem:[#allocation4 + $0xc4] sm:$0xf]
    %v3026 = vld [vmem:[#allocation4 + $0xc8] sm:$0xf]
    %v3027 = vld [vmem:[#allocation4 + $0xcc] sm:$0xf]
    %v3028 = vld [vmem:[#allocation4 + $0xd0] sm:$0xf]
    %v3029 = vld [vmem:[#allocation4 + $0xd4] sm:$0xf]
    %v3030 = vld [vmem:[#allocation4 + $0xd8] sm:$0xf]
    %v3031 = vld [vmem:[#allocation4 + $0xdc] sm:$0xf]
    %v3032 = vld [vmem:[#allocation4 + $0xe0] sm:$0xf]
    %v3033 = vld [vmem:[#allocation4 + $0xe4] sm:$0xf]
    %v3034 = vld [vmem:[#allocation4 + $0xe8] sm:$0xf]
    %v3035 = vld [vmem:[#allocation4 + $0xec] sm:$0xf]
    %v3036 = vld [vmem:[#allocation4 + $0xf0] sm:$0xf]
    %v3037 = vld [vmem:[#allocation4 + $0xf4] sm:$0xf]
    %v3038 = vld [vmem:[#allocation4 + $0xf8] sm:$0xf]
    %v3039 = vld [vmem:[#allocation4 + $0xfc] sm:$0xf]
    %v3049 = vunpack.c.l.b16 %v3015
    %v3050 = vunpack.c.l.b16 %v3016
    %v3051 = vunpack.c.l.b16 %v3017
    %v3052 = vunpack.c.l.b16 %v3018
    %v3053 = vunpack.c.l.b16 %v3019
    %v3054 = vunpack.c.l.b16 %v3020
    %v3055 = vunpack.c.l.b16 %v3021
    %v3056 = vunpack.c.l.b16 %v3022
    %v3057 = vunpack.c.l.b16 %v3023
    %v3058 = vpack.c.b16 %v3050, %v3049
    %v3059 = vpack.c.b16 %v3052, %v3051
    %v3060 = vpack.c.b16 %v3054, %v3053
    %v3061 = vpack.c.b16 %v3056, %v3055
    %v3062 = vpack.c.b16 %v3057, %v3057
    %v3063 = vrot.slane %v3058, 3
    %v3064 = vrot.slane %v3059, 3
    %v3065 = vsel %vm555, %v3063, %v3064
    %v3066 = vrot.slane %v3060, 3
    %v3067 = vsel %vm555, %v3064, %v3066
    %v3068 = vrot.slane %v3061, 3
    %v3069 = vsel %vm555, %v3066, %v3068
    %v3070 = vrot.slane %v3062, 3
    %v3071 = vsel %vm555, %v3068, %v3070
    %v3092 = vunpack.c.l.b16 %v3024
    %v3093 = vunpack.c.l.b16 %v3025
    %v3094 = vunpack.c.l.b16 %v3026
    %v3095 = vunpack.c.l.b16 %v3027
    %v3096 = vunpack.c.l.b16 %v3028
    %v3097 = vunpack.c.l.b16 %v3029
    %v3098 = vunpack.c.l.b16 %v3030
    %v3099 = vunpack.c.l.b16 %v3031
    %v3100 = vunpack.c.l.b16 %v3032
    %v3101 = vunpack.c.l.b16 %v3033
    %v3102 = vunpack.c.l.b16 %v3034
    %v3103 = vunpack.c.l.b16 %v3035
    %v3104 = vunpack.c.l.b16 %v3036
    %v3105 = vunpack.c.l.b16 %v3037
    %v3106 = vunpack.c.l.b16 %v3038
    %v3107 = vunpack.c.l.b16 %v3039
    %v3108 = vpack.c.b16 %v3093, %v3092
    %v3109 = vpack.c.b16 %v3095, %v3094
    %v3110 = vpack.c.b16 %v3097, %v3096
    %v3111 = vpack.c.b16 %v3099, %v3098
    %v3112 = vpack.c.b16 %v3101, %v3100
    %v3113 = vpack.c.b16 %v3103, %v3102
    %v3114 = vpack.c.b16 %v3105, %v3104
    %v3115 = vpack.c.b16 %v3107, %v3106
    %3124 = vmatpush.bf16.msra.mxu0 %v3115
    %3125 = vmatpush.bf16.msra.mxu0 %v3114
    %3126 = vmatpush.bf16.msra.mxu0 %v3113
    %3127 = vmatpush.bf16.msra.mxu0 %v3112
    %3128 = vmatpush.bf16.msra.mxu0 %v3111
    %3129 = vmatpush.bf16.msra.mxu0 %v3110
    %3130 = vmatpush.bf16.msra.mxu0 %v3109
    %3131 = vmatpush.bf16.msra.mxu0 %v3108
    %3132 = vmatmul.bf16.gmra.mxu0 %v3065
    %v3133 = vpop.f32.mrf.mxu0
    %v3134 = vadd.f32 0.0, %v3133
    %v3135 = vpop.f32.mrf.mxu0
    %v3136 = vadd.f32 0.0, %v3135
    %3137 = vmatmul.bf16.gmra.mxu0 %v3067
    %v3138 = vpop.f32.mrf.mxu0
    %v3139 = vadd.f32 0.0, %v3138
    %v3140 = vpop.f32.mrf.mxu0
    %v3141 = vadd.f32 0.0, %v3140
    %3142 = vmatmul.bf16.gmra.mxu0 %v3069
    %v3143 = vpop.f32.mrf.mxu0
    %v3144 = vadd.f32 0.0, %v3143
    %v3145 = vpop.f32.mrf.mxu0
    %v3146 = vadd.f32 0.0, %v3145
    %3147 = vmatmul.bf16.gmra.mxu0 %v3071
    %v3148 = vpop.f32.mrf.mxu0
    %v3149 = vadd.f32 0.0, %v3148
    %v3150 = vpop.f32.mrf.mxu0
    %v3151 = vadd.f32 0.0, %v3150
    %3152 = vdwg.mxu0
    %v3153 = vadd.f32 %v3007, %v3134
    %v3154 = vadd.f32 %v3008, %v3136
    %v3155 = vadd.f32 %v3009, %v3139
    %v3156 = vadd.f32 %v3010, %v3141
    %v3157 = vadd.f32 %v3011, %v3144
    %v3158 = vadd.f32 %v3012, %v3146
    %v3159 = vadd.f32 %v3013, %v3149
    %v3160 = vadd.f32 %v3014, %v3151
    %v3161 = vld [vmem:[#allocation2 + $0x64] sm:$0xf]
    %v3162 = vld [vmem:[#allocation4 + $0x100] sm:$0xf]
    %v3163 = vld [vmem:[#allocation4 + $0x104] sm:$0xf]
    %v3164 = vld [vmem:[#allocation4 + $0x108] sm:$0xf]
    %v3165 = vld [vmem:[#allocation4 + $0x10c] sm:$0xf]
    %v3166 = vld [vmem:[#allocation4 + $0x110] sm:$0xf]
    %v3167 = vld [vmem:[#allocation4 + $0x114] sm:$0xf]
    %v3168 = vld [vmem:[#allocation4 + $0x118] sm:$0xf]
    %v3169 = vld [vmem:[#allocation4 + $0x11c] sm:$0xf]
    %v3170 = vld [vmem:[#allocation4 + $0x120] sm:$0xf]
    %v3171 = vld [vmem:[#allocation4 + $0x124] sm:$0xf]
    %v3172 = vld [vmem:[#allocation4 + $0x128] sm:$0xf]
    %v3173 = vld [vmem:[#allocation4 + $0x12c] sm:$0xf]
    %v3174 = vld [vmem:[#allocation4 + $0x130] sm:$0xf]
    %v3175 = vld [vmem:[#allocation4 + $0x134] sm:$0xf]
    %v3176 = vld [vmem:[#allocation4 + $0x138] sm:$0xf]
    %v3177 = vld [vmem:[#allocation4 + $0x13c] sm:$0xf]
    %v3179 = vunpack.c.l.b16 %v3161
    %v3180 = vpack.c.b16 %v3179, %v3179
    %v3182 = vshrl.u32 %v3058, 16
    %v3184 = vrot.slane %v3182, 3
    %v3185 = vshll.u32 %v3058, 16
    %v3187 = vrot.slane %v3185, 4
    %v3188 = vor.u32 %v3184, %v3187
    %v3190 = vshrl.u32 %v3059, 16
    %v3192 = vrot.slane %v3190, 3
    %v3193 = vshll.u32 %v3059, 16
    %v3195 = vrot.slane %v3193, 4
    %v3196 = vor.u32 %v3192, %v3195
    %v3197 = vsel %vm674, %v3188, %v3196
    %v3199 = vshrl.u32 %v3060, 16
    %v3201 = vrot.slane %v3199, 3
    %v3202 = vshll.u32 %v3060, 16
    %v3204 = vrot.slane %v3202, 4
    %v3205 = vor.u32 %v3201, %v3204
    %v3206 = vsel %vm674, %v3196, %v3205
    %v3208 = vshrl.u32 %v3061, 16
    %v3210 = vrot.slane %v3208, 3
    %v3211 = vshll.u32 %v3061, 16
    %v3213 = vrot.slane %v3211, 4
    %v3214 = vor.u32 %v3210, %v3213
    %v3215 = vsel %vm674, %v3205, %v3214
    %v3217 = vshrl.u32 %v3180, 16
    %v3219 = vrot.slane %v3217, 3
    %v3220 = vshll.u32 %v3180, 16
    %v3222 = vrot.slane %v3220, 4
    %v3223 = vor.u32 %v3219, %v3222
    %v3224 = vsel %vm674, %v3214, %v3223
    %v3245 = vunpack.c.l.b16 %v3162
    %v3246 = vunpack.c.l.b16 %v3163
    %v3247 = vunpack.c.l.b16 %v3164
    %v3248 = vunpack.c.l.b16 %v3165
    %v3249 = vunpack.c.l.b16 %v3166
    %v3250 = vunpack.c.l.b16 %v3167
    %v3251 = vunpack.c.l.b16 %v3168
    %v3252 = vunpack.c.l.b16 %v3169
    %v3253 = vunpack.c.l.b16 %v3170
    %v3254 = vunpack.c.l.b16 %v3171
    %v3255 = vunpack.c.l.b16 %v3172
    %v3256 = vunpack.c.l.b16 %v3173
    %v3257 = vunpack.c.l.b16 %v3174
    %v3258 = vunpack.c.l.b16 %v3175
    %v3259 = vunpack.c.l.b16 %v3176
    %v3260 = vunpack.c.l.b16 %v3177
    %v3261 = vpack.c.b16 %v3246, %v3245
    %v3262 = vpack.c.b16 %v3248, %v3247
    %v3263 = vpack.c.b16 %v3250, %v3249
    %v3264 = vpack.c.b16 %v3252, %v3251
    %v3265 = vpack.c.b16 %v3254, %v3253
    %v3266 = vpack.c.b16 %v3256, %v3255
    %v3267 = vpack.c.b16 %v3258, %v3257
    %v3268 = vpack.c.b16 %v3260, %v3259
    %3277 = vmatpush.bf16.msra.mxu0 %v3268
    %3278 = vmatpush.bf16.msra.mxu0 %v3267
    %3279 = vmatpush.bf16.msra.mxu0 %v3266
    %3280 = vmatpush.bf16.msra.mxu0 %v3265
    %3281 = vmatpush.bf16.msra.mxu0 %v3264
    %3282 = vmatpush.bf16.msra.mxu0 %v3263
    %3283 = vmatpush.bf16.msra.mxu0 %v3262
    %3284 = vmatpush.bf16.msra.mxu0 %v3261
    %3285 = vmatmul.bf16.gmra.mxu0 %v3197
    %v3286 = vpop.f32.mrf.mxu0
    %v3287 = vadd.f32 0.0, %v3286
    %v3288 = vpop.f32.mrf.mxu0
    %v3289 = vadd.f32 0.0, %v3288
    %3290 = vmatmul.bf16.gmra.mxu0 %v3206
    %v3291 = vpop.f32.mrf.mxu0
    %v3292 = vadd.f32 0.0, %v3291
    %v3293 = vpop.f32.mrf.mxu0
    %v3294 = vadd.f32 0.0, %v3293
    %3295 = vmatmul.bf16.gmra.mxu0 %v3215
    %v3296 = vpop.f32.mrf.mxu0
    %v3297 = vadd.f32 0.0, %v3296
    %v3298 = vpop.f32.mrf.mxu0
    %v3299 = vadd.f32 0.0, %v3298
    %3300 = vmatmul.bf16.gmra.mxu0 %v3224
    %v3301 = vpop.f32.mrf.mxu0
    %v3302 = vadd.f32 0.0, %v3301
    %v3303 = vpop.f32.mrf.mxu0
    %v3304 = vadd.f32 0.0, %v3303
    %3305 = vdwg.mxu0
    %v3306 = vadd.f32 %v3153, %v3287
    %v3307 = vadd.f32 %v3154, %v3289
    %v3308 = vadd.f32 %v3155, %v3292
    %v3309 = vadd.f32 %v3156, %v3294
    %v3310 = vadd.f32 %v3157, %v3297
    %v3311 = vadd.f32 %v3158, %v3299
    %v3312 = vadd.f32 %v3159, %v3302
    %v3313 = vadd.f32 %v3160, %v3304
    %v3314 = vld [vmem:[#allocation4 + $0x140] sm:$0xf]
    %v3315 = vld [vmem:[#allocation4 + $0x144] sm:$0xf]
    %v3316 = vld [vmem:[#allocation4 + $0x148] sm:$0xf]
    %v3317 = vld [vmem:[#allocation4 + $0x14c] sm:$0xf]
    %v3318 = vld [vmem:[#allocation4 + $0x150] sm:$0xf]
    %v3319 = vld [vmem:[#allocation4 + $0x154] sm:$0xf]
    %v3320 = vld [vmem:[#allocation4 + $0x158] sm:$0xf]
    %v3321 = vld [vmem:[#allocation4 + $0x15c] sm:$0xf]
    %v3322 = vld [vmem:[#allocation4 + $0x160] sm:$0xf]
    %v3323 = vld [vmem:[#allocation4 + $0x164] sm:$0xf]
    %v3324 = vld [vmem:[#allocation4 + $0x168] sm:$0xf]
    %v3325 = vld [vmem:[#allocation4 + $0x16c] sm:$0xf]
    %v3326 = vld [vmem:[#allocation4 + $0x170] sm:$0xf]
    %v3327 = vld [vmem:[#allocation4 + $0x174] sm:$0xf]
    %v3328 = vld [vmem:[#allocation4 + $0x178] sm:$0xf]
    %v3329 = vld [vmem:[#allocation4 + $0x17c] sm:$0xf]
    %v3330 = vpack.c.b16 %v3051, %v3050
    %v3331 = vpack.c.b16 %v3053, %v3052
    %v3332 = vpack.c.b16 %v3055, %v3054
    %v3333 = vpack.c.b16 %v3179, %v3056
    %v3354 = vunpack.c.l.b16 %v3314
    %v3355 = vunpack.c.l.b16 %v3315
    %v3356 = vunpack.c.l.b16 %v3316
    %v3357 = vunpack.c.l.b16 %v3317
    %v3358 = vunpack.c.l.b16 %v3318
    %v3359 = vunpack.c.l.b16 %v3319
    %v3360 = vunpack.c.l.b16 %v3320
    %v3361 = vunpack.c.l.b16 %v3321
    %v3362 = vunpack.c.l.b16 %v3322
    %v3363 = vunpack.c.l.b16 %v3323
    %v3364 = vunpack.c.l.b16 %v3324
    %v3365 = vunpack.c.l.b16 %v3325
    %v3366 = vunpack.c.l.b16 %v3326
    %v3367 = vunpack.c.l.b16 %v3327
    %v3368 = vunpack.c.l.b16 %v3328
    %v3369 = vunpack.c.l.b16 %v3329
    %v3370 = vpack.c.b16 %v3355, %v3354
    %v3371 = vpack.c.b16 %v3357, %v3356
    %v3372 = vpack.c.b16 %v3359, %v3358
    %v3373 = vpack.c.b16 %v3361, %v3360
    %v3374 = vpack.c.b16 %v3363, %v3362
    %v3375 = vpack.c.b16 %v3365, %v3364
    %v3376 = vpack.c.b16 %v3367, %v3366
    %v3377 = vpack.c.b16 %v3369, %v3368
    %3386 = vmatpush.bf16.msra.mxu0 %v3377
    %3387 = vmatpush.bf16.msra.mxu0 %v3376
    %3388 = vmatpush.bf16.msra.mxu0 %v3375
    %3389 = vmatpush.bf16.msra.mxu0 %v3374
    %3390 = vmatpush.bf16.msra.mxu0 %v3373
    %3391 = vmatpush.bf16.msra.mxu0 %v3372
    %3392 = vmatpush.bf16.msra.mxu0 %v3371
    %3393 = vmatpush.bf16.msra.mxu0 %v3370
    %3394 = vmatmul.bf16.gmra.mxu0 %v3330
    %v3395 = vpop.f32.mrf.mxu0
    %v3396 = vadd.f32 0.0, %v3395
    %v3397 = vpop.f32.mrf.mxu0
    %v3398 = vadd.f32 0.0, %v3397
    %3399 = vmatmul.bf16.gmra.mxu0 %v3331
    %v3400 = vpop.f32.mrf.mxu0
    %v3401 = vadd.f32 0.0, %v3400
    %v3402 = vpop.f32.mrf.mxu0
    %v3403 = vadd.f32 0.0, %v3402
    %3404 = vmatmul.bf16.gmra.mxu0 %v3332
    %v3405 = vpop.f32.mrf.mxu0
    %v3406 = vadd.f32 0.0, %v3405
    %v3407 = vpop.f32.mrf.mxu0
    %v3408 = vadd.f32 0.0, %v3407
    %3409 = vmatmul.bf16.gmra.mxu0 %v3333
    %v3410 = vpop.f32.mrf.mxu0
    %v3411 = vadd.f32 0.0, %v3410
    %v3412 = vpop.f32.mrf.mxu0
    %v3413 = vadd.f32 0.0, %v3412
    %3414 = vdwg.mxu0
    %v3415 = vadd.f32 %v3306, %v3396
    %v3416 = vadd.f32 %v3307, %v3398
    %v3417 = vadd.f32 %v3308, %v3401
    %v3418 = vadd.f32 %v3309, %v3403
    %v3419 = vadd.f32 %v3310, %v3406
    %v3420 = vadd.f32 %v3311, %v3408
    %v3421 = vadd.f32 %v3312, %v3411
    %v3422 = vadd.f32 %v3313, %v3413
    %v3423 = vld [vmem:[#allocation2 + $0x4c] sm:$0xc]
    %v3424 = vld [vmem:[#allocation2 + $0x50] sm:$0xf]
    %v3425 = vld [vmem:[#allocation2 + $0x54] sm:$0xf]
    %v3426 = vld [vmem:[#allocation2 + $0x58] sm:$0xf]
    %v3427 = vld [vmem:[#allocation2 + $0x5c] sm:$0xf]
    %v3428 = vld [vmem:[#allocation2 + $0x60] sm:$0xf]
    %v3429 = vld [vmem:[#allocation2 + $0x64] sm:$0xf]
    %v3430 = vld [vmem:[#allocation2 + $0x68] sm:$0xf]
    %v3431 = vld [vmem:[#allocation2 + $0x6c] sm:$0x3]
    %v3432 = vld [vmem:[#allocation4 + $0x180] sm:$0xf]
    %v3433 = vld [vmem:[#allocation4 + $0x184] sm:$0xf]
    %v3434 = vld [vmem:[#allocation4 + $0x188] sm:$0xf]
    %v3435 = vld [vmem:[#allocation4 + $0x18c] sm:$0xf]
    %v3436 = vld [vmem:[#allocation4 + $0x190] sm:$0xf]
    %v3437 = vld [vmem:[#allocation4 + $0x194] sm:$0xf]
    %v3438 = vld [vmem:[#allocation4 + $0x198] sm:$0xf]
    %v3439 = vld [vmem:[#allocation4 + $0x19c] sm:$0xf]
    %v3440 = vld [vmem:[#allocation4 + $0x1a0] sm:$0xf]
    %v3441 = vld [vmem:[#allocation4 + $0x1a4] sm:$0xf]
    %v3442 = vld [vmem:[#allocation4 + $0x1a8] sm:$0xf]
    %v3443 = vld [vmem:[#allocation4 + $0x1ac] sm:$0xf]
    %v3444 = vld [vmem:[#allocation4 + $0x1b0] sm:$0xf]
    %v3445 = vld [vmem:[#allocation4 + $0x1b4] sm:$0xf]
    %v3446 = vld [vmem:[#allocation4 + $0x1b8] sm:$0xf]
    %v3447 = vld [vmem:[#allocation4 + $0x1bc] sm:$0xf]
    %v3457 = vunpack.c.l.b16 %v3423
    %v3458 = vunpack.c.l.b16 %v3424
    %v3459 = vunpack.c.l.b16 %v3425
    %v3460 = vunpack.c.l.b16 %v3426
    %v3461 = vunpack.c.l.b16 %v3427
    %v3462 = vunpack.c.l.b16 %v3428
    %v3463 = vunpack.c.l.b16 %v3429
    %v3464 = vunpack.c.l.b16 %v3430
    %v3465 = vunpack.c.l.b16 %v3431
    %v3466 = vpack.c.b16 %v3458, %v3457
    %v3467 = vpack.c.b16 %v3460, %v3459
    %v3468 = vpack.c.b16 %v3462, %v3461
    %v3469 = vpack.c.b16 %v3464, %v3463
    %v3470 = vpack.c.b16 %v3465, %v3465
    %v3471 = vrot.slane %v3466, 2
    %v3472 = vrot.slane %v3467, 2
    %v3473 = vsel %vm965, %v3471, %v3472
    %v3474 = vrot.slane %v3468, 2
    %v3475 = vsel %vm965, %v3472, %v3474
    %v3476 = vrot.slane %v3469, 2
    %v3477 = vsel %vm965, %v3474, %v3476
    %v3478 = vrot.slane %v3470, 2
    %v3479 = vsel %vm965, %v3476, %v3478
    %v3500 = vunpack.c.l.b16 %v3432
    %v3501 = vunpack.c.l.b16 %v3433
    %v3502 = vunpack.c.l.b16 %v3434
    %v3503 = vunpack.c.l.b16 %v3435
    %v3504 = vunpack.c.l.b16 %v3436
    %v3505 = vunpack.c.l.b16 %v3437
    %v3506 = vunpack.c.l.b16 %v3438
    %v3507 = vunpack.c.l.b16 %v3439
    %v3508 = vunpack.c.l.b16 %v3440
    %v3509 = vunpack.c.l.b16 %v3441
    %v3510 = vunpack.c.l.b16 %v3442
    %v3511 = vunpack.c.l.b16 %v3443
    %v3512 = vunpack.c.l.b16 %v3444
    %v3513 = vunpack.c.l.b16 %v3445
    %v3514 = vunpack.c.l.b16 %v3446
    %v3515 = vunpack.c.l.b16 %v3447
    %v3516 = vpack.c.b16 %v3501, %v3500
    %v3517 = vpack.c.b16 %v3503, %v3502
    %v3518 = vpack.c.b16 %v3505, %v3504
    %v3519 = vpack.c.b16 %v3507, %v3506
    %v3520 = vpack.c.b16 %v3509, %v3508
    %v3521 = vpack.c.b16 %v3511, %v3510
    %v3522 = vpack.c.b16 %v3513, %v3512
    %v3523 = vpack.c.b16 %v3515, %v3514
    %3532 = vmatpush.bf16.msra.mxu0 %v3523
    %3533 = vmatpush.bf16.msra.mxu0 %v3522
    %3534 = vmatpush.bf16.msra.mxu0 %v3521
    %3535 = vmatpush.bf16.msra.mxu0 %v3520
    %3536 = vmatpush.bf16.msra.mxu0 %v3519
    %3537 = vmatpush.bf16.msra.mxu0 %v3518
    %3538 = vmatpush.bf16.msra.mxu0 %v3517
    %3539 = vmatpush.bf16.msra.mxu0 %v3516
    %3540 = vmatmul.bf16.gmra.mxu0 %v3473
    %v3541 = vpop.f32.mrf.mxu0
    %v3542 = vadd.f32 0.0, %v3541
    %v3543 = vpop.f32.mrf.mxu0
    %v3544 = vadd.f32 0.0, %v3543
    %3545 = vmatmul.bf16.gmra.mxu0 %v3475
    %v3546 = vpop.f32.mrf.mxu0
    %v3547 = vadd.f32 0.0, %v3546
    %v3548 = vpop.f32.mrf.mxu0
    %v3549 = vadd.f32 0.0, %v3548
    %3550 = vmatmul.bf16.gmra.mxu0 %v3477
    %v3551 = vpop.f32.mrf.mxu0
    %v3552 = vadd.f32 0.0, %v3551
    %v3553 = vpop.f32.mrf.mxu0
    %v3554 = vadd.f32 0.0, %v3553
    %3555 = vmatmul.bf16.gmra.mxu0 %v3479
    %v3556 = vpop.f32.mrf.mxu0
    %v3557 = vadd.f32 0.0, %v3556
    %v3558 = vpop.f32.mrf.mxu0
    %v3559 = vadd.f32 0.0, %v3558
    %3560 = vdwg.mxu0
    %v3561 = vadd.f32 %v3415, %v3542
    %v3562 = vadd.f32 %v3416, %v3544
    %v3563 = vadd.f32 %v3417, %v3547
    %v3564 = vadd.f32 %v3418, %v3549
    %v3565 = vadd.f32 %v3419, %v3552
    %v3566 = vadd.f32 %v3420, %v3554
    %v3567 = vadd.f32 %v3421, %v3557
    %v3568 = vadd.f32 %v3422, %v3559
    %v3569 = vld [vmem:[#allocation2 + $0x6c] sm:$0x7]
    %v3570 = vld [vmem:[#allocation4 + $0x1c0] sm:$0xf]
    %v3571 = vld [vmem:[#allocation4 + $0x1c4] sm:$0xf]
    %v3572 = vld [vmem:[#allocation4 + $0x1c8] sm:$0xf]
    %v3573 = vld [vmem:[#allocation4 + $0x1cc] sm:$0xf]
    %v3574 = vld [vmem:[#allocation4 + $0x1d0] sm:$0xf]
    %v3575 = vld [vmem:[#allocation4 + $0x1d4] sm:$0xf]
    %v3576 = vld [vmem:[#allocation4 + $0x1d8] sm:$0xf]
    %v3577 = vld [vmem:[#allocation4 + $0x1dc] sm:$0xf]
    %v3578 = vld [vmem:[#allocation4 + $0x1e0] sm:$0xf]
    %v3579 = vld [vmem:[#allocation4 + $0x1e4] sm:$0xf]
    %v3580 = vld [vmem:[#allocation4 + $0x1e8] sm:$0xf]
    %v3581 = vld [vmem:[#allocation4 + $0x1ec] sm:$0xf]
    %v3582 = vld [vmem:[#allocation4 + $0x1f0] sm:$0xf]
    %v3583 = vld [vmem:[#allocation4 + $0x1f4] sm:$0xf]
    %v3584 = vld [vmem:[#allocation4 + $0x1f8] sm:$0xf]
    %v3585 = vld [vmem:[#allocation4 + $0x1fc] sm:$0xf]
    %v3587 = vunpack.c.l.b16 %v3569
    %v3588 = vpack.c.b16 %v3587, %v3587
    %v3590 = vshrl.u32 %v3466, 16
    %v3592 = vrot.slane %v3590, 2
    %v3593 = vshll.u32 %v3466, 16
    %v3595 = vrot.slane %v3593, 3
    %v3596 = vor.u32 %v3592, %v3595
    %v3598 = vshrl.u32 %v3467, 16
    %v3600 = vrot.slane %v3598, 2
    %v3601 = vshll.u32 %v3467, 16
    %v3603 = vrot.slane %v3601, 3
    %v3604 = vor.u32 %v3600, %v3603
    %v3605 = vsel %vm1084, %v3596, %v3604
    %v3607 = vshrl.u32 %v3468, 16
    %v3609 = vrot.slane %v3607, 2
    %v3610 = vshll.u32 %v3468, 16
    %v3612 = vrot.slane %v3610, 3
    %v3613 = vor.u32 %v3609, %v3612
    %v3614 = vsel %vm1084, %v3604, %v3613
    %v3616 = vshrl.u32 %v3469, 16
    %v3618 = vrot.slane %v3616, 2
    %v3619 = vshll.u32 %v3469, 16
    %v3621 = vrot.slane %v3619, 3
    %v3622 = vor.u32 %v3618, %v3621
    %v3623 = vsel %vm1084, %v3613, %v3622
    %v3625 = vshrl.u32 %v3588, 16
    %v3627 = vrot.slane %v3625, 2
    %v3628 = vshll.u32 %v3588, 16
    %v3630 = vrot.slane %v3628, 3
    %v3631 = vor.u32 %v3627, %v3630
    %v3632 = vsel %vm1084, %v3622, %v3631
    %v3653 = vunpack.c.l.b16 %v3570
    %v3654 = vunpack.c.l.b16 %v3571
    %v3655 = vunpack.c.l.b16 %v3572
    %v3656 = vunpack.c.l.b16 %v3573
    %v3657 = vunpack.c.l.b16 %v3574
    %v3658 = vunpack.c.l.b16 %v3575
    %v3659 = vunpack.c.l.b16 %v3576
    %v3660 = vunpack.c.l.b16 %v3577
    %v3661 = vunpack.c.l.b16 %v3578
    %v3662 = vunpack.c.l.b16 %v3579
    %v3663 = vunpack.c.l.b16 %v3580
    %v3664 = vunpack.c.l.b16 %v3581
    %v3665 = vunpack.c.l.b16 %v3582
    %v3666 = vunpack.c.l.b16 %v3583
    %v3667 = vunpack.c.l.b16 %v3584
    %v3668 = vunpack.c.l.b16 %v3585
    %v3669 = vpack.c.b16 %v3654, %v3653
    %v3670 = vpack.c.b16 %v3656, %v3655
    %v3671 = vpack.c.b16 %v3658, %v3657
    %v3672 = vpack.c.b16 %v3660, %v3659
    %v3673 = vpack.c.b16 %v3662, %v3661
    %v3674 = vpack.c.b16 %v3664, %v3663
    %v3675 = vpack.c.b16 %v3666, %v3665
    %v3676 = vpack.c.b16 %v3668, %v3667
    %3685 = vmatpush.bf16.msra.mxu0 %v3676
    %3686 = vmatpush.bf16.msra.mxu0 %v3675
    %3687 = vmatpush.bf16.msra.mxu0 %v3674
    %3688 = vmatpush.bf16.msra.mxu0 %v3673
    %3689 = vmatpush.bf16.msra.mxu0 %v3672
    %3690 = vmatpush.bf16.msra.mxu0 %v3671
    %3691 = vmatpush.bf16.msra.mxu0 %v3670
    %3692 = vmatpush.bf16.msra.mxu0 %v3669
    %3693 = vmatmul.bf16.gmra.mxu0 %v3605
    %v3694 = vpop.f32.mrf.mxu0
    %v3695 = vadd.f32 0.0, %v3694
    %v3696 = vpop.f32.mrf.mxu0
    %v3697 = vadd.f32 0.0, %v3696
    %3698 = vmatmul.bf16.gmra.mxu0 %v3614
    %v3699 = vpop.f32.mrf.mxu0
    %v3700 = vadd.f32 0.0, %v3699
    %v3701 = vpop.f32.mrf.mxu0
    %v3702 = vadd.f32 0.0, %v3701
    %3703 = vmatmul.bf16.gmra.mxu0 %v3623
    %v3704 = vpop.f32.mrf.mxu0
    %v3705 = vadd.f32 0.0, %v3704
    %v3706 = vpop.f32.mrf.mxu0
    %v3707 = vadd.f32 0.0, %v3706
    %3708 = vmatmul.bf16.gmra.mxu0 %v3632
    %v3709 = vpop.f32.mrf.mxu0
    %v3710 = vadd.f32 0.0, %v3709
    %v3711 = vpop.f32.mrf.mxu0
    %v3712 = vadd.f32 0.0, %v3711
    %3713 = vdwg.mxu0
    %v3714 = vadd.f32 %v3561, %v3695
    %v3715 = vadd.f32 %v3562, %v3697
    %v3716 = vadd.f32 %v3563, %v3700
    %v3717 = vadd.f32 %v3564, %v3702
    %v3718 = vadd.f32 %v3565, %v3705
    %v3719 = vadd.f32 %v3566, %v3707
    %v3720 = vadd.f32 %v3567, %v3710
    %v3721 = vadd.f32 %v3568, %v3712
    %v3722 = vld [vmem:[#allocation2 + $0x4c] sm:$0x8]
    %v3723 = vld [vmem:[#allocation4 + $0x200] sm:$0xf]
    %v3724 = vld [vmem:[#allocation4 + $0x204] sm:$0xf]
    %v3725 = vld [vmem:[#allocation4 + $0x208] sm:$0xf]
    %v3726 = vld [vmem:[#allocation4 + $0x20c] sm:$0xf]
    %v3727 = vld [vmem:[#allocation4 + $0x210] sm:$0xf]
    %v3728 = vld [vmem:[#allocation4 + $0x214] sm:$0xf]
    %v3729 = vld [vmem:[#allocation4 + $0x218] sm:$0xf]
    %v3730 = vld [vmem:[#allocation4 + $0x21c] sm:$0xf]
    %v3731 = vld [vmem:[#allocation4 + $0x220] sm:$0xf]
    %v3732 = vld [vmem:[#allocation4 + $0x224] sm:$0xf]
    %v3733 = vld [vmem:[#allocation4 + $0x228] sm:$0xf]
    %v3734 = vld [vmem:[#allocation4 + $0x22c] sm:$0xf]
    %v3735 = vld [vmem:[#allocation4 + $0x230] sm:$0xf]
    %v3736 = vld [vmem:[#allocation4 + $0x234] sm:$0xf]
    %v3737 = vld [vmem:[#allocation4 + $0x238] sm:$0xf]
    %v3738 = vld [vmem:[#allocation4 + $0x23c] sm:$0xf]
    %v3740 = vunpack.c.l.b16 %v3722
    %v3741 = vpack.c.b16 %v3458, %v3740
    %v3742 = vrot.slane %v3741, 3
    %v3743 = vrot.slane %v3467, 3
    %v3744 = vsel %vm555, %v3742, %v3743
    %v3745 = vrot.slane %v3468, 3
    %v3746 = vsel %vm555, %v3743, %v3745
    %v3747 = vrot.slane %v3469, 3
    %v3748 = vsel %vm555, %v3745, %v3747
    %v3749 = vrot.slane %v3588, 3
    %v3750 = vsel %vm555, %v3747, %v3749
    %v3771 = vunpack.c.l.b16 %v3723
    %v3772 = vunpack.c.l.b16 %v3724
    %v3773 = vunpack.c.l.b16 %v3725
    %v3774 = vunpack.c.l.b16 %v3726
    %v3775 = vunpack.c.l.b16 %v3727
    %v3776 = vunpack.c.l.b16 %v3728
    %v3777 = vunpack.c.l.b16 %v3729
    %v3778 = vunpack.c.l.b16 %v3730
    %v3779 = vunpack.c.l.b16 %v3731
    %v3780 = vunpack.c.l.b16 %v3732
    %v3781 = vunpack.c.l.b16 %v3733
    %v3782 = vunpack.c.l.b16 %v3734
    %v3783 = vunpack.c.l.b16 %v3735
    %v3784 = vunpack.c.l.b16 %v3736
    %v3785 = vunpack.c.l.b16 %v3737
    %v3786 = vunpack.c.l.b16 %v3738
    %v3787 = vpack.c.b16 %v3772, %v3771
    %v3788 = vpack.c.b16 %v3774, %v3773
    %v3789 = vpack.c.b16 %v3776, %v3775
    %v3790 = vpack.c.b16 %v3778, %v3777
    %v3791 = vpack.c.b16 %v3780, %v3779
    %v3792 = vpack.c.b16 %v3782, %v3781
    %v3793 = vpack.c.b16 %v3784, %v3783
    %v3794 = vpack.c.b16 %v3786, %v3785
    %3803 = vmatpush.bf16.msra.mxu0 %v3794
    %3804 = vmatpush.bf16.msra.mxu0 %v3793
    %3805 = vmatpush.bf16.msra.mxu0 %v3792
    %3806 = vmatpush.bf16.msra.mxu0 %v3791
    %3807 = vmatpush.bf16.msra.mxu0 %v3790
    %3808 = vmatpush.bf16.msra.mxu0 %v3789
    %3809 = vmatpush.bf16.msra.mxu0 %v3788
    %3810 = vmatpush.bf16.msra.mxu0 %v3787
    %3811 = vmatmul.bf16.gmra.mxu0 %v3744
    %v3812 = vpop.f32.mrf.mxu0
    %v3813 = vadd.f32 0.0, %v3812
    %v3814 = vpop.f32.mrf.mxu0
    %v3815 = vadd.f32 0.0, %v3814
    %3816 = vmatmul.bf16.gmra.mxu0 %v3746
    %v3817 = vpop.f32.mrf.mxu0
    %v3818 = vadd.f32 0.0, %v3817
    %v3819 = vpop.f32.mrf.mxu0
    %v3820 = vadd.f32 0.0, %v3819
    %3821 = vmatmul.bf16.gmra.mxu0 %v3748
    %v3822 = vpop.f32.mrf.mxu0
    %v3823 = vadd.f32 0.0, %v3822
    %v3824 = vpop.f32.mrf.mxu0
    %v3825 = vadd.f32 0.0, %v3824
    %3826 = vmatmul.bf16.gmra.mxu0 %v3750
    %v3827 = vpop.f32.mrf.mxu0
    %v3828 = vadd.f32 0.0, %v3827
    %v3829 = vpop.f32.mrf.mxu0
    %v3830 = vadd.f32 0.0, %v3829
    %3831 = vdwg.mxu0
    %v3832 = vadd.f32 %v3714, %v3813
    %v3833 = vadd.f32 %v3715, %v3815
    %v3834 = vadd.f32 %v3716, %v3818
    %v3835 = vadd.f32 %v3717, %v3820
    %v3836 = vadd.f32 %v3718, %v3823
    %v3837 = vadd.f32 %v3719, %v3825
    %v3838 = vadd.f32 %v3720, %v3828
    %v3839 = vadd.f32 %v3721, %v3830
    %v3840 = vld [vmem:[#allocation7] sm:$0x1]
    %v3841 = vperm.slane %v3840, 0
    %v3842 = vmul.f32 %v3832, %v3841
    %v3843 = vmul.f32 %v3833, %v3841
    %v3844 = vmul.f32 %v3834, %v3841
    %v3845 = vmul.f32 %v3835, %v3841
    %v3846 = vmul.f32 %v3836, %v3841
    %v3847 = vmul.f32 %v3837, %v3841
    %v3848 = vmul.f32 %v3838, %v3841
    %v3849 = vmul.f32 %v3839, %v3841
    %v3850 = vld [vmem:[#allocation7 + $0x1] sm:$0x1]
    %v3851 = vperm.slane %v3850, 0
    %v3852 = vadd.f32 %v3842, %v3851
    %v3853 = vadd.f32 %v3843, %v3851
    %v3854 = vadd.f32 %v3844, %v3851
    %v3855 = vadd.f32 %v3845, %v3851
    %v3856 = vadd.f32 %v3846, %v3851
    %v3857 = vadd.f32 %v3847, %v3851
    %v3858 = vadd.f32 %v3848, %v3851
    %v3859 = vadd.f32 %v3849, %v3851
    %v3860 = vmax.f32 %v3852, 0.0
    %v3861 = vmax.f32 %v3853, 0.0
    %v3862 = vmax.f32 %v3854, 0.0
    %v3863 = vmax.f32 %v3855, 0.0
    %v3864 = vmax.f32 %v3856, 0.0
    %v3865 = vmax.f32 %v3857, 0.0
    %v3866 = vmax.f32 %v3858, 0.0
    %v3867 = vmax.f32 %v3859, 0.0
    %v3868 = vpack.c.bf16 %v3860, %v3860
    %v3869 = vpack.c.bf16 %v3861, %v3861
    %v3870 = vpack.c.bf16 %v3862, %v3862
    %v3871 = vpack.c.bf16 %v3863, %v3863
    %v3872 = vpack.c.bf16 %v3864, %v3864
    %v3873 = vpack.c.bf16 %v3865, %v3865
    %v3874 = vpack.c.bf16 %v3866, %v3866
    %v3875 = vpack.c.bf16 %v3867, %v3867
    %3876 = vst [vmem:[#allocation9 + $0x40] sm:$0xf] %v3868
    %3877 = vst [vmem:[#allocation9 + $0x44] sm:$0xf] %v3869
    %3878 = vst [vmem:[#allocation9 + $0x48] sm:$0xf] %v3870
    %3879 = vst [vmem:[#allocation9 + $0x4c] sm:$0xf] %v3871
    %3880 = vst [vmem:[#allocation9 + $0x50] sm:$0xf] %v3872
    %3881 = vst [vmem:[#allocation9 + $0x54] sm:$0xf] %v3873
    %3882 = vst [vmem:[#allocation9 + $0x58] sm:$0xf] %v3874
    %3883 = vst [vmem:[#allocation9 + $0x5c] sm:$0xf] %v3875
    %s3884 = sshll.u32 %s1381, 4
    %3885 = dma.done %s107, %s3884
    %v3886 = vld [vmem:[#allocation2 + $0x60] sm:$0xf]
    %v3887 = vld [vmem:[#allocation2 + $0x64] sm:$0xf]
    %v3888 = vld [vmem:[#allocation2 + $0x68] sm:$0xf]
    %v3889 = vld [vmem:[#allocation2 + $0x6c] sm:$0xf]
    %v3890 = vld [vmem:[#allocation2 + $0x70] sm:$0xf]
    %v3891 = vld [vmem:[#allocation2 + $0x74] sm:$0xf]
    %v3892 = vld [vmem:[#allocation2 + $0x78] sm:$0xf]
    %v3893 = vld [vmem:[#allocation2 + $0x7c] sm:$0xf]
    %v3894 = vld [vmem:[#allocation4] sm:$0xf]
    %v3895 = vld [vmem:[#allocation4 + $0x4] sm:$0xf]
    %v3896 = vld [vmem:[#allocation4 + $0x8] sm:$0xf]
    %v3897 = vld [vmem:[#allocation4 + $0xc] sm:$0xf]
    %v3898 = vld [vmem:[#allocation4 + $0x10] sm:$0xf]
    %v3899 = vld [vmem:[#allocation4 + $0x14] sm:$0xf]
    %v3900 = vld [vmem:[#allocation4 + $0x18] sm:$0xf]
    %v3901 = vld [vmem:[#allocation4 + $0x1c] sm:$0xf]
    %v3902 = vld [vmem:[#allocation4 + $0x20] sm:$0xf]
    %v3903 = vld [vmem:[#allocation4 + $0x24] sm:$0xf]
    %v3904 = vld [vmem:[#allocation4 + $0x28] sm:$0xf]
    %v3905 = vld [vmem:[#allocation4 + $0x2c] sm:$0xf]
    %v3906 = vld [vmem:[#allocation4 + $0x30] sm:$0xf]
    %v3907 = vld [vmem:[#allocation4 + $0x34] sm:$0xf]
    %v3908 = vld [vmem:[#allocation4 + $0x38] sm:$0xf]
    %v3909 = vld [vmem:[#allocation4 + $0x3c] sm:$0xf]
    %v3910 = vld [vmem:[#allocation2 + $0x80] sm:$0x1]
    %v3911 = vld [vmem:[#allocation4 + $0x40] sm:$0xf]
    %v3912 = vld [vmem:[#allocation4 + $0x44] sm:$0xf]
    %v3913 = vld [vmem:[#allocation4 + $0x48] sm:$0xf]
    %v3914 = vld [vmem:[#allocation4 + $0x4c] sm:$0xf]
    %v3915 = vld [vmem:[#allocation4 + $0x50] sm:$0xf]
    %v3916 = vld [vmem:[#allocation4 + $0x54] sm:$0xf]
    %v3917 = vld [vmem:[#allocation4 + $0x58] sm:$0xf]
    %v3918 = vld [vmem:[#allocation4 + $0x5c] sm:$0xf]
    %v3919 = vld [vmem:[#allocation4 + $0x60] sm:$0xf]
    %v3920 = vld [vmem:[#allocation4 + $0x64] sm:$0xf]
    %v3921 = vld [vmem:[#allocation4 + $0x68] sm:$0xf]
    %v3922 = vld [vmem:[#allocation4 + $0x6c] sm:$0xf]
    %v3923 = vld [vmem:[#allocation4 + $0x70] sm:$0xf]
    %v3924 = vld [vmem:[#allocation4 + $0x74] sm:$0xf]
    %v3925 = vld [vmem:[#allocation4 + $0x78] sm:$0xf]
    %v3926 = vld [vmem:[#allocation4 + $0x7c] sm:$0xf]
    %v3936 = vunpack.c.l.b16 %v3886
    %v3937 = vunpack.c.l.b16 %v3887
    %v3938 = vunpack.c.l.b16 %v3888
    %v3939 = vunpack.c.l.b16 %v3889
    %v3940 = vunpack.c.l.b16 %v3890
    %v3941 = vunpack.c.l.b16 %v3891
    %v3942 = vunpack.c.l.b16 %v3892
    %v3943 = vunpack.c.l.b16 %v3893
    %v3944 = vunpack.c.l.b16 %v3910
    %v3945 = vpack.c.b16 %v3937, %v3936
    %v3946 = vpack.c.b16 %v3939, %v3938
    %v3947 = vpack.c.b16 %v3941, %v3940
    %v3948 = vpack.c.b16 %v3943, %v3942
    %v3949 = vpack.c.b16 %v3944, %v3944
    %v3951 = vshrl.u32 %v3945, 16
    %v3953 = vshll.u32 %v3945, 16
    %v3955 = vrot.slane %v3953, 1
    %v3956 = vor.u32 %v3951, %v3955
    %v3958 = vshll.u32 %v3946, 16
    %v3960 = vrot.slane %v3958, 1
    %v3961 = vsel %vm189, %v3956, %v3960
    %v3962 = vshrl.u32 %v3946, 16
    %v3964 = vor.u32 %v3962, %v3960
    %v3966 = vshll.u32 %v3947, 16
    %v3968 = vrot.slane %v3966, 1
    %v3969 = vsel %vm189, %v3964, %v3968
    %v3970 = vshrl.u32 %v3947, 16
    %v3972 = vor.u32 %v3970, %v3968
    %v3974 = vshll.u32 %v3948, 16
    %v3976 = vrot.slane %v3974, 1
    %v3977 = vsel %vm189, %v3972, %v3976
    %v3978 = vshrl.u32 %v3948, 16
    %v3980 = vor.u32 %v3978, %v3976
    %v3982 = vshll.u32 %v3949, 16
    %v3984 = vrot.slane %v3982, 1
    %v3985 = vsel %vm189, %v3980, %v3984
    %v4006 = vunpack.c.l.b16 %v3911
    %v4007 = vunpack.c.l.b16 %v3912
    %v4008 = vunpack.c.l.b16 %v3913
    %v4009 = vunpack.c.l.b16 %v3914
    %v4010 = vunpack.c.l.b16 %v3915
    %v4011 = vunpack.c.l.b16 %v3916
    %v4012 = vunpack.c.l.b16 %v3917
    %v4013 = vunpack.c.l.b16 %v3918
    %v4014 = vunpack.c.l.b16 %v3919
    %v4015 = vunpack.c.l.b16 %v3920
    %v4016 = vunpack.c.l.b16 %v3921
    %v4017 = vunpack.c.l.b16 %v3922
    %v4018 = vunpack.c.l.b16 %v3923
    %v4019 = vunpack.c.l.b16 %v3924
    %v4020 = vunpack.c.l.b16 %v3925
    %v4021 = vunpack.c.l.b16 %v3926
    %v4022 = vpack.c.b16 %v4007, %v4006
    %v4023 = vpack.c.b16 %v4009, %v4008
    %v4024 = vpack.c.b16 %v4011, %v4010
    %v4025 = vpack.c.b16 %v4013, %v4012
    %v4026 = vpack.c.b16 %v4015, %v4014
    %v4027 = vpack.c.b16 %v4017, %v4016
    %v4028 = vpack.c.b16 %v4019, %v4018
    %v4029 = vpack.c.b16 %v4021, %v4020
    %4038 = vmatpush.bf16.msra.mxu0 %v4029
    %4039 = vmatpush.bf16.msra.mxu0 %v4028
    %4040 = vmatpush.bf16.msra.mxu0 %v4027
    %4041 = vmatpush.bf16.msra.mxu0 %v4026
    %4042 = vmatpush.bf16.msra.mxu0 %v4025
    %4043 = vmatpush.bf16.msra.mxu0 %v4024
    %4044 = vmatpush.bf16.msra.mxu0 %v4023
    %4045 = vmatpush.bf16.msra.mxu0 %v4022
    %4046 = vmatmul.bf16.gmra.mxu0 %v3961
    %v4047 = vpop.f32.mrf.mxu0
    %v4048 = vadd.f32 0.0, %v4047
    %v4049 = vpop.f32.mrf.mxu0
    %v4050 = vadd.f32 0.0, %v4049
    %4051 = vmatmul.bf16.gmra.mxu0 %v3969
    %v4052 = vpop.f32.mrf.mxu0
    %v4053 = vadd.f32 0.0, %v4052
    %v4054 = vpop.f32.mrf.mxu0
    %v4055 = vadd.f32 0.0, %v4054
    %4056 = vmatmul.bf16.gmra.mxu0 %v3977
    %v4057 = vpop.f32.mrf.mxu0
    %v4058 = vadd.f32 0.0, %v4057
    %v4059 = vpop.f32.mrf.mxu0
    %v4060 = vadd.f32 0.0, %v4059
    %4061 = vmatmul.bf16.gmra.mxu0 %v3985
    %v4062 = vpop.f32.mrf.mxu0
    %v4063 = vadd.f32 0.0, %v4062
    %v4064 = vpop.f32.mrf.mxu0
    %v4065 = vadd.f32 0.0, %v4064
    %4066 = vdwg.mxu0
    %v4087 = vunpack.c.l.b16 %v3894
    %v4088 = vunpack.c.l.b16 %v3895
    %v4089 = vunpack.c.l.b16 %v3896
    %v4090 = vunpack.c.l.b16 %v3897
    %v4091 = vunpack.c.l.b16 %v3898
    %v4092 = vunpack.c.l.b16 %v3899
    %v4093 = vunpack.c.l.b16 %v3900
    %v4094 = vunpack.c.l.b16 %v3901
    %v4095 = vunpack.c.l.b16 %v3902
    %v4096 = vunpack.c.l.b16 %v3903
    %v4097 = vunpack.c.l.b16 %v3904
    %v4098 = vunpack.c.l.b16 %v3905
    %v4099 = vunpack.c.l.b16 %v3906
    %v4100 = vunpack.c.l.b16 %v3907
    %v4101 = vunpack.c.l.b16 %v3908
    %v4102 = vunpack.c.l.b16 %v3909
    %v4103 = vpack.c.b16 %v4088, %v4087
    %v4104 = vpack.c.b16 %v4090, %v4089
    %v4105 = vpack.c.b16 %v4092, %v4091
    %v4106 = vpack.c.b16 %v4094, %v4093
    %v4107 = vpack.c.b16 %v4096, %v4095
    %v4108 = vpack.c.b16 %v4098, %v4097
    %v4109 = vpack.c.b16 %v4100, %v4099
    %v4110 = vpack.c.b16 %v4102, %v4101
    %4119 = vmatpush.bf16.msra.mxu0 %v4110
    %4120 = vmatpush.bf16.msra.mxu0 %v4109
    %4121 = vmatpush.bf16.msra.mxu0 %v4108
    %4122 = vmatpush.bf16.msra.mxu0 %v4107
    %4123 = vmatpush.bf16.msra.mxu0 %v4106
    %4124 = vmatpush.bf16.msra.mxu0 %v4105
    %4125 = vmatpush.bf16.msra.mxu0 %v4104
    %4126 = vmatpush.bf16.msra.mxu0 %v4103
    %4127 = vmatmul.bf16.gmra.mxu0 %v3945
    %v4128 = vpop.f32.mrf.mxu0
    %v4129 = vadd.f32 %v4048, %v4128
    %v4130 = vpop.f32.mrf.mxu0
    %v4131 = vadd.f32 %v4050, %v4130
    %4132 = vmatmul.bf16.gmra.mxu0 %v3946
    %v4133 = vpop.f32.mrf.mxu0
    %v4134 = vadd.f32 %v4053, %v4133
    %v4135 = vpop.f32.mrf.mxu0
    %v4136 = vadd.f32 %v4055, %v4135
    %4137 = vmatmul.bf16.gmra.mxu0 %v3947
    %v4138 = vpop.f32.mrf.mxu0
    %v4139 = vadd.f32 %v4058, %v4138
    %v4140 = vpop.f32.mrf.mxu0
    %v4141 = vadd.f32 %v4060, %v4140
    %4142 = vmatmul.bf16.gmra.mxu0 %v3948
    %v4143 = vpop.f32.mrf.mxu0
    %v4144 = vadd.f32 %v4063, %v4143
    %v4145 = vpop.f32.mrf.mxu0
    %v4146 = vadd.f32 %v4065, %v4145
    %4147 = vdwg.mxu0
    %v4148 = vld [vmem:[#allocation2 + $0x60] sm:$0xe]
    %v4149 = vld [vmem:[#allocation4 + $0x80] sm:$0xf]
    %v4150 = vld [vmem:[#allocation4 + $0x84] sm:$0xf]
    %v4151 = vld [vmem:[#allocation4 + $0x88] sm:$0xf]
    %v4152 = vld [vmem:[#allocation4 + $0x8c] sm:$0xf]
    %v4153 = vld [vmem:[#allocation4 + $0x90] sm:$0xf]
    %v4154 = vld [vmem:[#allocation4 + $0x94] sm:$0xf]
    %v4155 = vld [vmem:[#allocation4 + $0x98] sm:$0xf]
    %v4156 = vld [vmem:[#allocation4 + $0x9c] sm:$0xf]
    %v4157 = vld [vmem:[#allocation4 + $0xa0] sm:$0xf]
    %v4158 = vld [vmem:[#allocation4 + $0xa4] sm:$0xf]
    %v4159 = vld [vmem:[#allocation4 + $0xa8] sm:$0xf]
    %v4160 = vld [vmem:[#allocation4 + $0xac] sm:$0xf]
    %v4161 = vld [vmem:[#allocation4 + $0xb0] sm:$0xf]
    %v4162 = vld [vmem:[#allocation4 + $0xb4] sm:$0xf]
    %v4163 = vld [vmem:[#allocation4 + $0xb8] sm:$0xf]
    %v4164 = vld [vmem:[#allocation4 + $0xbc] sm:$0xf]
    %v4166 = vunpack.c.l.b16 %v4148
    %v4167 = vpack.c.b16 %v3937, %v4166
    %v4168 = vrot.slane %v4167, 1
    %v4169 = vrot.slane %v3946, 1
    %v4170 = vsel %vm408, %v4168, %v4169
    %v4171 = vrot.slane %v3947, 1
    %v4172 = vsel %vm408, %v4169, %v4171
    %v4173 = vrot.slane %v3948, 1
    %v4174 = vsel %vm408, %v4171, %v4173
    %v4175 = vrot.slane %v3949, 1
    %v4176 = vsel %vm408, %v4173, %v4175
    %v4197 = vunpack.c.l.b16 %v4149
    %v4198 = vunpack.c.l.b16 %v4150
    %v4199 = vunpack.c.l.b16 %v4151
    %v4200 = vunpack.c.l.b16 %v4152
    %v4201 = vunpack.c.l.b16 %v4153
    %v4202 = vunpack.c.l.b16 %v4154
    %v4203 = vunpack.c.l.b16 %v4155
    %v4204 = vunpack.c.l.b16 %v4156
    %v4205 = vunpack.c.l.b16 %v4157
    %v4206 = vunpack.c.l.b16 %v4158
    %v4207 = vunpack.c.l.b16 %v4159
    %v4208 = vunpack.c.l.b16 %v4160
    %v4209 = vunpack.c.l.b16 %v4161
    %v4210 = vunpack.c.l.b16 %v4162
    %v4211 = vunpack.c.l.b16 %v4163
    %v4212 = vunpack.c.l.b16 %v4164
    %v4213 = vpack.c.b16 %v4198, %v4197
    %v4214 = vpack.c.b16 %v4200, %v4199
    %v4215 = vpack.c.b16 %v4202, %v4201
    %v4216 = vpack.c.b16 %v4204, %v4203
    %v4217 = vpack.c.b16 %v4206, %v4205
    %v4218 = vpack.c.b16 %v4208, %v4207
    %v4219 = vpack.c.b16 %v4210, %v4209
    %v4220 = vpack.c.b16 %v4212, %v4211
    %4229 = vmatpush.bf16.msra.mxu0 %v4220
    %4230 = vmatpush.bf16.msra.mxu0 %v4219
    %4231 = vmatpush.bf16.msra.mxu0 %v4218
    %4232 = vmatpush.bf16.msra.mxu0 %v4217
    %4233 = vmatpush.bf16.msra.mxu0 %v4216
    %4234 = vmatpush.bf16.msra.mxu0 %v4215
    %4235 = vmatpush.bf16.msra.mxu0 %v4214
    %4236 = vmatpush.bf16.msra.mxu0 %v4213
    %4237 = vmatmul.bf16.gmra.mxu0 %v4170
    %v4238 = vpop.f32.mrf.mxu0
    %v4239 = vadd.f32 0.0, %v4238
    %v4240 = vpop.f32.mrf.mxu0
    %v4241 = vadd.f32 0.0, %v4240
    %4242 = vmatmul.bf16.gmra.mxu0 %v4172
    %v4243 = vpop.f32.mrf.mxu0
    %v4244 = vadd.f32 0.0, %v4243
    %v4245 = vpop.f32.mrf.mxu0
    %v4246 = vadd.f32 0.0, %v4245
    %4247 = vmatmul.bf16.gmra.mxu0 %v4174
    %v4248 = vpop.f32.mrf.mxu0
    %v4249 = vadd.f32 0.0, %v4248
    %v4250 = vpop.f32.mrf.mxu0
    %v4251 = vadd.f32 0.0, %v4250
    %4252 = vmatmul.bf16.gmra.mxu0 %v4176
    %v4253 = vpop.f32.mrf.mxu0
    %v4254 = vadd.f32 0.0, %v4253
    %v4255 = vpop.f32.mrf.mxu0
    %v4256 = vadd.f32 0.0, %v4255
    %4257 = vdwg.mxu0
    %v4258 = vadd.f32 %v4129, %v4239
    %v4259 = vadd.f32 %v4131, %v4241
    %v4260 = vadd.f32 %v4134, %v4244
    %v4261 = vadd.f32 %v4136, %v4246
    %v4262 = vadd.f32 %v4139, %v4249
    %v4263 = vadd.f32 %v4141, %v4251
    %v4264 = vadd.f32 %v4144, %v4254
    %v4265 = vadd.f32 %v4146, %v4256
    %v4266 = vld [vmem:[#allocation2 + $0x64] sm:$0x8]
    %v4267 = vld [vmem:[#allocation2 + $0x68] sm:$0xf]
    %v4268 = vld [vmem:[#allocation2 + $0x6c] sm:$0xf]
    %v4269 = vld [vmem:[#allocation2 + $0x70] sm:$0xf]
    %v4270 = vld [vmem:[#allocation2 + $0x74] sm:$0xf]
    %v4271 = vld [vmem:[#allocation2 + $0x78] sm:$0xf]
    %v4272 = vld [vmem:[#allocation2 + $0x7c] sm:$0xf]
    %v4273 = vld [vmem:[#allocation2 + $0x80] sm:$0xf]
    %v4274 = vld [vmem:[#allocation2 + $0x84] sm:$0x7]
    %v4275 = vld [vmem:[#allocation4 + $0xc0] sm:$0xf]
    %v4276 = vld [vmem:[#allocation4 + $0xc4] sm:$0xf]
    %v4277 = vld [vmem:[#allocation4 + $0xc8] sm:$0xf]
    %v4278 = vld [vmem:[#allocation4 + $0xcc] sm:$0xf]
    %v4279 = vld [vmem:[#allocation4 + $0xd0] sm:$0xf]
    %v4280 = vld [vmem:[#allocation4 + $0xd4] sm:$0xf]
    %v4281 = vld [vmem:[#allocation4 + $0xd8] sm:$0xf]
    %v4282 = vld [vmem:[#allocation4 + $0xdc] sm:$0xf]
    %v4283 = vld [vmem:[#allocation4 + $0xe0] sm:$0xf]
    %v4284 = vld [vmem:[#allocation4 + $0xe4] sm:$0xf]
    %v4285 = vld [vmem:[#allocation4 + $0xe8] sm:$0xf]
    %v4286 = vld [vmem:[#allocation4 + $0xec] sm:$0xf]
    %v4287 = vld [vmem:[#allocation4 + $0xf0] sm:$0xf]
    %v4288 = vld [vmem:[#allocation4 + $0xf4] sm:$0xf]
    %v4289 = vld [vmem:[#allocation4 + $0xf8] sm:$0xf]
    %v4290 = vld [vmem:[#allocation4 + $0xfc] sm:$0xf]
    %v4300 = vunpack.c.l.b16 %v4266
    %v4301 = vunpack.c.l.b16 %v4267
    %v4302 = vunpack.c.l.b16 %v4268
    %v4303 = vunpack.c.l.b16 %v4269
    %v4304 = vunpack.c.l.b16 %v4270
    %v4305 = vunpack.c.l.b16 %v4271
    %v4306 = vunpack.c.l.b16 %v4272
    %v4307 = vunpack.c.l.b16 %v4273
    %v4308 = vunpack.c.l.b16 %v4274
    %v4309 = vpack.c.b16 %v4301, %v4300
    %v4310 = vpack.c.b16 %v4303, %v4302
    %v4311 = vpack.c.b16 %v4305, %v4304
    %v4312 = vpack.c.b16 %v4307, %v4306
    %v4313 = vpack.c.b16 %v4308, %v4308
    %v4314 = vrot.slane %v4309, 3
    %v4315 = vrot.slane %v4310, 3
    %v4316 = vsel %vm555, %v4314, %v4315
    %v4317 = vrot.slane %v4311, 3
    %v4318 = vsel %vm555, %v4315, %v4317
    %v4319 = vrot.slane %v4312, 3
    %v4320 = vsel %vm555, %v4317, %v4319
    %v4321 = vrot.slane %v4313, 3
    %v4322 = vsel %vm555, %v4319, %v4321
    %v4343 = vunpack.c.l.b16 %v4275
    %v4344 = vunpack.c.l.b16 %v4276
    %v4345 = vunpack.c.l.b16 %v4277
    %v4346 = vunpack.c.l.b16 %v4278
    %v4347 = vunpack.c.l.b16 %v4279
    %v4348 = vunpack.c.l.b16 %v4280
    %v4349 = vunpack.c.l.b16 %v4281
    %v4350 = vunpack.c.l.b16 %v4282
    %v4351 = vunpack.c.l.b16 %v4283
    %v4352 = vunpack.c.l.b16 %v4284
    %v4353 = vunpack.c.l.b16 %v4285
    %v4354 = vunpack.c.l.b16 %v4286
    %v4355 = vunpack.c.l.b16 %v4287
    %v4356 = vunpack.c.l.b16 %v4288
    %v4357 = vunpack.c.l.b16 %v4289
    %v4358 = vunpack.c.l.b16 %v4290
    %v4359 = vpack.c.b16 %v4344, %v4343
    %v4360 = vpack.c.b16 %v4346, %v4345
    %v4361 = vpack.c.b16 %v4348, %v4347
    %v4362 = vpack.c.b16 %v4350, %v4349
    %v4363 = vpack.c.b16 %v4352, %v4351
    %v4364 = vpack.c.b16 %v4354, %v4353
    %v4365 = vpack.c.b16 %v4356, %v4355
    %v4366 = vpack.c.b16 %v4358, %v4357
    %4375 = vmatpush.bf16.msra.mxu0 %v4366
    %4376 = vmatpush.bf16.msra.mxu0 %v4365
    %4377 = vmatpush.bf16.msra.mxu0 %v4364
    %4378 = vmatpush.bf16.msra.mxu0 %v4363
    %4379 = vmatpush.bf16.msra.mxu0 %v4362
    %4380 = vmatpush.bf16.msra.mxu0 %v4361
    %4381 = vmatpush.bf16.msra.mxu0 %v4360
    %4382 = vmatpush.bf16.msra.mxu0 %v4359
    %4383 = vmatmul.bf16.gmra.mxu0 %v4316
    %v4384 = vpop.f32.mrf.mxu0
    %v4385 = vadd.f32 0.0, %v4384
    %v4386 = vpop.f32.mrf.mxu0
    %v4387 = vadd.f32 0.0, %v4386
    %4388 = vmatmul.bf16.gmra.mxu0 %v4318
    %v4389 = vpop.f32.mrf.mxu0
    %v4390 = vadd.f32 0.0, %v4389
    %v4391 = vpop.f32.mrf.mxu0
    %v4392 = vadd.f32 0.0, %v4391
    %4393 = vmatmul.bf16.gmra.mxu0 %v4320
    %v4394 = vpop.f32.mrf.mxu0
    %v4395 = vadd.f32 0.0, %v4394
    %v4396 = vpop.f32.mrf.mxu0
    %v4397 = vadd.f32 0.0, %v4396
    %4398 = vmatmul.bf16.gmra.mxu0 %v4322
    %v4399 = vpop.f32.mrf.mxu0
    %v4400 = vadd.f32 0.0, %v4399
    %v4401 = vpop.f32.mrf.mxu0
    %v4402 = vadd.f32 0.0, %v4401
    %4403 = vdwg.mxu0
    %v4404 = vadd.f32 %v4258, %v4385
    %v4405 = vadd.f32 %v4259, %v4387
    %v4406 = vadd.f32 %v4260, %v4390
    %v4407 = vadd.f32 %v4261, %v4392
    %v4408 = vadd.f32 %v4262, %v4395
    %v4409 = vadd.f32 %v4263, %v4397
    %v4410 = vadd.f32 %v4264, %v4400
    %v4411 = vadd.f32 %v4265, %v4402
    %v4412 = vld [vmem:[#allocation2 + $0x84] sm:$0xf]
    %v4413 = vld [vmem:[#allocation4 + $0x100] sm:$0xf]
    %v4414 = vld [vmem:[#allocation4 + $0x104] sm:$0xf]
    %v4415 = vld [vmem:[#allocation4 + $0x108] sm:$0xf]
    %v4416 = vld [vmem:[#allocation4 + $0x10c] sm:$0xf]
    %v4417 = vld [vmem:[#allocation4 + $0x110] sm:$0xf]
    %v4418 = vld [vmem:[#allocation4 + $0x114] sm:$0xf]
    %v4419 = vld [vmem:[#allocation4 + $0x118] sm:$0xf]
    %v4420 = vld [vmem:[#allocation4 + $0x11c] sm:$0xf]
    %v4421 = vld [vmem:[#allocation4 + $0x120] sm:$0xf]
    %v4422 = vld [vmem:[#allocation4 + $0x124] sm:$0xf]
    %v4423 = vld [vmem:[#allocation4 + $0x128] sm:$0xf]
    %v4424 = vld [vmem:[#allocation4 + $0x12c] sm:$0xf]
    %v4425 = vld [vmem:[#allocation4 + $0x130] sm:$0xf]
    %v4426 = vld [vmem:[#allocation4 + $0x134] sm:$0xf]
    %v4427 = vld [vmem:[#allocation4 + $0x138] sm:$0xf]
    %v4428 = vld [vmem:[#allocation4 + $0x13c] sm:$0xf]
    %v4430 = vunpack.c.l.b16 %v4412
    %v4431 = vpack.c.b16 %v4430, %v4430
    %v4433 = vshrl.u32 %v4309, 16
    %v4435 = vrot.slane %v4433, 3
    %v4436 = vshll.u32 %v4309, 16
    %v4438 = vrot.slane %v4436, 4
    %v4439 = vor.u32 %v4435, %v4438
    %v4441 = vshrl.u32 %v4310, 16
    %v4443 = vrot.slane %v4441, 3
    %v4444 = vshll.u32 %v4310, 16
    %v4446 = vrot.slane %v4444, 4
    %v4447 = vor.u32 %v4443, %v4446
    %v4448 = vsel %vm674, %v4439, %v4447
    %v4450 = vshrl.u32 %v4311, 16
    %v4452 = vrot.slane %v4450, 3
    %v4453 = vshll.u32 %v4311, 16
    %v4455 = vrot.slane %v4453, 4
    %v4456 = vor.u32 %v4452, %v4455
    %v4457 = vsel %vm674, %v4447, %v4456
    %v4459 = vshrl.u32 %v4312, 16
    %v4461 = vrot.slane %v4459, 3
    %v4462 = vshll.u32 %v4312, 16
    %v4464 = vrot.slane %v4462, 4
    %v4465 = vor.u32 %v4461, %v4464
    %v4466 = vsel %vm674, %v4456, %v4465
    %v4468 = vshrl.u32 %v4431, 16
    %v4470 = vrot.slane %v4468, 3
    %v4471 = vshll.u32 %v4431, 16
    %v4473 = vrot.slane %v4471, 4
    %v4474 = vor.u32 %v4470, %v4473
    %v4475 = vsel %vm674, %v4465, %v4474
    %v4496 = vunpack.c.l.b16 %v4413
    %v4497 = vunpack.c.l.b16 %v4414
    %v4498 = vunpack.c.l.b16 %v4415
    %v4499 = vunpack.c.l.b16 %v4416
    %v4500 = vunpack.c.l.b16 %v4417
    %v4501 = vunpack.c.l.b16 %v4418
    %v4502 = vunpack.c.l.b16 %v4419
    %v4503 = vunpack.c.l.b16 %v4420
    %v4504 = vunpack.c.l.b16 %v4421
    %v4505 = vunpack.c.l.b16 %v4422
    %v4506 = vunpack.c.l.b16 %v4423
    %v4507 = vunpack.c.l.b16 %v4424
    %v4508 = vunpack.c.l.b16 %v4425
    %v4509 = vunpack.c.l.b16 %v4426
    %v4510 = vunpack.c.l.b16 %v4427
    %v4511 = vunpack.c.l.b16 %v4428
    %v4512 = vpack.c.b16 %v4497, %v4496
    %v4513 = vpack.c.b16 %v4499, %v4498
    %v4514 = vpack.c.b16 %v4501, %v4500
    %v4515 = vpack.c.b16 %v4503, %v4502
    %v4516 = vpack.c.b16 %v4505, %v4504
    %v4517 = vpack.c.b16 %v4507, %v4506
    %v4518 = vpack.c.b16 %v4509, %v4508
    %v4519 = vpack.c.b16 %v4511, %v4510
    %4528 = vmatpush.bf16.msra.mxu0 %v4519
    %4529 = vmatpush.bf16.msra.mxu0 %v4518
    %4530 = vmatpush.bf16.msra.mxu0 %v4517
    %4531 = vmatpush.bf16.msra.mxu0 %v4516
    %4532 = vmatpush.bf16.msra.mxu0 %v4515
    %4533 = vmatpush.bf16.msra.mxu0 %v4514
    %4534 = vmatpush.bf16.msra.mxu0 %v4513
    %4535 = vmatpush.bf16.msra.mxu0 %v4512
    %4536 = vmatmul.bf16.gmra.mxu0 %v4448
    %v4537 = vpop.f32.mrf.mxu0
    %v4538 = vadd.f32 0.0, %v4537
    %v4539 = vpop.f32.mrf.mxu0
    %v4540 = vadd.f32 0.0, %v4539
    %4541 = vmatmul.bf16.gmra.mxu0 %v4457
    %v4542 = vpop.f32.mrf.mxu0
    %v4543 = vadd.f32 0.0, %v4542
    %v4544 = vpop.f32.mrf.mxu0
    %v4545 = vadd.f32 0.0, %v4544
    %4546 = vmatmul.bf16.gmra.mxu0 %v4466
    %v4547 = vpop.f32.mrf.mxu0
    %v4548 = vadd.f32 0.0, %v4547
    %v4549 = vpop.f32.mrf.mxu0
    %v4550 = vadd.f32 0.0, %v4549
    %4551 = vmatmul.bf16.gmra.mxu0 %v4475
    %v4552 = vpop.f32.mrf.mxu0
    %v4553 = vadd.f32 0.0, %v4552
    %v4554 = vpop.f32.mrf.mxu0
    %v4555 = vadd.f32 0.0, %v4554
    %4556 = vdwg.mxu0
    %v4557 = vadd.f32 %v4404, %v4538
    %v4558 = vadd.f32 %v4405, %v4540
    %v4559 = vadd.f32 %v4406, %v4543
    %v4560 = vadd.f32 %v4407, %v4545
    %v4561 = vadd.f32 %v4408, %v4548
    %v4562 = vadd.f32 %v4409, %v4550
    %v4563 = vadd.f32 %v4410, %v4553
    %v4564 = vadd.f32 %v4411, %v4555
    %v4565 = vld [vmem:[#allocation4 + $0x140] sm:$0xf]
    %v4566 = vld [vmem:[#allocation4 + $0x144] sm:$0xf]
    %v4567 = vld [vmem:[#allocation4 + $0x148] sm:$0xf]
    %v4568 = vld [vmem:[#allocation4 + $0x14c] sm:$0xf]
    %v4569 = vld [vmem:[#allocation4 + $0x150] sm:$0xf]
    %v4570 = vld [vmem:[#allocation4 + $0x154] sm:$0xf]
    %v4571 = vld [vmem:[#allocation4 + $0x158] sm:$0xf]
    %v4572 = vld [vmem:[#allocation4 + $0x15c] sm:$0xf]
    %v4573 = vld [vmem:[#allocation4 + $0x160] sm:$0xf]
    %v4574 = vld [vmem:[#allocation4 + $0x164] sm:$0xf]
    %v4575 = vld [vmem:[#allocation4 + $0x168] sm:$0xf]
    %v4576 = vld [vmem:[#allocation4 + $0x16c] sm:$0xf]
    %v4577 = vld [vmem:[#allocation4 + $0x170] sm:$0xf]
    %v4578 = vld [vmem:[#allocation4 + $0x174] sm:$0xf]
    %v4579 = vld [vmem:[#allocation4 + $0x178] sm:$0xf]
    %v4580 = vld [vmem:[#allocation4 + $0x17c] sm:$0xf]
    %v4581 = vpack.c.b16 %v4302, %v4301
    %v4582 = vpack.c.b16 %v4304, %v4303
    %v4583 = vpack.c.b16 %v4306, %v4305
    %v4584 = vpack.c.b16 %v4430, %v4307
    %v4605 = vunpack.c.l.b16 %v4565
    %v4606 = vunpack.c.l.b16 %v4566
    %v4607 = vunpack.c.l.b16 %v4567
    %v4608 = vunpack.c.l.b16 %v4568
    %v4609 = vunpack.c.l.b16 %v4569
    %v4610 = vunpack.c.l.b16 %v4570
    %v4611 = vunpack.c.l.b16 %v4571
    %v4612 = vunpack.c.l.b16 %v4572
    %v4613 = vunpack.c.l.b16 %v4573
    %v4614 = vunpack.c.l.b16 %v4574
    %v4615 = vunpack.c.l.b16 %v4575
    %v4616 = vunpack.c.l.b16 %v4576
    %v4617 = vunpack.c.l.b16 %v4577
    %v4618 = vunpack.c.l.b16 %v4578
    %v4619 = vunpack.c.l.b16 %v4579
    %v4620 = vunpack.c.l.b16 %v4580
    %v4621 = vpack.c.b16 %v4606, %v4605
    %v4622 = vpack.c.b16 %v4608, %v4607
    %v4623 = vpack.c.b16 %v4610, %v4609
    %v4624 = vpack.c.b16 %v4612, %v4611
    %v4625 = vpack.c.b16 %v4614, %v4613
    %v4626 = vpack.c.b16 %v4616, %v4615
    %v4627 = vpack.c.b16 %v4618, %v4617
    %v4628 = vpack.c.b16 %v4620, %v4619
    %4637 = vmatpush.bf16.msra.mxu0 %v4628
    %4638 = vmatpush.bf16.msra.mxu0 %v4627
    %4639 = vmatpush.bf16.msra.mxu0 %v4626
    %4640 = vmatpush.bf16.msra.mxu0 %v4625
    %4641 = vmatpush.bf16.msra.mxu0 %v4624
    %4642 = vmatpush.bf16.msra.mxu0 %v4623
    %4643 = vmatpush.bf16.msra.mxu0 %v4622
    %4644 = vmatpush.bf16.msra.mxu0 %v4621
    %4645 = vmatmul.bf16.gmra.mxu0 %v4581
    %v4646 = vpop.f32.mrf.mxu0
    %v4647 = vadd.f32 0.0, %v4646
    %v4648 = vpop.f32.mrf.mxu0
    %v4649 = vadd.f32 0.0, %v4648
    %4650 = vmatmul.bf16.gmra.mxu0 %v4582
    %v4651 = vpop.f32.mrf.mxu0
    %v4652 = vadd.f32 0.0, %v4651
    %v4653 = vpop.f32.mrf.mxu0
    %v4654 = vadd.f32 0.0, %v4653
    %4655 = vmatmul.bf16.gmra.mxu0 %v4583
    %v4656 = vpop.f32.mrf.mxu0
    %v4657 = vadd.f32 0.0, %v4656
    %v4658 = vpop.f32.mrf.mxu0
    %v4659 = vadd.f32 0.0, %v4658
    %4660 = vmatmul.bf16.gmra.mxu0 %v4584
    %v4661 = vpop.f32.mrf.mxu0
    %v4662 = vadd.f32 0.0, %v4661
    %v4663 = vpop.f32.mrf.mxu0
    %v4664 = vadd.f32 0.0, %v4663
    %4665 = vdwg.mxu0
    %v4666 = vadd.f32 %v4557, %v4647
    %v4667 = vadd.f32 %v4558, %v4649
    %v4668 = vadd.f32 %v4559, %v4652
    %v4669 = vadd.f32 %v4560, %v4654
    %v4670 = vadd.f32 %v4561, %v4657
    %v4671 = vadd.f32 %v4562, %v4659
    %v4672 = vadd.f32 %v4563, %v4662
    %v4673 = vadd.f32 %v4564, %v4664
    %v4674 = vld [vmem:[#allocation2 + $0x6c] sm:$0xc]
    %v4675 = vld [vmem:[#allocation2 + $0x70] sm:$0xf]
    %v4676 = vld [vmem:[#allocation2 + $0x74] sm:$0xf]
    %v4677 = vld [vmem:[#allocation2 + $0x78] sm:$0xf]
    %v4678 = vld [vmem:[#allocation2 + $0x7c] sm:$0xf]
    %v4679 = vld [vmem:[#allocation2 + $0x80] sm:$0xf]
    %v4680 = vld [vmem:[#allocation2 + $0x84] sm:$0xf]
    %v4681 = vld [vmem:[#allocation2 + $0x88] sm:$0xf]
    %v4682 = vld [vmem:[#allocation2 + $0x8c] sm:$0x3]
    %v4683 = vld [vmem:[#allocation4 + $0x180] sm:$0xf]
    %v4684 = vld [vmem:[#allocation4 + $0x184] sm:$0xf]
    %v4685 = vld [vmem:[#allocation4 + $0x188] sm:$0xf]
    %v4686 = vld [vmem:[#allocation4 + $0x18c] sm:$0xf]
    %v4687 = vld [vmem:[#allocation4 + $0x190] sm:$0xf]
    %v4688 = vld [vmem:[#allocation4 + $0x194] sm:$0xf]
    %v4689 = vld [vmem:[#allocation4 + $0x198] sm:$0xf]
    %v4690 = vld [vmem:[#allocation4 + $0x19c] sm:$0xf]
    %v4691 = vld [vmem:[#allocation4 + $0x1a0] sm:$0xf]
    %v4692 = vld [vmem:[#allocation4 + $0x1a4] sm:$0xf]
    %v4693 = vld [vmem:[#allocation4 + $0x1a8] sm:$0xf]
    %v4694 = vld [vmem:[#allocation4 + $0x1ac] sm:$0xf]
    %v4695 = vld [vmem:[#allocation4 + $0x1b0] sm:$0xf]
    %v4696 = vld [vmem:[#allocation4 + $0x1b4] sm:$0xf]
    %v4697 = vld [vmem:[#allocation4 + $0x1b8] sm:$0xf]
    %v4698 = vld [vmem:[#allocation4 + $0x1bc] sm:$0xf]
    %v4708 = vunpack.c.l.b16 %v4674
    %v4709 = vunpack.c.l.b16 %v4675
    %v4710 = vunpack.c.l.b16 %v4676
    %v4711 = vunpack.c.l.b16 %v4677
    %v4712 = vunpack.c.l.b16 %v4678
    %v4713 = vunpack.c.l.b16 %v4679
    %v4714 = vunpack.c.l.b16 %v4680
    %v4715 = vunpack.c.l.b16 %v4681
    %v4716 = vunpack.c.l.b16 %v4682
    %v4717 = vpack.c.b16 %v4709, %v4708
    %v4718 = vpack.c.b16 %v4711, %v4710
    %v4719 = vpack.c.b16 %v4713, %v4712
    %v4720 = vpack.c.b16 %v4715, %v4714
    %v4721 = vpack.c.b16 %v4716, %v4716
    %v4722 = vrot.slane %v4717, 2
    %v4723 = vrot.slane %v4718, 2
    %v4724 = vsel %vm965, %v4722, %v4723
    %v4725 = vrot.slane %v4719, 2
    %v4726 = vsel %vm965, %v4723, %v4725
    %v4727 = vrot.slane %v4720, 2
    %v4728 = vsel %vm965, %v4725, %v4727
    %v4729 = vrot.slane %v4721, 2
    %v4730 = vsel %vm965, %v4727, %v4729
    %v4751 = vunpack.c.l.b16 %v4683
    %v4752 = vunpack.c.l.b16 %v4684
    %v4753 = vunpack.c.l.b16 %v4685
    %v4754 = vunpack.c.l.b16 %v4686
    %v4755 = vunpack.c.l.b16 %v4687
    %v4756 = vunpack.c.l.b16 %v4688
    %v4757 = vunpack.c.l.b16 %v4689
    %v4758 = vunpack.c.l.b16 %v4690
    %v4759 = vunpack.c.l.b16 %v4691
    %v4760 = vunpack.c.l.b16 %v4692
    %v4761 = vunpack.c.l.b16 %v4693
    %v4762 = vunpack.c.l.b16 %v4694
    %v4763 = vunpack.c.l.b16 %v4695
    %v4764 = vunpack.c.l.b16 %v4696
    %v4765 = vunpack.c.l.b16 %v4697
    %v4766 = vunpack.c.l.b16 %v4698
    %v4767 = vpack.c.b16 %v4752, %v4751
    %v4768 = vpack.c.b16 %v4754, %v4753
    %v4769 = vpack.c.b16 %v4756, %v4755
    %v4770 = vpack.c.b16 %v4758, %v4757
    %v4771 = vpack.c.b16 %v4760, %v4759
    %v4772 = vpack.c.b16 %v4762, %v4761
    %v4773 = vpack.c.b16 %v4764, %v4763
    %v4774 = vpack.c.b16 %v4766, %v4765
    %4783 = vmatpush.bf16.msra.mxu0 %v4774
    %4784 = vmatpush.bf16.msra.mxu0 %v4773
    %4785 = vmatpush.bf16.msra.mxu0 %v4772
    %4786 = vmatpush.bf16.msra.mxu0 %v4771
    %4787 = vmatpush.bf16.msra.mxu0 %v4770
    %4788 = vmatpush.bf16.msra.mxu0 %v4769
    %4789 = vmatpush.bf16.msra.mxu0 %v4768
    %4790 = vmatpush.bf16.msra.mxu0 %v4767
    %4791 = vmatmul.bf16.gmra.mxu0 %v4724
    %v4792 = vpop.f32.mrf.mxu0
    %v4793 = vadd.f32 0.0, %v4792
    %v4794 = vpop.f32.mrf.mxu0
    %v4795 = vadd.f32 0.0, %v4794
    %4796 = vmatmul.bf16.gmra.mxu0 %v4726
    %v4797 = vpop.f32.mrf.mxu0
    %v4798 = vadd.f32 0.0, %v4797
    %v4799 = vpop.f32.mrf.mxu0
    %v4800 = vadd.f32 0.0, %v4799
    %4801 = vmatmul.bf16.gmra.mxu0 %v4728
    %v4802 = vpop.f32.mrf.mxu0
    %v4803 = vadd.f32 0.0, %v4802
    %v4804 = vpop.f32.mrf.mxu0
    %v4805 = vadd.f32 0.0, %v4804
    %4806 = vmatmul.bf16.gmra.mxu0 %v4730
    %v4807 = vpop.f32.mrf.mxu0
    %v4808 = vadd.f32 0.0, %v4807
    %v4809 = vpop.f32.mrf.mxu0
    %v4810 = vadd.f32 0.0, %v4809
    %4811 = vdwg.mxu0
    %v4812 = vadd.f32 %v4666, %v4793
    %v4813 = vadd.f32 %v4667, %v4795
    %v4814 = vadd.f32 %v4668, %v4798
    %v4815 = vadd.f32 %v4669, %v4800
    %v4816 = vadd.f32 %v4670, %v4803
    %v4817 = vadd.f32 %v4671, %v4805
    %v4818 = vadd.f32 %v4672, %v4808
    %v4819 = vadd.f32 %v4673, %v4810
    %v4820 = vld [vmem:[#allocation2 + $0x8c] sm:$0x7]
    %v4821 = vld [vmem:[#allocation4 + $0x1c0] sm:$0xf]
    %v4822 = vld [vmem:[#allocation4 + $0x1c4] sm:$0xf]
    %v4823 = vld [vmem:[#allocation4 + $0x1c8] sm:$0xf]
    %v4824 = vld [vmem:[#allocation4 + $0x1cc] sm:$0xf]
    %v4825 = vld [vmem:[#allocation4 + $0x1d0] sm:$0xf]
    %v4826 = vld [vmem:[#allocation4 + $0x1d4] sm:$0xf]
    %v4827 = vld [vmem:[#allocation4 + $0x1d8] sm:$0xf]
    %v4828 = vld [vmem:[#allocation4 + $0x1dc] sm:$0xf]
    %v4829 = vld [vmem:[#allocation4 + $0x1e0] sm:$0xf]
    %v4830 = vld [vmem:[#allocation4 + $0x1e4] sm:$0xf]
    %v4831 = vld [vmem:[#allocation4 + $0x1e8] sm:$0xf]
    %v4832 = vld [vmem:[#allocation4 + $0x1ec] sm:$0xf]
    %v4833 = vld [vmem:[#allocation4 + $0x1f0] sm:$0xf]
    %v4834 = vld [vmem:[#allocation4 + $0x1f4] sm:$0xf]
    %v4835 = vld [vmem:[#allocation4 + $0x1f8] sm:$0xf]
    %v4836 = vld [vmem:[#allocation4 + $0x1fc] sm:$0xf]
    %v4838 = vunpack.c.l.b16 %v4820
    %v4839 = vpack.c.b16 %v4838, %v4838
    %v4841 = vshrl.u32 %v4717, 16
    %v4843 = vrot.slane %v4841, 2
    %v4844 = vshll.u32 %v4717, 16
    %v4846 = vrot.slane %v4844, 3
    %v4847 = vor.u32 %v4843, %v4846
    %v4849 = vshrl.u32 %v4718, 16
    %v4851 = vrot.slane %v4849, 2
    %v4852 = vshll.u32 %v4718, 16
    %v4854 = vrot.slane %v4852, 3
    %v4855 = vor.u32 %v4851, %v4854
    %v4856 = vsel %vm1084, %v4847, %v4855
    %v4858 = vshrl.u32 %v4719, 16
    %v4860 = vrot.slane %v4858, 2
    %v4861 = vshll.u32 %v4719, 16
    %v4863 = vrot.slane %v4861, 3
    %v4864 = vor.u32 %v4860, %v4863
    %v4865 = vsel %vm1084, %v4855, %v4864
    %v4867 = vshrl.u32 %v4720, 16
    %v4869 = vrot.slane %v4867, 2
    %v4870 = vshll.u32 %v4720, 16
    %v4872 = vrot.slane %v4870, 3
    %v4873 = vor.u32 %v4869, %v4872
    %v4874 = vsel %vm1084, %v4864, %v4873
    %v4876 = vshrl.u32 %v4839, 16
    %v4878 = vrot.slane %v4876, 2
    %v4879 = vshll.u32 %v4839, 16
    %v4881 = vrot.slane %v4879, 3
    %v4882 = vor.u32 %v4878, %v4881
    %v4883 = vsel %vm1084, %v4873, %v4882
    %v4904 = vunpack.c.l.b16 %v4821
    %v4905 = vunpack.c.l.b16 %v4822
    %v4906 = vunpack.c.l.b16 %v4823
    %v4907 = vunpack.c.l.b16 %v4824
    %v4908 = vunpack.c.l.b16 %v4825
    %v4909 = vunpack.c.l.b16 %v4826
    %v4910 = vunpack.c.l.b16 %v4827
    %v4911 = vunpack.c.l.b16 %v4828
    %v4912 = vunpack.c.l.b16 %v4829
    %v4913 = vunpack.c.l.b16 %v4830
    %v4914 = vunpack.c.l.b16 %v4831
    %v4915 = vunpack.c.l.b16 %v4832
    %v4916 = vunpack.c.l.b16 %v4833
    %v4917 = vunpack.c.l.b16 %v4834
    %v4918 = vunpack.c.l.b16 %v4835
    %v4919 = vunpack.c.l.b16 %v4836
    %v4920 = vpack.c.b16 %v4905, %v4904
    %v4921 = vpack.c.b16 %v4907, %v4906
    %v4922 = vpack.c.b16 %v4909, %v4908
    %v4923 = vpack.c.b16 %v4911, %v4910
    %v4924 = vpack.c.b16 %v4913, %v4912
    %v4925 = vpack.c.b16 %v4915, %v4914
    %v4926 = vpack.c.b16 %v4917, %v4916
    %v4927 = vpack.c.b16 %v4919, %v4918
    %4936 = vmatpush.bf16.msra.mxu0 %v4927
    %4937 = vmatpush.bf16.msra.mxu0 %v4926
    %4938 = vmatpush.bf16.msra.mxu0 %v4925
    %4939 = vmatpush.bf16.msra.mxu0 %v4924
    %4940 = vmatpush.bf16.msra.mxu0 %v4923
    %4941 = vmatpush.bf16.msra.mxu0 %v4922
    %4942 = vmatpush.bf16.msra.mxu0 %v4921
    %4943 = vmatpush.bf16.msra.mxu0 %v4920
    %4944 = vmatmul.bf16.gmra.mxu0 %v4856
    %v4945 = vpop.f32.mrf.mxu0
    %v4946 = vadd.f32 0.0, %v4945
    %v4947 = vpop.f32.mrf.mxu0
    %v4948 = vadd.f32 0.0, %v4947
    %4949 = vmatmul.bf16.gmra.mxu0 %v4865
    %v4950 = vpop.f32.mrf.mxu0
    %v4951 = vadd.f32 0.0, %v4950
    %v4952 = vpop.f32.mrf.mxu0
    %v4953 = vadd.f32 0.0, %v4952
    %4954 = vmatmul.bf16.gmra.mxu0 %v4874
    %v4955 = vpop.f32.mrf.mxu0
    %v4956 = vadd.f32 0.0, %v4955
    %v4957 = vpop.f32.mrf.mxu0
    %v4958 = vadd.f32 0.0, %v4957
    %4959 = vmatmul.bf16.gmra.mxu0 %v4883
    %v4960 = vpop.f32.mrf.mxu0
    %v4961 = vadd.f32 0.0, %v4960
    %v4962 = vpop.f32.mrf.mxu0
    %v4963 = vadd.f32 0.0, %v4962
    %4964 = vdwg.mxu0
    %v4965 = vadd.f32 %v4812, %v4946
    %v4966 = vadd.f32 %v4813, %v4948
    %v4967 = vadd.f32 %v4814, %v4951
    %v4968 = vadd.f32 %v4815, %v4953
    %v4969 = vadd.f32 %v4816, %v4956
    %v4970 = vadd.f32 %v4817, %v4958
    %v4971 = vadd.f32 %v4818, %v4961
    %v4972 = vadd.f32 %v4819, %v4963
    %v4973 = vld [vmem:[#allocation2 + $0x6c] sm:$0x8]
    %v4974 = vld [vmem:[#allocation4 + $0x200] sm:$0xf]
    %v4975 = vld [vmem:[#allocation4 + $0x204] sm:$0xf]
    %v4976 = vld [vmem:[#allocation4 + $0x208] sm:$0xf]
    %v4977 = vld [vmem:[#allocation4 + $0x20c] sm:$0xf]
    %v4978 = vld [vmem:[#allocation4 + $0x210] sm:$0xf]
    %v4979 = vld [vmem:[#allocation4 + $0x214] sm:$0xf]
    %v4980 = vld [vmem:[#allocation4 + $0x218] sm:$0xf]
    %v4981 = vld [vmem:[#allocation4 + $0x21c] sm:$0xf]
    %v4982 = vld [vmem:[#allocation4 + $0x220] sm:$0xf]
    %v4983 = vld [vmem:[#allocation4 + $0x224] sm:$0xf]
    %v4984 = vld [vmem:[#allocation4 + $0x228] sm:$0xf]
    %v4985 = vld [vmem:[#allocation4 + $0x22c] sm:$0xf]
    %v4986 = vld [vmem:[#allocation4 + $0x230] sm:$0xf]
    %v4987 = vld [vmem:[#allocation4 + $0x234] sm:$0xf]
    %v4988 = vld [vmem:[#allocation4 + $0x238] sm:$0xf]
    %v4989 = vld [vmem:[#allocation4 + $0x23c] sm:$0xf]
    %v4991 = vunpack.c.l.b16 %v4973
    %v4992 = vpack.c.b16 %v4709, %v4991
    %v4993 = vrot.slane %v4992, 3
    %v4994 = vrot.slane %v4718, 3
    %v4995 = vsel %vm555, %v4993, %v4994
    %v4996 = vrot.slane %v4719, 3
    %v4997 = vsel %vm555, %v4994, %v4996
    %v4998 = vrot.slane %v4720, 3
    %v4999 = vsel %vm555, %v4996, %v4998
    %v5000 = vrot.slane %v4839, 3
    %v5001 = vsel %vm555, %v4998, %v5000
    %v5022 = vunpack.c.l.b16 %v4974
    %v5023 = vunpack.c.l.b16 %v4975
    %v5024 = vunpack.c.l.b16 %v4976
    %v5025 = vunpack.c.l.b16 %v4977
    %v5026 = vunpack.c.l.b16 %v4978
    %v5027 = vunpack.c.l.b16 %v4979
    %v5028 = vunpack.c.l.b16 %v4980
    %v5029 = vunpack.c.l.b16 %v4981
    %v5030 = vunpack.c.l.b16 %v4982
    %v5031 = vunpack.c.l.b16 %v4983
    %v5032 = vunpack.c.l.b16 %v4984
    %v5033 = vunpack.c.l.b16 %v4985
    %v5034 = vunpack.c.l.b16 %v4986
    %v5035 = vunpack.c.l.b16 %v4987
    %v5036 = vunpack.c.l.b16 %v4988
    %v5037 = vunpack.c.l.b16 %v4989
    %v5038 = vpack.c.b16 %v5023, %v5022
    %v5039 = vpack.c.b16 %v5025, %v5024
    %v5040 = vpack.c.b16 %v5027, %v5026
    %v5041 = vpack.c.b16 %v5029, %v5028
    %v5042 = vpack.c.b16 %v5031, %v5030
    %v5043 = vpack.c.b16 %v5033, %v5032
    %v5044 = vpack.c.b16 %v5035, %v5034
    %v5045 = vpack.c.b16 %v5037, %v5036
    %5054 = vmatpush.bf16.msra.mxu0 %v5045
    %5055 = vmatpush.bf16.msra.mxu0 %v5044
    %5056 = vmatpush.bf16.msra.mxu0 %v5043
    %5057 = vmatpush.bf16.msra.mxu0 %v5042
    %5058 = vmatpush.bf16.msra.mxu0 %v5041
    %5059 = vmatpush.bf16.msra.mxu0 %v5040
    %5060 = vmatpush.bf16.msra.mxu0 %v5039
    %5061 = vmatpush.bf16.msra.mxu0 %v5038
    %5062 = vmatmul.bf16.gmra.mxu0 %v4995
    %v5063 = vpop.f32.mrf.mxu0
    %v5064 = vadd.f32 0.0, %v5063
    %v5065 = vpop.f32.mrf.mxu0
    %v5066 = vadd.f32 0.0, %v5065
    %5067 = vmatmul.bf16.gmra.mxu0 %v4997
    %v5068 = vpop.f32.mrf.mxu0
    %v5069 = vadd.f32 0.0, %v5068
    %v5070 = vpop.f32.mrf.mxu0
    %v5071 = vadd.f32 0.0, %v5070
    %5072 = vmatmul.bf16.gmra.mxu0 %v4999
    %v5073 = vpop.f32.mrf.mxu0
    %v5074 = vadd.f32 0.0, %v5073
    %v5075 = vpop.f32.mrf.mxu0
    %v5076 = vadd.f32 0.0, %v5075
    %5077 = vmatmul.bf16.gmra.mxu0 %v5001
    %v5078 = vpop.f32.mrf.mxu0
    %v5079 = vadd.f32 0.0, %v5078
    %v5080 = vpop.f32.mrf.mxu0
    %v5081 = vadd.f32 0.0, %v5080
    %5082 = vdwg.mxu0
    %v5083 = vadd.f32 %v4965, %v5064
    %v5084 = vadd.f32 %v4966, %v5066
    %v5085 = vadd.f32 %v4967, %v5069
    %v5086 = vadd.f32 %v4968, %v5071
    %v5087 = vadd.f32 %v4969, %v5074
    %v5088 = vadd.f32 %v4970, %v5076
    %v5089 = vadd.f32 %v4971, %v5079
    %v5090 = vadd.f32 %v4972, %v5081
    %v5091 = vld [vmem:[#allocation7] sm:$0x1]
    %v5092 = vperm.slane %v5091, 0
    %v5093 = vmul.f32 %v5083, %v5092
    %v5094 = vmul.f32 %v5084, %v5092
    %v5095 = vmul.f32 %v5085, %v5092
    %v5096 = vmul.f32 %v5086, %v5092
    %v5097 = vmul.f32 %v5087, %v5092
    %v5098 = vmul.f32 %v5088, %v5092
    %v5099 = vmul.f32 %v5089, %v5092
    %v5100 = vmul.f32 %v5090, %v5092
    %v5101 = vld [vmem:[#allocation7 + $0x1] sm:$0x1]
    %v5102 = vperm.slane %v5101, 0
    %v5103 = vadd.f32 %v5093, %v5102
    %v5104 = vadd.f32 %v5094, %v5102
    %v5105 = vadd.f32 %v5095, %v5102
    %v5106 = vadd.f32 %v5096, %v5102
    %v5107 = vadd.f32 %v5097, %v5102
    %v5108 = vadd.f32 %v5098, %v5102
    %v5109 = vadd.f32 %v5099, %v5102
    %v5110 = vadd.f32 %v5100, %v5102
    %v5111 = vmax.f32 %v5103, 0.0
    %v5112 = vmax.f32 %v5104, 0.0
    %v5113 = vmax.f32 %v5105, 0.0
    %v5114 = vmax.f32 %v5106, 0.0
    %v5115 = vmax.f32 %v5107, 0.0
    %v5116 = vmax.f32 %v5108, 0.0
    %v5117 = vmax.f32 %v5109, 0.0
    %v5118 = vmax.f32 %v5110, 0.0
    %v5119 = vpack.c.bf16 %v5111, %v5111
    %v5120 = vpack.c.bf16 %v5112, %v5112
    %v5121 = vpack.c.bf16 %v5113, %v5113
    %v5122 = vpack.c.bf16 %v5114, %v5114
    %v5123 = vpack.c.bf16 %v5115, %v5115
    %v5124 = vpack.c.bf16 %v5116, %v5116
    %v5125 = vpack.c.bf16 %v5117, %v5117
    %v5126 = vpack.c.bf16 %v5118, %v5118
    %5127 = vst [vmem:[#allocation9 + $0x60] sm:$0xf] %v5119
    %5128 = vst [vmem:[#allocation9 + $0x64] sm:$0xf] %v5120
    %5129 = vst [vmem:[#allocation9 + $0x68] sm:$0xf] %v5121
    %5130 = vst [vmem:[#allocation9 + $0x6c] sm:$0xf] %v5122
    %5131 = vst [vmem:[#allocation9 + $0x70] sm:$0xf] %v5123
    %5132 = vst [vmem:[#allocation9 + $0x74] sm:$0xf] %v5124
    %5133 = vst [vmem:[#allocation9 + $0x78] sm:$0xf] %v5125
    %5134 = vst [vmem:[#allocation9 + $0x7c] sm:$0xf] %v5126
    // Predicated region
    $region34: #{tpu_custom_call.1} parent=1 // pred_check
      _
    $region35: #{tpu_custom_call.1} parent=1 // pred_check_branch
      %5136 = sbr.rel (0) target = $region37
    $region36: #{tpu_custom_call.1} parent=1 // pred_region
      %5138 = vsyncadd [#allocation6], 0
      %s5139 = sshll.u32 [#allocation9], 4
      %s5140 = int_to_ptr.vmem [resolvable:$true] %s5139
      %s5141 = sshll.u32 %s3, 4
      %s5142 = int_to_ptr.hbm [resolvable:$true] %s5141
      %5147 = dma.vmem_to_hbm [thread:$0]  %s5140, 2048, %s5142, [#allocation6], 64, 64, 4
    $region37: #{tpu_custom_call.1} parent=1 // pred_fallthru
      _
    // Predicated region
    $region38: #{tpu_custom_call.1} parent=1 // pred_check
      _
    $region39: #{tpu_custom_call.1} parent=1 // pred_check_branch
      %5149 = sbr.rel (0) target = $region41
    $region40: #{tpu_custom_call.1} parent=1 // pred_region
      %5151 = dma.done [#allocation6], 2048
    $region41: #{tpu_custom_call.1} parent=1 // pred_fallthru
      _
    %5152 = vsyncpa [#allocation5], 1
    %5153 = vsyncpa [#allocation8], 1
    %5154 = vsyncpa [#allocation6], 1
  %5155 = vsyncmov [#allocation3]
  %s5156 = vpop.sfrf %5155
  %p5157 = scmp.eq.s32.totalorder %s5156, 0
  %p5158 = pneg %p5157
  %5160 = shalt.err (%p5158)
  %s5161 = scalar_lea.sflag [#allocation3], 1
  %5162 = vsyncmov %s5161
  %s5163 = vpop.sfrf %5162
  %p5164 = scmp.eq.s32.totalorder %s5163, 0
  %p5165 = pneg %p5164
  %5167 = shalt.err (%p5165)
  %s5168 = scalar_lea.sflag [#allocation3], 2
  %5169 = vsyncmov %s5168
  %s5170 = vpop.sfrf %5169
  %p5171 = scmp.eq.s32.totalorder %s5170, 0
  %p5172 = pneg %p5171
  %5174 = shalt.err (%p5172)
  %s5175 = scalar_lea.sflag [#allocation3], 3
  %5176 = vsyncmov %s5175
  %s5177 = vpop.sfrf %5176
  %p5178 = scmp.eq.s32.totalorder %s5177, 0
  %p5179 = pneg %p5178
  %5181 = shalt.err (%p5179)

</llo_original>
